<compile_context>
chip_gen: v5e
topology: v5e:2x2
jax: 0.10.0
libtpu: 0.0.40
codegen_flags: <defaults>
</compile_context>

<pallas_src>
import numpy as np
import jax
import jax.numpy as jnp
from jax.experimental import pallas as pl
from jax.experimental.pallas import tpu as pltpu

_VMEM_LIMIT = 48 * 1024 * 1024   # above v5e's 16 MiB scoped default, below v7x's 64 MiB physical
_TILE_ROWS = 512                 # row-tile sweet spot; double-buffered bf16 blocks stay far under budget


def _zero_map(nd):
    return lambda i, _nd=nd: (0,) * _nd


# ----------------------------------------------------------------------------
# Kernel 1: fused  y = act(X @ W_folded + shift) [+ res]
# W_folded already carries the BatchNorm scale; shift = bias*scale + bn_shift.
# Used for every conv / sub-pixel transposed-conv matmul.
# ----------------------------------------------------------------------------
def _make_fused_kernel(act, with_res):
    def kernel(*refs):
        if with_res:
            x_ref, w_ref, sh_ref, res_ref, o_ref = refs
        else:
            x_ref, w_ref, sh_ref, o_ref = refs
        y = jnp.dot(x_ref[...], w_ref[...], preferred_element_type=jnp.float32)
        y = y + sh_ref[...]                       # conv bias + folded BatchNorm (eval) in one shift
        if act == "silu":
            y = y * jax.nn.sigmoid(y)
        elif act == "sigmoid":
            y = jax.nn.sigmoid(y)
        if with_res:
            y = y + res_ref[...].astype(jnp.float32)   # skip-connection add (pre-next-ConvT)
        o_ref[...] = y.astype(o_ref.dtype)
    return kernel


def fused_matmul(x, w, shift, act="none", res=None, out_dtype=jnp.bfloat16):
    M, K = x.shape
    N = w.shape[1]
    x = x.astype(jnp.bfloat16)
    w = w.astype(jnp.bfloat16)
    shift = shift.reshape(1, N).astype(jnp.float32)

    tm = M if M <= _TILE_ROWS else _TILE_ROWS     # full-dim block is always layout-legal
    grid = (pl.cdiv(M, tm),)

    inputs = [x, w, shift]
    in_specs = [pl.BlockSpec((tm, K), lambda i: (i, 0)),
                pl.BlockSpec((K, N), lambda i: (0, 0)),    # weight/shift stay resident (index unchanged)
                pl.BlockSpec((1, N), lambda i: (0, 0))]
    if res is not None:
        inputs.append(res.reshape(M, N).astype(jnp.bfloat16))
        in_specs.append(pl.BlockSpec((tm, N), lambda i: (i, 0)))

    return pl.pallas_call(
        _make_fused_kernel(act, res is not None),
        grid=grid,
        in_specs=in_specs,
        out_specs=pl.BlockSpec((tm, N), lambda i: (i, 0)),
        out_shape=jax.ShapeDtypeStruct((M, N), out_dtype),
        compiler_params=pltpu.CompilerParams(
            dimension_semantics=("parallel",),          # row tiles independent -> megacore on v7x
            vmem_limit_bytes=_VMEM_LIMIT),
    )(*inputs)


# ----------------------------------------------------------------------------
# Kernel 2: fused latent head + decoder input
#   AdaptiveAvgPool2d((1,1)) + fc_mu + fc_logvar + reparametrize(eps)
#   + decoder_input([z, genres]) + first skip-add, all in one pallas_call.
# ----------------------------------------------------------------------------
def _latent_decode_kernel(h_ref, wmu_ref, bmu_ref, wlv_ref, blv_ref, eps_ref,
                          g_ref, wz_ref, wg_ref, bd_ref, res_ref,
                          mu_ref, lv_ref, z_ref, hdec_ref):
    pooled = jnp.mean(h_ref[...].astype(jnp.float32), axis=1)               # (B, 4d) global avg pool
    mu = jnp.dot(pooled, wmu_ref[...], preferred_element_type=jnp.float32) + bmu_ref[...]
    lv = jnp.dot(pooled, wlv_ref[...], preferred_element_type=jnp.float32) + blv_ref[...]
    z = mu + eps_ref[...] * jnp.exp(0.5 * lv)                                # reparametrize (f32)
    hdec = (jnp.dot(z, wz_ref[...], preferred_element_type=jnp.float32)
            + jnp.dot(g_ref[...], wg_ref[...], preferred_element_type=jnp.float32)
            + bd_ref[...] + res_ref[...].astype(jnp.float32))                # dec_in + skip (s3)
    mu_ref[...] = mu
    lv_ref[...] = lv
    z_ref[...] = z
    hdec_ref[...] = hdec.astype(hdec_ref.dtype)


def latent_decode(h_nhwc, pp, genres, eps, res0):
    B, H8, W8, C4 = h_nhwc.shape
    L = pp["fc_mu"]["w"].shape[1]
    D = pp["dec_in"]["b"].shape[1]
    inputs = [h_nhwc.reshape(B, H8 * W8, C4),
              pp["fc_mu"]["w"], pp["fc_mu"]["b"],
              pp["fc_logvar"]["w"], pp["fc_logvar"]["b"],
              eps.astype(jnp.float32), genres.astype(jnp.float32),
              pp["dec_in"]["w_z"], pp["dec_in"]["w_g"], pp["dec_in"]["b"],
              res0]
    in_specs = [pl.BlockSpec(a.shape, _zero_map(a.ndim)) for a in inputs]
    small = jax.ShapeDtypeStruct((B, L), jnp.float32)
    return pl.pallas_call(
        _latent_decode_kernel,
        grid=(1,),
        in_specs=in_specs,
        out_specs=(pl.BlockSpec((B, L), _zero_map(2)),) * 3
                  + (pl.BlockSpec((B, D), _zero_map(2)),),
        out_shape=(small, small, small, jax.ShapeDtypeStruct((B, D), jnp.bfloat16)),
        compiler_params=pltpu.CompilerParams(dimension_semantics=("arbitrary",),
                                             vmem_limit_bytes=_VMEM_LIMIT),
    )(*inputs)


# ----------------------------------------------------------------------------
# Blocks (glue around the Pallas kernels)
# ----------------------------------------------------------------------------
def encoder_block(x_nhwc, ep):
    """Conv2d(k=3, s=2, p=1) + folded BatchNorm + SiLU (Dropout2d eval = identity)."""
    # TODO(synk): im2col taps still materialized in XLA glue; in-kernel tap gather is future work.
    B, H, W, Cin = x_nhwc.shape
    Cout = ep["shift"].shape[-1]
    Ho, Wo = (H + 1) // 2, (W + 1) // 2
    xp = jnp.pad(x_nhwc, ((0, 0), (1, 1), (1, 1), (0, 0)))
    taps = [xp[:, kh::2, kw::2, :][:, :Ho, :Wo, :] for kh in range(3) for kw in range(3)]
    patches = jnp.concatenate(taps, axis=-1).reshape(B * Ho * Wo, 9 * Cin)
    y = fused_matmul(patches, ep["w"], ep["shift"], act="silu", out_dtype=jnp.bfloat16)
    return y.reshape(B, Ho, Wo, Cout)


def decoder_block(x_nhwc, dp, out_pad, act, res=None, out_dtype=jnp.bfloat16):
    """ConvTranspose2d(k=3, s=2, p=1, output_padding=out_pad) [+folded BN] + act [+skip add],
    via sub-pixel decomposition: 4 stride-1 convs, one per output parity (no zero-dilated tensor)."""
    B, H, W, Cin = x_nhwc.shape
    oph, opw = out_pad
    Ho_full, Wo_full = 2 * H - 1 + oph, 2 * W - 1 + opw
    Cout = dp["shift"].shape[-1]
    He, We = H, W                                  # even output row/col counts
    Ho_, Wo_ = H - 1 + oph, W - 1 + opw            # odd output row/col counts
    xp = jnp.pad(x_nhwc, ((0, 0), (0, 1), (0, 1), (0, 0)))   # x[m+1]/x[n+1] zero pad

    def plane(offsets, w_key, he, we, r, c):
        parts = [xp[:, si:si + he, sj:sj + we, :] for (si, sj) in offsets]
        patches = jnp.concatenate(parts, axis=-1).reshape(B * he * we, -1)
        res_p = None if res is None else res[:, r::2, c::2, :].reshape(B * he * we, Cout)
        y = fused_matmul(patches, dp[w_key], dp["shift"], act=act, res=res_p,
                         out_dtype=out_dtype)
        return y.reshape(B, he, we, Cout)

    ee = plane([(0, 0)], "w_ee", He, We, 0, 0)
    eo = plane([(0, 0), (0, 1)], "w_eo", He, Wo_, 0, 1)
    oe = plane([(0, 0), (1, 0)], "w_oe", Ho_, We, 1, 0)
    oo = plane([(0, 0), (0, 1), (1, 0), (1, 1)], "w_oo", Ho_, Wo_, 1, 1)

    out = jnp.zeros((B, Ho_full, Wo_full, Cout), ee.dtype)
    out = out.at[:, 0::2, 0::2, :].set(ee)
    out = out.at[:, 0::2, 1::2, :].set(eo)
    out = out.at[:, 1::2, 0::2, :].set(oe)
    out = out.at[:, 1::2, 1::2, :].set(oo)
    return out


# ----------------------------------------------------------------------------
# Parameters (deterministic synthetic init, PyTorch layouts)
# ----------------------------------------------------------------------------
def init_params(d_model, latent_dim, n_frames, n_mels, n_genres, key):
    H8, W8 = int(np.ceil(n_frames / 8)), int(np.ceil(n_mels / 8))
    keys = iter(jax.random.split(key, 64))

    def nrm(shape, s=0.1):
        return s * jax.random.normal(next(keys), shape, jnp.float32)

    def conv_p(cin, cout):
        return dict(w=nrm((cout, cin, 3, 3)), b=nrm((cout,)),
                    gamma=1.0 + nrm((cout,)), beta=nrm((cout,)),
                    mean=nrm((cout,)), var=1.0 + jnp.abs(nrm((cout,))))

    def convT_p(cin, cout, bn=True):
        p = dict(w=nrm((cin, cout, 3, 3)), b=nrm((cout,)))
        if bn:
            p.update(gamma=1.0 + nrm((cout,)), beta=nrm((cout,)),
                     mean=nrm((cout,)), var=1.0 + jnp.abs(jnp.abs(nrm((cout,)))))
        return p

    return dict(
        enc=[conv_p(1 + n_genres, d_model),
             conv_p(d_model, d_model * 2),
             conv_p(d_model * 2, d_model * 4)],
        fc_mu=dict(w=nrm((latent_dim, d_model * 4)), b=nrm((latent_dim,))),
        fc_logvar=dict(w=nrm((latent_dim, d_model * 4)), b=nrm((latent_dim,))),
        dec_in=dict(w=nrm((d_model * 4 * H8 * W8, latent_dim + n_genres)),
                    b=nrm((d_model * 4 * H8 * W8,))),
        dec=[convT_p(d_model * 4, d_model * 2),
             convT_p(d_model * 2, d_model),
             convT_p(d_model, 1, bn=False)],
    )


def prepare_params(params, eps=1e-5):
    """One-time weight prep: transposes, ConvT parity split, BN folding, bf16 casts."""
    # TODO(synk): BatchNorm2d folded in eval mode (running stats); Dropout2d is eval-mode identity.
    def fold(p, cout):
        if "gamma" in p:
            scale = p["gamma"] / jnp.sqrt(p["var"] + eps)
            shift = p["beta"] - p["mean"] * scale
        else:
            scale = jnp.ones((cout,), jnp.float32)
            shift = jnp.zeros((cout,), jnp.float32)
        return scale, (p["b"] * scale + shift).reshape(1, cout).astype(jnp.float32)

    prep = {"enc": [], "dec": []}
    for p in params["enc"]:
        cout, cin = p["w"].shape[0], p["w"].shape[1]
        scale, shift = fold(p, cout)
        w_mat = jnp.transpose(p["w"], (2, 3, 1, 0)).reshape(9 * cin, cout)   # (kh,kw,ci) x co
        prep["enc"].append(dict(w=(w_mat * scale).astype(jnp.bfloat16), shift=shift))

    for p in params["dec"]:
        cout = p["w"].shape[1]
        scale, shift = fold(p, cout)
        W = p["w"]                                                # (Cin, Cout, 3, 3)

        def mat(taps, _W=W, _scale=scale):
            m = jnp.concatenate([_W[:, :, kh, kw] for kh, kw in taps], axis=0)
            return (m * _scale).astype(jnp.bfloat16)

        prep["dec"].append(dict(
            w_ee=mat([(1, 1)]),                                   # even rows / even cols
            w_eo=mat([(1, 2), (1, 0)]),                           # x[m,n], x[m,n+1]
            w_oe=mat([(2, 1), (0, 1)]),                           # x[m,n], x[m+1,n]
            w_oo=mat([(2, 2), (2, 0), (0, 2), (0, 0)]),           # x[m,n], x[m,n+1], x[m+1,n], x[m+1,n+1]
            shift=shift))

    L = params["fc_mu"]["w"].shape[0]
    prep["fc_mu"] = dict(w=params["fc_mu"]["w"].T.astype(jnp.float32),
                         b=params["fc_mu"]["b"].reshape(1, L).astype(jnp.float32))
    prep["fc_logvar"] = dict(w=params["fc_logvar"]["w"].T.astype(jnp.float32),
                             b=params["fc_logvar"]["b"].reshape(1, L).astype(jnp.float32))
    Wd = params["dec_in"]["w"]                                    # torch Linear: (out, in)
    prep["dec_in"] = dict(w_z=Wd[:, :L].T.astype(jnp.float32),
                          w_g=Wd[:, L:].T.astype(jnp.float32),
                          b=params["dec_in"]["b"].reshape(1, -1).astype(jnp.float32))
    return prep


# ----------------------------------------------------------------------------
# Full forward
# ----------------------------------------------------------------------------
def cvae_forward(prep, x_nchw, genres, eps):
    B, _, H, W = x_nchw.shape
    G = genres.shape[1]
    x = jnp.transpose(x_nchw, (0, 2, 3, 1))                                  # NHWC
    g_embed = jnp.broadcast_to(genres[:, None, None, :], (B, H, W, G))
    h = jnp.concatenate([x, g_embed], axis=-1).astype(jnp.bfloat16)          # cat along channels

    shortcuts = []
    for ep in prep["enc"]:
        h = encoder_block(h, ep)
        shortcuts.append(h)                                                  # SiLU outputs

    # latent head fused with decoder-input linear + first skip-add (NCHW-flat order)
    s3 = shortcuts.pop()                                                     # (B, H8, W8, 4d)
    _, H8, W8, C4 = s3.shape
    res0 = jnp.transpose(s3, (0, 3, 1, 2)).reshape(B, C4 * H8 * W8)
    mu, logvar, z, hdec = latent_decode(h, prep, genres, eps, res0)
    hdec = jnp.transpose(hdec.reshape(B, C4, H8, W8), (0, 2, 3, 1))          # back to NHWC

    s2 = shortcuts.pop()
    s1 = shortcuts.pop()
    # skip-add fused at the tail of each block == adding before the next ConvT (PyTorch order)
    hdec = decoder_block(hdec, prep["dec"][0], (1, 0), "silu", res=s2)
    hdec = decoder_block(hdec, prep["dec"][1], (1, 0), "silu", res=s1)
    hdec = decoder_block(hdec, prep["dec"][2], (1, 1), "sigmoid", out_dtype=jnp.float32)
    recon = jnp.transpose(hdec, (0, 3, 1, 2))[:, :, :H, :W]                  # NCHW + crop
    return recon, mu, logvar


if __name__ == "__main__":
    # small shapes chosen so the PyTorch skip-connection adds are shape-compatible
    d_model, latent_dim, n_frames, n_mels, n_genres = 8, 4, 16, 10, 3
    B = 2
    root = jax.random.PRNGKey(0)
    k_param, k_x, k_g, k_eps = jax.random.split(root, 4)

    params = init_params(d_model, latent_dim, n_frames, n_mels, n_genres, k_param)
    prep = prepare_params(params)                 # hoisted one-time weight preprocessing
    x = jax.random.normal(k_x, (B, 1, n_frames, n_mels), jnp.float32)
    genres = jax.nn.one_hot(jax.random.randint(k_g, (B,), 0, n_genres), n_genres,
                            dtype=jnp.float32)
    # TODO(synk): torch.randn_like eps replaced by deterministic JAX PRNG normal.
    eps = jax.random.normal(k_eps, (B, latent_dim), jnp.float32)

    fwd = jax.jit(cvae_forward)
    recon, mu, logvar = fwd(prep, x, genres, eps)
    jax.block_until_ready((recon, mu, logvar))

    assert recon.shape == (B, 1, n_frames, n_mels)
    assert mu.shape == (B, latent_dim) and logvar.shape == (B, latent_dim)
    assert bool(jnp.all(jnp.isfinite(recon)))
    print("KERNEL_OK")
</pallas_src>

<mosaic_0001>
module attributes {stable_mosaic.version = 11 : i64} {
  func.func @kernel(%arg0: i32, %arg1: memref<80x36xbf16, #tpu.memory_space<vmem>>, %arg2: memref<36x8xbf16, #tpu.memory_space<vmem>>, %arg3: memref<1x8xf32, #tpu.memory_space<vmem>>, %arg4: memref<80x8xbf16, #tpu.memory_space<vmem>>) attributes {dimension_semantics = [#tpu.dimension_semantics<parallel>], iteration_bounds = array<i64: 1>, scalar_prefetch = 0 : i64, scratch_operands = 0 : i64, tpu.core_type = #tpu.core_type<tc>, window_params = [{transform_indices = @transform_0, window_bounds = array<i64: 80, 36>}, {pipeline_mode = #tpu.pipeline_mode<synchronous>, transform_indices = @transform_1, window_bounds = array<i64: 36, 8>}, {pipeline_mode = #tpu.pipeline_mode<synchronous>, transform_indices = @transform_2, window_bounds = array<i64: 1, 8>}, {transform_indices = @transform_3, window_bounds = array<i64: 80, 8>}]} {
    %c0 = arith.constant 0 : index
    %c0_0 = arith.constant 0 : index
    %0 = vector.load %arg1[%c0, %c0_0] : memref<80x36xbf16, #tpu.memory_space<vmem>>, vector<80x36xbf16>
    %c0_1 = arith.constant 0 : index
    %c0_2 = arith.constant 0 : index
    %1 = vector.load %arg2[%c0_1, %c0_2] : memref<36x8xbf16, #tpu.memory_space<vmem>>, vector<36x8xbf16>
    %cst = arith.constant dense<0.000000e+00> : vector<80x8xf32>
    %2 = tpu.matmul %0, %1, %cst {dimension_numbers = #tpu.dot_dimension_numbers<[1], [0], [0], [1], [0, 0, 1, 1], [], []>} : vector<80x36xbf16>, vector<36x8xbf16>, vector<80x8xf32> -> vector<80x8xf32>
    %c0_3 = arith.constant 0 : index
    %c0_4 = arith.constant 0 : index
    %3 = vector.load %arg3[%c0_3, %c0_4] : memref<1x8xf32, #tpu.memory_space<vmem>>, vector<1x8xf32>
    %4 = vector.broadcast %3 : vector<1x8xf32> to vector<80x8xf32>
    %5 = arith.addf %2, %4 : vector<80x8xf32>
    %6 = arith.negf %5 : vector<80x8xf32>
    %7 = math.exp %6 : vector<80x8xf32>
    %cst_5 = arith.constant 1.000000e+00 : f32
    %8 = vector.broadcast %cst_5 : f32 to vector<80x8xf32>
    %9 = arith.addf %8, %7 : vector<80x8xf32>
    %10 = arith.divf %8, %9 : vector<80x8xf32>
    %11 = arith.mulf %5, %10 : vector<80x8xf32>
    %12 = arith.truncf %11 : vector<80x8xf32> to vector<80x8xbf16>
    %c0_6 = arith.constant 0 : index
    %c0_7 = arith.constant 0 : index
    %13 = vector.load %arg4[%c0_6, %c0_7] : memref<80x8xbf16, #tpu.memory_space<vmem>>, vector<80x8xbf16>
    tpu.vector_store %arg4[%c0_6, %c0_7], %12 {strides = array<i32>} : memref<80x8xbf16, #tpu.memory_space<vmem>>, vector<80x8xbf16>,
    return
  }
  func.func @transform_0(%arg0: i32) -> (i32, i32) {
    %c0_i32 = arith.constant 0 : i32
    %c0_i32_0 = arith.constant 0 : i32
    return %arg0, %c0_i32 : i32, i32
  }
  func.func @transform_1(%arg0: i32) -> (i32, i32) {
    %c0_i32 = arith.constant 0 : i32
    %c0_i32_0 = arith.constant 0 : i32
    %c0_i32_1 = arith.constant 0 : i32
    return %c0_i32, %c0_i32_0 : i32, i32
  }
  func.func @transform_2(%arg0: i32) -> (i32, i32) {
    %c0_i32 = arith.constant 0 : i32
    %c0_i32_0 = arith.constant 0 : i32
    %c0_i32_1 = arith.constant 0 : i32
    return %c0_i32, %c0_i32_0 : i32, i32
  }
  func.func @transform_3(%arg0: i32) -> (i32, i32) {
    %c0_i32 = arith.constant 0 : i32
    %c0_i32_0 = arith.constant 0 : i32
    return %arg0, %c0_i32 : i32, i32
  }
}

module attributes {stable_mosaic.version = 11 : i64} {
  func.func @kernel(%arg0: i32, %arg1: memref<24x72xbf16, #tpu.memory_space<vmem>>, %arg2: memref<72x16xbf16, #tpu.memory_space<vmem>>, %arg3: memref<1x16xf32, #tpu.memory_space<vmem>>, %arg4: memref<24x16xbf16, #tpu.memory_space<vmem>>) attributes {dimension_semantics = [#tpu.dimension_semantics<parallel>], iteration_bounds = array<i64: 1>, scalar_prefetch = 0 : i64, scratch_operands = 0 : i64, tpu.core_type = #tpu.core_type<tc>, window_params = [{transform_indices = @transform_0, window_bounds = array<i64: 24, 72>}, {pipeline_mode = #tpu.pipeline_mode<synchronous>, transform_indices = @transform_1, window_bounds = array<i64: 72, 16>}, {pipeline_mode = #tpu.pipeline_mode<synchronous>, transform_indices = @transform_2, window_bounds = array<i64: 1, 16>}, {transform_indices = @transform_3, window_bounds = array<i64: 24, 16>}]} {
    %c0 = arith.constant 0 : index
    %c0_0 = arith.constant 0 : index
    %0 = vector.load %arg1[%c0, %c0_0] : memref<24x72xbf16, #tpu.memory_space<vmem>>, vector<24x72xbf16>
    %c0_1 = arith.constant 0 : index
    %c0_2 = arith.constant 0 : index
    %1 = vector.load %arg2[%c0_1, %c0_2] : memref<72x16xbf16, #tpu.memory_space<vmem>>, vector<72x16xbf16>
    %cst = arith.constant dense<0.000000e+00> : vector<24x16xf32>
    %2 = tpu.matmul %0, %1, %cst {dimension_numbers = #tpu.dot_dimension_numbers<[1], [0], [0], [1], [0, 0, 1, 1], [], []>} : vector<24x72xbf16>, vector<72x16xbf16>, vector<24x16xf32> -> vector<24x16xf32>
    %c0_3 = arith.constant 0 : index
    %c0_4 = arith.constant 0 : index
    %3 = vector.load %arg3[%c0_3, %c0_4] : memref<1x16xf32, #tpu.memory_space<vmem>>, vector<1x16xf32>
    %4 = vector.broadcast %3 : vector<1x16xf32> to vector<24x16xf32>
    %5 = arith.addf %2, %4 : vector<24x16xf32>
    %6 = arith.negf %5 : vector<24x16xf32>
    %7 = math.exp %6 : vector<24x16xf32>
    %cst_5 = arith.constant 1.000000e+00 : f32
    %8 = vector.broadcast %cst_5 : f32 to vector<24x16xf32>
    %9 = arith.addf %8, %7 : vector<24x16xf32>
    %10 = arith.divf %8, %9 : vector<24x16xf32>
    %11 = arith.mulf %5, %10 : vector<24x16xf32>
    %12 = arith.truncf %11 : vector<24x16xf32> to vector<24x16xbf16>
    %c0_6 = arith.constant 0 : index
    %c0_7 = arith.constant 0 : index
    %13 = vector.load %arg4[%c0_6, %c0_7] : memref<24x16xbf16, #tpu.memory_space<vmem>>, vector<24x16xbf16>
    tpu.vector_store %arg4[%c0_6, %c0_7], %12 {strides = array<i32>} : memref<24x16xbf16, #tpu.memory_space<vmem>>, vector<24x16xbf16>,
    return
  }
  func.func @transform_0(%arg0: i32) -> (i32, i32) {
    %c0_i32 = arith.constant 0 : i32
    %c0_i32_0 = arith.constant 0 : i32
    return %arg0, %c0_i32 : i32, i32
  }
  func.func @transform_1(%arg0: i32) -> (i32, i32) {
    %c0_i32 = arith.constant 0 : i32
    %c0_i32_0 = arith.constant 0 : i32
    %c0_i32_1 = arith.constant 0 : i32
    return %c0_i32, %c0_i32_0 : i32, i32
  }
  func.func @transform_2(%arg0: i32) -> (i32, i32) {
    %c0_i32 = arith.constant 0 : i32
    %c0_i32_0 = arith.constant 0 : i32
    %c0_i32_1 = arith.constant 0 : i32
    return %c0_i32, %c0_i32_0 : i32, i32
  }
  func.func @transform_3(%arg0: i32) -> (i32, i32) {
    %c0_i32 = arith.constant 0 : i32
    %c0_i32_0 = arith.constant 0 : i32
    return %arg0, %c0_i32 : i32, i32
  }
}

module attributes {stable_mosaic.version = 11 : i64} {
  func.func @kernel(%arg0: i32, %arg1: memref<8x144xbf16, #tpu.memory_space<vmem>>, %arg2: memref<144x32xbf16, #tpu.memory_space<vmem>>, %arg3: memref<1x32xf32, #tpu.memory_space<vmem>>, %arg4: memref<8x32xbf16, #tpu.memory_space<vmem>>) attributes {dimension_semantics = [#tpu.dimension_semantics<parallel>], iteration_bounds = array<i64: 1>, scalar_prefetch = 0 : i64, scratch_operands = 0 : i64, tpu.core_type = #tpu.core_type<tc>, window_params = [{transform_indices = @transform_0, window_bounds = array<i64: 8, 144>}, {pipeline_mode = #tpu.pipeline_mode<synchronous>, transform_indices = @transform_1, window_bounds = array<i64: 144, 32>}, {pipeline_mode = #tpu.pipeline_mode<synchronous>, transform_indices = @transform_2, window_bounds = array<i64: 1, 32>}, {transform_indices = @transform_3, window_bounds = array<i64: 8, 32>}]} {
    %c0 = arith.constant 0 : index
    %c0_0 = arith.constant 0 : index
    %0 = vector.load %arg1[%c0, %c0_0] : memref<8x144xbf16, #tpu.memory_space<vmem>>, vector<8x144xbf16>
    %c0_1 = arith.constant 0 : index
    %c0_2 = arith.constant 0 : index
    %1 = vector.load %arg2[%c0_1, %c0_2] : memref<144x32xbf16, #tpu.memory_space<vmem>>, vector<144x32xbf16>
    %cst = arith.constant dense<0.000000e+00> : vector<8x32xf32>
    %2 = tpu.matmul %0, %1, %cst {dimension_numbers = #tpu.dot_dimension_numbers<[1], [0], [0], [1], [0, 0, 1, 1], [], []>} : vector<8x144xbf16>, vector<144x32xbf16>, vector<8x32xf32> -> vector<8x32xf32>
    %c0_3 = arith.constant 0 : index
    %c0_4 = arith.constant 0 : index
    %3 = vector.load %arg3[%c0_3, %c0_4] : memref<1x32xf32, #tpu.memory_space<vmem>>, vector<1x32xf32>
    %4 = vector.broadcast %3 : vector<1x32xf32> to vector<8x32xf32>
    %5 = arith.addf %2, %4 : vector<8x32xf32>
    %6 = arith.negf %5 : vector<8x32xf32>
    %7 = math.exp %6 : vector<8x32xf32>
    %cst_5 = arith.constant 1.000000e+00 : f32
    %8 = vector.broadcast %cst_5 : f32 to vector<8x32xf32>
    %9 = arith.addf %8, %7 : vector<8x32xf32>
    %10 = arith.divf %8, %9 : vector<8x32xf32>
    %11 = arith.mulf %5, %10 : vector<8x32xf32>
    %12 = arith.truncf %11 : vector<8x32xf32> to vector<8x32xbf16>
    %c0_6 = arith.constant 0 : index
    %c0_7 = arith.constant 0 : index
    %13 = vector.load %arg4[%c0_6, %c0_7] : memref<8x32xbf16, #tpu.memory_space<vmem>>, vector<8x32xbf16>
    tpu.vector_store %arg4[%c0_6, %c0_7], %12 {strides = array<i32>} : memref<8x32xbf16, #tpu.memory_space<vmem>>, vector<8x32xbf16>,
    return
  }
  func.func @transform_0(%arg0: i32) -> (i32, i32) {
    %c0_i32 = arith.constant 0 : i32
    %c0_i32_0 = arith.constant 0 : i32
    return %arg0, %c0_i32 : i32, i32
  }
  func.func @transform_1(%arg0: i32) -> (i32, i32) {
    %c0_i32 = arith.constant 0 : i32
    %c0_i32_0 = arith.constant 0 : i32
    %c0_i32_1 = arith.constant 0 : i32
    return %c0_i32, %c0_i32_0 : i32, i32
  }
  func.func @transform_2(%arg0: i32) -> (i32, i32) {
    %c0_i32 = arith.constant 0 : i32
    %c0_i32_0 = arith.constant 0 : i32
    %c0_i32_1 = arith.constant 0 : i32
    return %c0_i32, %c0_i32_0 : i32, i32
  }
  func.func @transform_3(%arg0: i32) -> (i32, i32) {
    %c0_i32 = arith.constant 0 : i32
    %c0_i32_0 = arith.constant 0 : i32
    return %arg0, %c0_i32 : i32, i32
  }
}

module attributes {stable_mosaic.version = 11 : i64} {
  func.func @_latent_decode_kernel(%arg0: i32, %arg1: memref<2x4x32xbf16, #tpu.memory_space<vmem>>, %arg2: memref<32x4xf32, #tpu.memory_space<vmem>>, %arg3: memref<1x4xf32, #tpu.memory_space<vmem>>, %arg4: memref<32x4xf32, #tpu.memory_space<vmem>>, %arg5: memref<1x4xf32, #tpu.memory_space<vmem>>, %arg6: memref<2x4xf32, #tpu.memory_space<vmem>>, %arg7: memref<2x3xf32, #tpu.memory_space<vmem>>, %arg8: memref<4x128xf32, #tpu.memory_space<vmem>>, %arg9: memref<3x128xf32, #tpu.memory_space<vmem>>, %arg10: memref<1x128xf32, #tpu.memory_space<vmem>>, %arg11: memref<2x128xbf16, #tpu.memory_space<vmem>>, %arg12: memref<2x4xf32, #tpu.memory_space<vmem>>, %arg13: memref<2x4xf32, #tpu.memory_space<vmem>>, %arg14: memref<2x4xf32, #tpu.memory_space<vmem>>, %arg15: memref<2x128xbf16, #tpu.memory_space<vmem>>) attributes {dimension_semantics = [#tpu.dimension_semantics<arbitrary>], iteration_bounds = array<i64: 1>, scalar_prefetch = 0 : i64, scratch_operands = 0 : i64, tpu.core_type = #tpu.core_type<tc>, window_params = [{pipeline_mode = #tpu.pipeline_mode<synchronous>, transform_indices = @transform_0, window_bounds = array<i64: 2, 4, 32>}, {pipeline_mode = #tpu.pipeline_mode<synchronous>, transform_indices = @transform_1, window_bounds = array<i64: 32, 4>}, {pipeline_mode = #tpu.pipeline_mode<synchronous>, transform_indices = @transform_2, window_bounds = array<i64: 1, 4>}, {pipeline_mode = #tpu.pipeline_mode<synchronous>, transform_indices = @transform_3, window_bounds = array<i64: 32, 4>}, {pipeline_mode = #tpu.pipeline_mode<synchronous>, transform_indices = @transform_4, window_bounds = array<i64: 1, 4>}, {pipeline_mode = #tpu.pipeline_mode<synchronous>, transform_indices = @transform_5, window_bounds = array<i64: 2, 4>}, {pipeline_mode = #tpu.pipeline_mode<synchronous>, transform_indices = @transform_6, window_bounds = array<i64: 2, 3>}, {pipeline_mode = #tpu.pipeline_mode<synchronous>, transform_indices = @transform_7, window_bounds = array<i64: 4, 128>}, {pipeline_mode = #tpu.pipeline_mode<synchronous>, transform_indices = @transform_8, window_bounds = array<i64: 3, 128>}, {pipeline_mode = #tpu.pipeline_mode<synchronous>, transform_indices = @transform_9, window_bounds = array<i64: 1, 128>}, {pipeline_mode = #tpu.pipeline_mode<synchronous>, transform_indices = @transform_10, window_bounds = array<i64: 2, 128>}, {pipeline_mode = #tpu.pipeline_mode<synchronous>, transform_indices = @transform_11, window_bounds = array<i64: 2, 4>}, {pipeline_mode = #tpu.pipeline_mode<synchronous>, transform_indices = @transform_12, window_bounds = array<i64: 2, 4>}, {pipeline_mode = #tpu.pipeline_mode<synchronous>, transform_indices = @transform_13, window_bounds = array<i64: 2, 4>}, {pipeline_mode = #tpu.pipeline_mode<synchronous>, transform_indices = @transform_14, window_bounds = array<i64: 2, 128>}]} {
    %c0 = arith.constant 0 : index
    %c0_0 = arith.constant 0 : index
    %c0_1 = arith.constant 0 : index
    %0 = vector.load %arg1[%c0, %c0_0, %c0_1] : memref<2x4x32xbf16, #tpu.memory_space<vmem>>, vector<2x4x32xbf16>
    %1 = arith.extf %0 : vector<2x4x32xbf16> to vector<2x4x32xf32>
    %cst = arith.constant dense<0.000000e+00> : vector<2x32xf32>
    %2 = vector.multi_reduction <add>, %1, %cst [1] : vector<2x4x32xf32> to vector<2x32xf32>
    %cst_2 = arith.constant 4.000000e+00 : f32
    %3 = vector.broadcast %cst_2 : f32 to vector<2x32xf32>
    %4 = arith.divf %2, %3 : vector<2x32xf32>
    %c0_3 = arith.constant 0 : index
    %c0_4 = arith.constant 0 : index
    %5 = vector.load %arg2[%c0_3, %c0_4] : memref<32x4xf32, #tpu.memory_space<vmem>>, vector<32x4xf32>
    %cst_5 = arith.constant dense<0.000000e+00> : vector<2x4xf32>
    %6 = tpu.matmul %4, %5, %cst_5 {dimension_numbers = #tpu.dot_dimension_numbers<[1], [0], [0], [1], [0, 0, 1, 1], [], []>} : vector<2x32xf32>, vector<32x4xf32>, vector<2x4xf32> -> vector<2x4xf32>
    %c0_6 = arith.constant 0 : index
    %c0_7 = arith.constant 0 : index
    %7 = vector.load %arg3[%c0_6, %c0_7] : memref<1x4xf32, #tpu.memory_space<vmem>>, vector<1x4xf32>
    %8 = vector.broadcast %7 : vector<1x4xf32> to vector<2x4xf32>
    %9 = arith.addf %6, %8 : vector<2x4xf32>
    %c0_8 = arith.constant 0 : index
    %c0_9 = arith.constant 0 : index
    %10 = vector.load %arg4[%c0_8, %c0_9] : memref<32x4xf32, #tpu.memory_space<vmem>>, vector<32x4xf32>
    %cst_10 = arith.constant dense<0.000000e+00> : vector<2x4xf32>
    %11 = tpu.matmul %4, %10, %cst_10 {dimension_numbers = #tpu.dot_dimension_numbers<[1], [0], [0], [1], [0, 0, 1, 1], [], []>} : vector<2x32xf32>, vector<32x4xf32>, vector<2x4xf32> -> vector<2x4xf32>
    %c0_11 = arith.constant 0 : index
    %c0_12 = arith.constant 0 : index
    %12 = vector.load %arg5[%c0_11, %c0_12] : memref<1x4xf32, #tpu.memory_space<vmem>>, vector<1x4xf32>
    %13 = vector.broadcast %12 : vector<1x4xf32> to vector<2x4xf32>
    %14 = arith.addf %11, %13 : vector<2x4xf32>
    %c0_13 = arith.constant 0 : index
    %c0_14 = arith.constant 0 : index
    %15 = vector.load %arg6[%c0_13, %c0_14] : memref<2x4xf32, #tpu.memory_space<vmem>>, vector<2x4xf32>
    %cst_15 = arith.constant 5.000000e-01 : f32
    %16 = vector.broadcast %cst_15 : f32 to vector<2x4xf32>
    %17 = arith.mulf %16, %14 : vector<2x4xf32>
    %18 = math.exp %17 : vector<2x4xf32>
    %19 = arith.mulf %15, %18 : vector<2x4xf32>
    %20 = arith.addf %9, %19 : vector<2x4xf32>
    %c0_16 = arith.constant 0 : index
    %c0_17 = arith.constant 0 : index
    %21 = vector.load %arg8[%c0_16, %c0_17] : memref<4x128xf32, #tpu.memory_space<vmem>>, vector<4x128xf32>
    %cst_18 = arith.constant dense<0.000000e+00> : vector<2x128xf32>
    %22 = tpu.matmul %20, %21, %cst_18 {dimension_numbers = #tpu.dot_dimension_numbers<[1], [0], [0], [1], [0, 0, 1, 1], [], []>} : vector<2x4xf32>, vector<4x128xf32>, vector<2x128xf32> -> vector<2x128xf32>
    %c0_19 = arith.constant 0 : index
    %c0_20 = arith.constant 0 : index
    %23 = vector.load %arg7[%c0_19, %c0_20] : memref<2x3xf32, #tpu.memory_space<vmem>>, vector<2x3xf32>
    %c0_21 = arith.constant 0 : index
    %c0_22 = arith.constant 0 : index
    %24 = vector.load %arg9[%c0_21, %c0_22] : memref<3x128xf32, #tpu.memory_space<vmem>>, vector<3x128xf32>
    %cst_23 = arith.constant dense<0.000000e+00> : vector<2x128xf32>
    %25 = tpu.matmul %23, %24, %cst_23 {dimension_numbers = #tpu.dot_dimension_numbers<[1], [0], [0], [1], [0, 0, 1, 1], [], []>} : vector<2x3xf32>, vector<3x128xf32>, vector<2x128xf32> -> vector<2x128xf32>
    %26 = arith.addf %22, %25 : vector<2x128xf32>
    %c0_24 = arith.constant 0 : index
    %c0_25 = arith.constant 0 : index
    %27 = vector.load %arg10[%c0_24, %c0_25] : memref<1x128xf32, #tpu.memory_space<vmem>>, vector<1x128xf32>
    %28 = vector.broadcast %27 : vector<1x128xf32> to vector<2x128xf32>
    %29 = arith.addf %26, %28 : vector<2x128xf32>
    %c0_26 = arith.constant 0 : index
    %c0_27 = arith.constant 0 : index
    %30 = vector.load %arg11[%c0_26, %c0_27] : memref<2x128xbf16, #tpu.memory_space<vmem>>, vector<2x128xbf16>
    %31 = arith.extf %30 : vector<2x128xbf16> to vector<2x128xf32>
    %32 = arith.addf %29, %31 : vector<2x128xf32>
    %c0_28 = arith.constant 0 : index
    %c0_29 = arith.constant 0 : index
    %33 = vector.load %arg12[%c0_28, %c0_29] : memref<2x4xf32, #tpu.memory_space<vmem>>, vector<2x4xf32>
    tpu.vector_store %arg12[%c0_28, %c0_29], %9 {strides = array<i32>} : memref<2x4xf32, #tpu.memory_space<vmem>>, vector<2x4xf32>,
    %c0_30 = arith.constant 0 : index
    %c0_31 = arith.constant 0 : index
    %34 = vector.load %arg13[%c0_30, %c0_31] : memref<2x4xf32, #tpu.memory_space<vmem>>, vector<2x4xf32>
    tpu.vector_store %arg13[%c0_30, %c0_31], %14 {strides = array<i32>} : memref<2x4xf32, #tpu.memory_space<vmem>>, vector<2x4xf32>,
    %c0_32 = arith.constant 0 : index
    %c0_33 = arith.constant 0 : index
    %35 = vector.load %arg14[%c0_32, %c0_33] : memref<2x4xf32, #tpu.memory_space<vmem>>, vector<2x4xf32>
    tpu.vector_store %arg14[%c0_32, %c0_33], %20 {strides = array<i32>} : memref<2x4xf32, #tpu.memory_space<vmem>>, vector<2x4xf32>,
    %36 = arith.truncf %32 : vector<2x128xf32> to vector<2x128xbf16>
    %c0_34 = arith.constant 0 : index
    %c0_35 = arith.constant 0 : index
    %37 = vector.load %arg15[%c0_34, %c0_35] : memref<2x128xbf16, #tpu.memory_space<vmem>>, vector<2x128xbf16>
    tpu.vector_store %arg15[%c0_34, %c0_35], %36 {strides = array<i32>} : memref<2x128xbf16, #tpu.memory_space<vmem>>, vector<2x128xbf16>,
    return
  }
  func.func @transform_0(%arg0: i32) -> (i32, i32, i32) {
    %c0_i32 = arith.constant 0 : i32
    %c0_i32_0 = arith.constant 0 : i32
    %c0_i32_1 = arith.constant 0 : i32
    %c0_i32_2 = arith.constant 0 : i32
    return %c0_i32, %c0_i32_0, %c0_i32_1 : i32, i32, i32
  }
  func.func @transform_1(%arg0: i32) -> (i32, i32) {
    %c0_i32 = arith.constant 0 : i32
    %c0_i32_0 = arith.constant 0 : i32
    %c0_i32_1 = arith.constant 0 : i32
    return %c0_i32, %c0_i32_0 : i32, i32
  }
  func.func @transform_2(%arg0: i32) -> (i32, i32) {
    %c0_i32 = arith.constant 0 : i32
    %c0_i32_0 = arith.constant 0 : i32
    %c0_i32_1 = arith.constant 0 : i32
    return %c0_i32, %c0_i32_0 : i32, i32
  }
  func.func @transform_3(%arg0: i32) -> (i32, i32) {
    %c0_i32 = arith.constant 0 : i32
    %c0_i32_0 = arith.constant 0 : i32
    %c0_i32_1 = arith.constant 0 : i32
    return %c0_i32, %c0_i32_0 : i32, i32
  }
  func.func @transform_4(%arg0: i32) -> (i32, i32) {
    %c0_i32 = arith.constant 0 : i32
    %c0_i32_0 = arith.constant 0 : i32
    %c0_i32_1 = arith.constant 0 : i32
    return %c0_i32, %c0_i32_0 : i32, i32
  }
  func.func @transform_5(%arg0: i32) -> (i32, i32) {
    %c0_i32 = arith.constant 0 : i32
    %c0_i32_0 = arith.constant 0 : i32
    %c0_i32_1 = arith.constant 0 : i32
    return %c0_i32, %c0_i32_0 : i32, i32
  }
  func.func @transform_6(%arg0: i32) -> (i32, i32) {
    %c0_i32 = arith.constant 0 : i32
    %c0_i32_0 = arith.constant 0 : i32
    %c0_i32_1 = arith.constant 0 : i32
    return %c0_i32, %c0_i32_0 : i32, i32
  }
  func.func @transform_7(%arg0: i32) -> (i32, i32) {
    %c0_i32 = arith.constant 0 : i32
    %c0_i32_0 = arith.constant 0 : i32
    %c0_i32_1 = arith.constant 0 : i32
    return %c0_i32, %c0_i32_0 : i32, i32
  }
  func.func @transform_8(%arg0: i32) -> (i32, i32) {
    %c0_i32 = arith.constant 0 : i32
    %c0_i32_0 = arith.constant 0 : i32
    %c0_i32_1 = arith.constant 0 : i32
    return %c0_i32, %c0_i32_0 : i32, i32
  }
  func.func @transform_9(%arg0: i32) -> (i32, i32) {
    %c0_i32 = arith.constant 0 : i32
    %c0_i32_0 = arith.constant 0 : i32
    %c0_i32_1 = arith.constant 0 : i32
    return %c0_i32, %c0_i32_0 : i32, i32
  }
  func.func @transform_10(%arg0: i32) -> (i32, i32) {
    %c0_i32 = arith.constant 0 : i32
    %c0_i32_0 = arith.constant 0 : i32
    %c0_i32_1 = arith.constant 0 : i32
    return %c0_i32, %c0_i32_0 : i32, i32
  }
  func.func @transform_11(%arg0: i32) -> (i32, i32) {
    %c0_i32 = arith.constant 0 : i32
    %c0_i32_0 = arith.constant 0 : i32
    %c0_i32_1 = arith.constant 0 : i32
    return %c0_i32, %c0_i32_0 : i32, i32
  }
  func.func @transform_12(%arg0: i32) -> (i32, i32) {
    %c0_i32 = arith.constant 0 : i32
    %c0_i32_0 = arith.constant 0 : i32
    %c0_i32_1 = arith.constant 0 : i32
    return %c0_i32, %c0_i32_0 : i32, i32
  }
  func.func @transform_13(%arg0: i32) -> (i32, i32) {
    %c0_i32 = arith.constant 0 : i32
    %c0_i32_0 = arith.constant 0 : i32
    %c0_i32_1 = arith.constant 0 : i32
    return %c0_i32, %c0_i32_0 : i32, i32
  }
  func.func @transform_14(%arg0: i32) -> (i32, i32) {
    %c0_i32 = arith.constant 0 : i32
    %c0_i32_0 = arith.constant 0 : i32
    %c0_i32_1 = arith.constant 0 : i32
    return %c0_i32, %c0_i32_0 : i32, i32
  }
}

module attributes {stable_mosaic.version = 11 : i64} {
  func.func @kernel(%arg0: i32, %arg1: memref<4x128xbf16, #tpu.memory_space<vmem>>, %arg2: memref<128x16xbf16, #tpu.memory_space<vmem>>, %arg3: memref<1x16xf32, #tpu.memory_space<vmem>>, %arg4: memref<4x16xbf16, #tpu.memory_space<vmem>>, %arg5: memref<4x16xbf16, #tpu.memory_space<vmem>>) attributes {dimension_semantics = [#tpu.dimension_semantics<parallel>], iteration_bounds = array<i64: 1>, scalar_prefetch = 0 : i64, scratch_operands = 0 : i64, tpu.core_type = #tpu.core_type<tc>, window_params = [{transform_indices = @transform_0, window_bounds = array<i64: 4, 128>}, {pipeline_mode = #tpu.pipeline_mode<synchronous>, transform_indices = @transform_1, window_bounds = array<i64: 128, 16>}, {pipeline_mode = #tpu.pipeline_mode<synchronous>, transform_indices = @transform_2, window_bounds = array<i64: 1, 16>}, {transform_indices = @transform_3, window_bounds = array<i64: 4, 16>}, {transform_indices = @transform_4, window_bounds = array<i64: 4, 16>}]} {
    %c0 = arith.constant 0 : index
    %c0_0 = arith.constant 0 : index
    %0 = vector.load %arg1[%c0, %c0_0] : memref<4x128xbf16, #tpu.memory_space<vmem>>, vector<4x128xbf16>
    %c0_1 = arith.constant 0 : index
    %c0_2 = arith.constant 0 : index
    %1 = vector.load %arg2[%c0_1, %c0_2] : memref<128x16xbf16, #tpu.memory_space<vmem>>, vector<128x16xbf16>
    %cst = arith.constant dense<0.000000e+00> : vector<4x16xf32>
    %2 = tpu.matmul %0, %1, %cst {dimension_numbers = #tpu.dot_dimension_numbers<[1], [0], [0], [1], [0, 0, 1, 1], [], []>} : vector<4x128xbf16>, vector<128x16xbf16>, vector<4x16xf32> -> vector<4x16xf32>
    %c0_3 = arith.constant 0 : index
    %c0_4 = arith.constant 0 : index
    %3 = vector.load %arg3[%c0_3, %c0_4] : memref<1x16xf32, #tpu.memory_space<vmem>>, vector<1x16xf32>
    %4 = vector.broadcast %3 : vector<1x16xf32> to vector<4x16xf32>
    %5 = arith.addf %2, %4 : vector<4x16xf32>
    %6 = arith.negf %5 : vector<4x16xf32>
    %7 = math.exp %6 : vector<4x16xf32>
    %cst_5 = arith.constant 1.000000e+00 : f32
    %8 = vector.broadcast %cst_5 : f32 to vector<4x16xf32>
    %9 = arith.addf %8, %7 : vector<4x16xf32>
    %10 = arith.divf %8, %9 : vector<4x16xf32>
    %11 = arith.mulf %5, %10 : vector<4x16xf32>
    %c0_6 = arith.constant 0 : index
    %c0_7 = arith.constant 0 : index
    %12 = vector.load %arg4[%c0_6, %c0_7] : memref<4x16xbf16, #tpu.memory_space<vmem>>, vector<4x16xbf16>
    %13 = arith.extf %12 : vector<4x16xbf16> to vector<4x16xf32>
    %14 = arith.addf %11, %13 : vector<4x16xf32>
    %15 = arith.truncf %14 : vector<4x16xf32> to vector<4x16xbf16>
    %c0_8 = arith.constant 0 : index
    %c0_9 = arith.constant 0 : index
    %16 = vector.load %arg5[%c0_8, %c0_9] : memref<4x16xbf16, #tpu.memory_space<vmem>>, vector<4x16xbf16>
    tpu.vector_store %arg5[%c0_8, %c0_9], %15 {strides = array<i32>} : memref<4x16xbf16, #tpu.memory_space<vmem>>, vector<4x16xbf16>,
    return
  }
  func.func @transform_0(%arg0: i32) -> (i32, i32) {
    %c0_i32 = arith.constant 0 : i32
    %c0_i32_0 = arith.constant 0 : i32
    return %arg0, %c0_i32 : i32, i32
  }
  func.func @transform_1(%arg0: i32) -> (i32, i32) {
    %c0_i32 = arith.constant 0 : i32
    %c0_i32_0 = arith.constant 0 : i32
    %c0_i32_1 = arith.constant 0 : i32
    return %c0_i32, %c0_i32_0 : i32, i32
  }
  func.func @transform_2(%arg0: i32) -> (i32, i32) {
    %c0_i32 = arith.constant 0 : i32
    %c0_i32_0 = arith.constant 0 : i32
    %c0_i32_1 = arith.constant 0 : i32
    return %c0_i32, %c0_i32_0 : i32, i32
  }
  func.func @transform_3(%arg0: i32) -> (i32, i32) {
    %c0_i32 = arith.constant 0 : i32
    %c0_i32_0 = arith.constant 0 : i32
    return %arg0, %c0_i32 : i32, i32
  }
  func.func @transform_4(%arg0: i32) -> (i32, i32) {
    %c0_i32 = arith.constant 0 : i32
    %c0_i32_0 = arith.constant 0 : i32
    return %arg0, %c0_i32 : i32, i32
  }
}

module attributes {stable_mosaic.version = 11 : i64} {
  func.func @kernel(%arg0: i32, %arg1: memref<8x64xbf16, #tpu.memory_space<vmem>>, %arg2: memref<64x16xbf16, #tpu.memory_space<vmem>>, %arg3: memref<1x16xf32, #tpu.memory_space<vmem>>, %arg4: memref<8x16xbf16, #tpu.memory_space<vmem>>, %arg5: memref<8x16xbf16, #tpu.memory_space<vmem>>) attributes {dimension_semantics = [#tpu.dimension_semantics<parallel>], iteration_bounds = array<i64: 1>, scalar_prefetch = 0 : i64, scratch_operands = 0 : i64, tpu.core_type = #tpu.core_type<tc>, window_params = [{transform_indices = @transform_0, window_bounds = array<i64: 8, 64>}, {pipeline_mode = #tpu.pipeline_mode<synchronous>, transform_indices = @transform_1, window_bounds = array<i64: 64, 16>}, {pipeline_mode = #tpu.pipeline_mode<synchronous>, transform_indices = @transform_2, window_bounds = array<i64: 1, 16>}, {transform_indices = @transform_3, window_bounds = array<i64: 8, 16>}, {transform_indices = @transform_4, window_bounds = array<i64: 8, 16>}]} {
    %c0 = arith.constant 0 : index
    %c0_0 = arith.constant 0 : index
    %0 = vector.load %arg1[%c0, %c0_0] : memref<8x64xbf16, #tpu.memory_space<vmem>>, vector<8x64xbf16>
    %c0_1 = arith.constant 0 : index
    %c0_2 = arith.constant 0 : index
    %1 = vector.load %arg2[%c0_1, %c0_2] : memref<64x16xbf16, #tpu.memory_space<vmem>>, vector<64x16xbf16>
    %cst = arith.constant dense<0.000000e+00> : vector<8x16xf32>
    %2 = tpu.matmul %0, %1, %cst {dimension_numbers = #tpu.dot_dimension_numbers<[1], [0], [0], [1], [0, 0, 1, 1], [], []>} : vector<8x64xbf16>, vector<64x16xbf16>, vector<8x16xf32> -> vector<8x16xf32>
    %c0_3 = arith.constant 0 : index
    %c0_4 = arith.constant 0 : index
    %3 = vector.load %arg3[%c0_3, %c0_4] : memref<1x16xf32, #tpu.memory_space<vmem>>, vector<1x16xf32>
    %4 = vector.broadcast %3 : vector<1x16xf32> to vector<8x16xf32>
    %5 = arith.addf %2, %4 : vector<8x16xf32>
    %6 = arith.negf %5 : vector<8x16xf32>
    %7 = math.exp %6 : vector<8x16xf32>
    %cst_5 = arith.constant 1.000000e+00 : f32
    %8 = vector.broadcast %cst_5 : f32 to vector<8x16xf32>
    %9 = arith.addf %8, %7 : vector<8x16xf32>
    %10 = arith.divf %8, %9 : vector<8x16xf32>
    %11 = arith.mulf %5, %10 : vector<8x16xf32>
    %c0_6 = arith.constant 0 : index
    %c0_7 = arith.constant 0 : index
    %12 = vector.load %arg4[%c0_6, %c0_7] : memref<8x16xbf16, #tpu.memory_space<vmem>>, vector<8x16xbf16>
    %13 = arith.extf %12 : vector<8x16xbf16> to vector<8x16xf32>
    %14 = arith.addf %11, %13 : vector<8x16xf32>
    %15 = arith.truncf %14 : vector<8x16xf32> to vector<8x16xbf16>
    %c0_8 = arith.constant 0 : index
    %c0_9 = arith.constant 0 : index
    %16 = vector.load %arg5[%c0_8, %c0_9] : memref<8x16xbf16, #tpu.memory_space<vmem>>, vector<8x16xbf16>
    tpu.vector_store %arg5[%c0_8, %c0_9], %15 {strides = array<i32>} : memref<8x16xbf16, #tpu.memory_space<vmem>>, vector<8x16xbf16>,
    return
  }
  func.func @transform_0(%arg0: i32) -> (i32, i32) {
    %c0_i32 = arith.constant 0 : i32
    %c0_i32_0 = arith.constant 0 : i32
    return %arg0, %c0_i32 : i32, i32
  }
  func.func @transform_1(%arg0: i32) -> (i32, i32) {
    %c0_i32 = arith.constant 0 : i32
    %c0_i32_0 = arith.constant 0 : i32
    %c0_i32_1 = arith.constant 0 : i32
    return %c0_i32, %c0_i32_0 : i32, i32
  }
  func.func @transform_2(%arg0: i32) -> (i32, i32) {
    %c0_i32 = arith.constant 0 : i32
    %c0_i32_0 = arith.constant 0 : i32
    %c0_i32_1 = arith.constant 0 : i32
    return %c0_i32, %c0_i32_0 : i32, i32
  }
  func.func @transform_3(%arg0: i32) -> (i32, i32) {
    %c0_i32 = arith.constant 0 : i32
    %c0_i32_0 = arith.constant 0 : i32
    return %arg0, %c0_i32 : i32, i32
  }
  func.func @transform_4(%arg0: i32) -> (i32, i32) {
    %c0_i32 = arith.constant 0 : i32
    %c0_i32_0 = arith.constant 0 : i32
    return %arg0, %c0_i32 : i32, i32
  }
}

module attributes {stable_mosaic.version = 11 : i64} {
  func.func @kernel(%arg0: i32, %arg1: memref<4x64xbf16, #tpu.memory_space<vmem>>, %arg2: memref<64x16xbf16, #tpu.memory_space<vmem>>, %arg3: memref<1x16xf32, #tpu.memory_space<vmem>>, %arg4: memref<4x16xbf16, #tpu.memory_space<vmem>>, %arg5: memref<4x16xbf16, #tpu.memory_space<vmem>>) attributes {dimension_semantics = [#tpu.dimension_semantics<parallel>], iteration_bounds = array<i64: 1>, scalar_prefetch = 0 : i64, scratch_operands = 0 : i64, tpu.core_type = #tpu.core_type<tc>, window_params = [{transform_indices = @transform_0, window_bounds = array<i64: 4, 64>}, {pipeline_mode = #tpu.pipeline_mode<synchronous>, transform_indices = @transform_1, window_bounds = array<i64: 64, 16>}, {pipeline_mode = #tpu.pipeline_mode<synchronous>, transform_indices = @transform_2, window_bounds = array<i64: 1, 16>}, {transform_indices = @transform_3, window_bounds = array<i64: 4, 16>}, {transform_indices = @transform_4, window_bounds = array<i64: 4, 16>}]} {
    %c0 = arith.constant 0 : index
    %c0_0 = arith.constant 0 : index
    %0 = vector.load %arg1[%c0, %c0_0] : memref<4x64xbf16, #tpu.memory_space<vmem>>, vector<4x64xbf16>
    %c0_1 = arith.constant 0 : index
    %c0_2 = arith.constant 0 : index
    %1 = vector.load %arg2[%c0_1, %c0_2] : memref<64x16xbf16, #tpu.memory_space<vmem>>, vector<64x16xbf16>
    %cst = arith.constant dense<0.000000e+00> : vector<4x16xf32>
    %2 = tpu.matmul %0, %1, %cst {dimension_numbers = #tpu.dot_dimension_numbers<[1], [0], [0], [1], [0, 0, 1, 1], [], []>} : vector<4x64xbf16>, vector<64x16xbf16>, vector<4x16xf32> -> vector<4x16xf32>
    %c0_3 = arith.constant 0 : index
    %c0_4 = arith.constant 0 : index
    %3 = vector.load %arg3[%c0_3, %c0_4] : memref<1x16xf32, #tpu.memory_space<vmem>>, vector<1x16xf32>
    %4 = vector.broadcast %3 : vector<1x16xf32> to vector<4x16xf32>
    %5 = arith.addf %2, %4 : vector<4x16xf32>
    %6 = arith.negf %5 : vector<4x16xf32>
    %7 = math.exp %6 : vector<4x16xf32>
    %cst_5 = arith.constant 1.000000e+00 : f32
    %8 = vector.broadcast %cst_5 : f32 to vector<4x16xf32>
    %9 = arith.addf %8, %7 : vector<4x16xf32>
    %10 = arith.divf %8, %9 : vector<4x16xf32>
    %11 = arith.mulf %5, %10 : vector<4x16xf32>
    %c0_6 = arith.constant 0 : index
    %c0_7 = arith.constant 0 : index
    %12 = vector.load %arg4[%c0_6, %c0_7] : memref<4x16xbf16, #tpu.memory_space<vmem>>, vector<4x16xbf16>
    %13 = arith.extf %12 : vector<4x16xbf16> to vector<4x16xf32>
    %14 = arith.addf %11, %13 : vector<4x16xf32>
    %15 = arith.truncf %14 : vector<4x16xf32> to vector<4x16xbf16>
    %c0_8 = arith.constant 0 : index
    %c0_9 = arith.constant 0 : index
    %16 = vector.load %arg5[%c0_8, %c0_9] : memref<4x16xbf16, #tpu.memory_space<vmem>>, vector<4x16xbf16>
    tpu.vector_store %arg5[%c0_8, %c0_9], %15 {strides = array<i32>} : memref<4x16xbf16, #tpu.memory_space<vmem>>, vector<4x16xbf16>,
    return
  }
  func.func @transform_0(%arg0: i32) -> (i32, i32) {
    %c0_i32 = arith.constant 0 : i32
    %c0_i32_0 = arith.constant 0 : i32
    return %arg0, %c0_i32 : i32, i32
  }
  func.func @transform_1(%arg0: i32) -> (i32, i32) {
    %c0_i32 = arith.constant 0 : i32
    %c0_i32_0 = arith.constant 0 : i32
    %c0_i32_1 = arith.constant 0 : i32
    return %c0_i32, %c0_i32_0 : i32, i32
  }
  func.func @transform_2(%arg0: i32) -> (i32, i32) {
    %c0_i32 = arith.constant 0 : i32
    %c0_i32_0 = arith.constant 0 : i32
    %c0_i32_1 = arith.constant 0 : i32
    return %c0_i32, %c0_i32_0 : i32, i32
  }
  func.func @transform_3(%arg0: i32) -> (i32, i32) {
    %c0_i32 = arith.constant 0 : i32
    %c0_i32_0 = arith.constant 0 : i32
    return %arg0, %c0_i32 : i32, i32
  }
  func.func @transform_4(%arg0: i32) -> (i32, i32) {
    %c0_i32 = arith.constant 0 : i32
    %c0_i32_0 = arith.constant 0 : i32
    return %arg0, %c0_i32 : i32, i32
  }
}

module attributes {stable_mosaic.version = 11 : i64} {
  func.func @kernel(%arg0: i32, %arg1: memref<8x32xbf16, #tpu.memory_space<vmem>>, %arg2: memref<32x16xbf16, #tpu.memory_space<vmem>>, %arg3: memref<1x16xf32, #tpu.memory_space<vmem>>, %arg4: memref<8x16xbf16, #tpu.memory_space<vmem>>, %arg5: memref<8x16xbf16, #tpu.memory_space<vmem>>) attributes {dimension_semantics = [#tpu.dimension_semantics<parallel>], iteration_bounds = array<i64: 1>, scalar_prefetch = 0 : i64, scratch_operands = 0 : i64, tpu.core_type = #tpu.core_type<tc>, window_params = [{transform_indices = @transform_0, window_bounds = array<i64: 8, 32>}, {pipeline_mode = #tpu.pipeline_mode<synchronous>, transform_indices = @transform_1, window_bounds = array<i64: 32, 16>}, {pipeline_mode = #tpu.pipeline_mode<synchronous>, transform_indices = @transform_2, window_bounds = array<i64: 1, 16>}, {transform_indices = @transform_3, window_bounds = array<i64: 8, 16>}, {transform_indices = @transform_4, window_bounds = array<i64: 8, 16>}]} {
    %c0 = arith.constant 0 : index
    %c0_0 = arith.constant 0 : index
    %0 = vector.load %arg1[%c0, %c0_0] : memref<8x32xbf16, #tpu.memory_space<vmem>>, vector<8x32xbf16>
    %c0_1 = arith.constant 0 : index
    %c0_2 = arith.constant 0 : index
    %1 = vector.load %arg2[%c0_1, %c0_2] : memref<32x16xbf16, #tpu.memory_space<vmem>>, vector<32x16xbf16>
    %cst = arith.constant dense<0.000000e+00> : vector<8x16xf32>
    %2 = tpu.matmul %0, %1, %cst {dimension_numbers = #tpu.dot_dimension_numbers<[1], [0], [0], [1], [0, 0, 1, 1], [], []>} : vector<8x32xbf16>, vector<32x16xbf16>, vector<8x16xf32> -> vector<8x16xf32>
    %c0_3 = arith.constant 0 : index
    %c0_4 = arith.constant 0 : index
    %3 = vector.load %arg3[%c0_3, %c0_4] : memref<1x16xf32, #tpu.memory_space<vmem>>, vector<1x16xf32>
    %4 = vector.broadcast %3 : vector<1x16xf32> to vector<8x16xf32>
    %5 = arith.addf %2, %4 : vector<8x16xf32>
    %6 = arith.negf %5 : vector<8x16xf32>
    %7 = math.exp %6 : vector<8x16xf32>
    %cst_5 = arith.constant 1.000000e+00 : f32
    %8 = vector.broadcast %cst_5 : f32 to vector<8x16xf32>
    %9 = arith.addf %8, %7 : vector<8x16xf32>
    %10 = arith.divf %8, %9 : vector<8x16xf32>
    %11 = arith.mulf %5, %10 : vector<8x16xf32>
    %c0_6 = arith.constant 0 : index
    %c0_7 = arith.constant 0 : index
    %12 = vector.load %arg4[%c0_6, %c0_7] : memref<8x16xbf16, #tpu.memory_space<vmem>>, vector<8x16xbf16>
    %13 = arith.extf %12 : vector<8x16xbf16> to vector<8x16xf32>
    %14 = arith.addf %11, %13 : vector<8x16xf32>
    %15 = arith.truncf %14 : vector<8x16xf32> to vector<8x16xbf16>
    %c0_8 = arith.constant 0 : index
    %c0_9 = arith.constant 0 : index
    %16 = vector.load %arg5[%c0_8, %c0_9] : memref<8x16xbf16, #tpu.memory_space<vmem>>, vector<8x16xbf16>
    tpu.vector_store %arg5[%c0_8, %c0_9], %15 {strides = array<i32>} : memref<8x16xbf16, #tpu.memory_space<vmem>>, vector<8x16xbf16>,
    return
  }
  func.func @transform_0(%arg0: i32) -> (i32, i32) {
    %c0_i32 = arith.constant 0 : i32
    %c0_i32_0 = arith.constant 0 : i32
    return %arg0, %c0_i32 : i32, i32
  }
  func.func @transform_1(%arg0: i32) -> (i32, i32) {
    %c0_i32 = arith.constant 0 : i32
    %c0_i32_0 = arith.constant 0 : i32
    %c0_i32_1 = arith.constant 0 : i32
    return %c0_i32, %c0_i32_0 : i32, i32
  }
  func.func @transform_2(%arg0: i32) -> (i32, i32) {
    %c0_i32 = arith.constant 0 : i32
    %c0_i32_0 = arith.constant 0 : i32
    %c0_i32_1 = arith.constant 0 : i32
    return %c0_i32, %c0_i32_0 : i32, i32
  }
  func.func @transform_3(%arg0: i32) -> (i32, i32) {
    %c0_i32 = arith.constant 0 : i32
    %c0_i32_0 = arith.constant 0 : i32
    return %arg0, %c0_i32 : i32, i32
  }
  func.func @transform_4(%arg0: i32) -> (i32, i32) {
    %c0_i32 = arith.constant 0 : i32
    %c0_i32_0 = arith.constant 0 : i32
    return %arg0, %c0_i32 : i32, i32
  }
}

module attributes {stable_mosaic.version = 11 : i64} {
  func.func @kernel(%arg0: i32, %arg1: memref<16x64xbf16, #tpu.memory_space<vmem>>, %arg2: memref<64x8xbf16, #tpu.memory_space<vmem>>, %arg3: memref<1x8xf32, #tpu.memory_space<vmem>>, %arg4: memref<16x8xbf16, #tpu.memory_space<vmem>>, %arg5: memref<16x8xbf16, #tpu.memory_space<vmem>>) attributes {dimension_semantics = [#tpu.dimension_semantics<parallel>], iteration_bounds = array<i64: 1>, scalar_prefetch = 0 : i64, scratch_operands = 0 : i64, tpu.core_type = #tpu.core_type<tc>, window_params = [{transform_indices = @transform_0, window_bounds = array<i64: 16, 64>}, {pipeline_mode = #tpu.pipeline_mode<synchronous>, transform_indices = @transform_1, window_bounds = array<i64: 64, 8>}, {pipeline_mode = #tpu.pipeline_mode<synchronous>, transform_indices = @transform_2, window_bounds = array<i64: 1, 8>}, {transform_indices = @transform_3, window_bounds = array<i64: 16, 8>}, {transform_indices = @transform_4, window_bounds = array<i64: 16, 8>}]} {
    %c0 = arith.constant 0 : index
    %c0_0 = arith.constant 0 : index
    %0 = vector.load %arg1[%c0, %c0_0] : memref<16x64xbf16, #tpu.memory_space<vmem>>, vector<16x64xbf16>
    %c0_1 = arith.constant 0 : index
    %c0_2 = arith.constant 0 : index
    %1 = vector.load %arg2[%c0_1, %c0_2] : memref<64x8xbf16, #tpu.memory_space<vmem>>, vector<64x8xbf16>
    %cst = arith.constant dense<0.000000e+00> : vector<16x8xf32>
    %2 = tpu.matmul %0, %1, %cst {dimension_numbers = #tpu.dot_dimension_numbers<[1], [0], [0], [1], [0, 0, 1, 1], [], []>} : vector<16x64xbf16>, vector<64x8xbf16>, vector<16x8xf32> -> vector<16x8xf32>
    %c0_3 = arith.constant 0 : index
    %c0_4 = arith.constant 0 : index
    %3 = vector.load %arg3[%c0_3, %c0_4] : memref<1x8xf32, #tpu.memory_space<vmem>>, vector<1x8xf32>
    %4 = vector.broadcast %3 : vector<1x8xf32> to vector<16x8xf32>
    %5 = arith.addf %2, %4 : vector<16x8xf32>
    %6 = arith.negf %5 : vector<16x8xf32>
    %7 = math.exp %6 : vector<16x8xf32>
    %cst_5 = arith.constant 1.000000e+00 : f32
    %8 = vector.broadcast %cst_5 : f32 to vector<16x8xf32>
    %9 = arith.addf %8, %7 : vector<16x8xf32>
    %10 = arith.divf %8, %9 : vector<16x8xf32>
    %11 = arith.mulf %5, %10 : vector<16x8xf32>
    %c0_6 = arith.constant 0 : index
    %c0_7 = arith.constant 0 : index
    %12 = vector.load %arg4[%c0_6, %c0_7] : memref<16x8xbf16, #tpu.memory_space<vmem>>, vector<16x8xbf16>
    %13 = arith.extf %12 : vector<16x8xbf16> to vector<16x8xf32>
    %14 = arith.addf %11, %13 : vector<16x8xf32>
    %15 = arith.truncf %14 : vector<16x8xf32> to vector<16x8xbf16>
    %c0_8 = arith.constant 0 : index
    %c0_9 = arith.constant 0 : index
    %16 = vector.load %arg5[%c0_8, %c0_9] : memref<16x8xbf16, #tpu.memory_space<vmem>>, vector<16x8xbf16>
    tpu.vector_store %arg5[%c0_8, %c0_9], %15 {strides = array<i32>} : memref<16x8xbf16, #tpu.memory_space<vmem>>, vector<16x8xbf16>,
    return
  }
  func.func @transform_0(%arg0: i32) -> (i32, i32) {
    %c0_i32 = arith.constant 0 : i32
    %c0_i32_0 = arith.constant 0 : i32
    return %arg0, %c0_i32 : i32, i32
  }
  func.func @transform_1(%arg0: i32) -> (i32, i32) {
    %c0_i32 = arith.constant 0 : i32
    %c0_i32_0 = arith.constant 0 : i32
    %c0_i32_1 = arith.constant 0 : i32
    return %c0_i32, %c0_i32_0 : i32, i32
  }
  func.func @transform_2(%arg0: i32) -> (i32, i32) {
    %c0_i32 = arith.constant 0 : i32
    %c0_i32_0 = arith.constant 0 : i32
    %c0_i32_1 = arith.constant 0 : i32
    return %c0_i32, %c0_i32_0 : i32, i32
  }
  func.func @transform_3(%arg0: i32) -> (i32, i32) {
    %c0_i32 = arith.constant 0 : i32
    %c0_i32_0 = arith.constant 0 : i32
    return %arg0, %c0_i32 : i32, i32
  }
  func.func @transform_4(%arg0: i32) -> (i32, i32) {
    %c0_i32 = arith.constant 0 : i32
    %c0_i32_0 = arith.constant 0 : i32
    return %arg0, %c0_i32 : i32, i32
  }
}

module attributes {stable_mosaic.version = 11 : i64} {
  func.func @kernel(%arg0: i32, %arg1: memref<24x32xbf16, #tpu.memory_space<vmem>>, %arg2: memref<32x8xbf16, #tpu.memory_space<vmem>>, %arg3: memref<1x8xf32, #tpu.memory_space<vmem>>, %arg4: memref<24x8xbf16, #tpu.memory_space<vmem>>, %arg5: memref<24x8xbf16, #tpu.memory_space<vmem>>) attributes {dimension_semantics = [#tpu.dimension_semantics<parallel>], iteration_bounds = array<i64: 1>, scalar_prefetch = 0 : i64, scratch_operands = 0 : i64, tpu.core_type = #tpu.core_type<tc>, window_params = [{transform_indices = @transform_0, window_bounds = array<i64: 24, 32>}, {pipeline_mode = #tpu.pipeline_mode<synchronous>, transform_indices = @transform_1, window_bounds = array<i64: 32, 8>}, {pipeline_mode = #tpu.pipeline_mode<synchronous>, transform_indices = @transform_2, window_bounds = array<i64: 1, 8>}, {transform_indices = @transform_3, window_bounds = array<i64: 24, 8>}, {transform_indices = @transform_4, window_bounds = array<i64: 24, 8>}]} {
    %c0 = arith.constant 0 : index
    %c0_0 = arith.constant 0 : index
    %0 = vector.load %arg1[%c0, %c0_0] : memref<24x32xbf16, #tpu.memory_space<vmem>>, vector<24x32xbf16>
    %c0_1 = arith.constant 0 : index
    %c0_2 = arith.constant 0 : index
    %1 = vector.load %arg2[%c0_1, %c0_2] : memref<32x8xbf16, #tpu.memory_space<vmem>>, vector<32x8xbf16>
    %cst = arith.constant dense<0.000000e+00> : vector<24x8xf32>
    %2 = tpu.matmul %0, %1, %cst {dimension_numbers = #tpu.dot_dimension_numbers<[1], [0], [0], [1], [0, 0, 1, 1], [], []>} : vector<24x32xbf16>, vector<32x8xbf16>, vector<24x8xf32> -> vector<24x8xf32>
    %c0_3 = arith.constant 0 : index
    %c0_4 = arith.constant 0 : index
    %3 = vector.load %arg3[%c0_3, %c0_4] : memref<1x8xf32, #tpu.memory_space<vmem>>, vector<1x8xf32>
    %4 = vector.broadcast %3 : vector<1x8xf32> to vector<24x8xf32>
    %5 = arith.addf %2, %4 : vector<24x8xf32>
    %6 = arith.negf %5 : vector<24x8xf32>
    %7 = math.exp %6 : vector<24x8xf32>
    %cst_5 = arith.constant 1.000000e+00 : f32
    %8 = vector.broadcast %cst_5 : f32 to vector<24x8xf32>
    %9 = arith.addf %8, %7 : vector<24x8xf32>
    %10 = arith.divf %8, %9 : vector<24x8xf32>
    %11 = arith.mulf %5, %10 : vector<24x8xf32>
    %c0_6 = arith.constant 0 : index
    %c0_7 = arith.constant 0 : index
    %12 = vector.load %arg4[%c0_6, %c0_7] : memref<24x8xbf16, #tpu.memory_space<vmem>>, vector<24x8xbf16>
    %13 = arith.extf %12 : vector<24x8xbf16> to vector<24x8xf32>
    %14 = arith.addf %11, %13 : vector<24x8xf32>
    %15 = arith.truncf %14 : vector<24x8xf32> to vector<24x8xbf16>
    %c0_8 = arith.constant 0 : index
    %c0_9 = arith.constant 0 : index
    %16 = vector.load %arg5[%c0_8, %c0_9] : memref<24x8xbf16, #tpu.memory_space<vmem>>, vector<24x8xbf16>
    tpu.vector_store %arg5[%c0_8, %c0_9], %15 {strides = array<i32>} : memref<24x8xbf16, #tpu.memory_space<vmem>>, vector<24x8xbf16>,
    return
  }
  func.func @transform_0(%arg0: i32) -> (i32, i32) {
    %c0_i32 = arith.constant 0 : i32
    %c0_i32_0 = arith.constant 0 : i32
    return %arg0, %c0_i32 : i32, i32
  }
  func.func @transform_1(%arg0: i32) -> (i32, i32) {
    %c0_i32 = arith.constant 0 : i32
    %c0_i32_0 = arith.constant 0 : i32
    %c0_i32_1 = arith.constant 0 : i32
    return %c0_i32, %c0_i32_0 : i32, i32
  }
  func.func @transform_2(%arg0: i32) -> (i32, i32) {
    %c0_i32 = arith.constant 0 : i32
    %c0_i32_0 = arith.constant 0 : i32
    %c0_i32_1 = arith.constant 0 : i32
    return %c0_i32, %c0_i32_0 : i32, i32
  }
  func.func @transform_3(%arg0: i32) -> (i32, i32) {
    %c0_i32 = arith.constant 0 : i32
    %c0_i32_0 = arith.constant 0 : i32
    return %arg0, %c0_i32 : i32, i32
  }
  func.func @transform_4(%arg0: i32) -> (i32, i32) {
    %c0_i32 = arith.constant 0 : i32
    %c0_i32_0 = arith.constant 0 : i32
    return %arg0, %c0_i32 : i32, i32
  }
}

module attributes {stable_mosaic.version = 11 : i64} {
  func.func @kernel(%arg0: i32, %arg1: memref<16x32xbf16, #tpu.memory_space<vmem>>, %arg2: memref<32x8xbf16, #tpu.memory_space<vmem>>, %arg3: memref<1x8xf32, #tpu.memory_space<vmem>>, %arg4: memref<16x8xbf16, #tpu.memory_space<vmem>>, %arg5: memref<16x8xbf16, #tpu.memory_space<vmem>>) attributes {dimension_semantics = [#tpu.dimension_semantics<parallel>], iteration_bounds = array<i64: 1>, scalar_prefetch = 0 : i64, scratch_operands = 0 : i64, tpu.core_type = #tpu.core_type<tc>, window_params = [{transform_indices = @transform_0, window_bounds = array<i64: 16, 32>}, {pipeline_mode = #tpu.pipeline_mode<synchronous>, transform_indices = @transform_1, window_bounds = array<i64: 32, 8>}, {pipeline_mode = #tpu.pipeline_mode<synchronous>, transform_indices = @transform_2, window_bounds = array<i64: 1, 8>}, {transform_indices = @transform_3, window_bounds = array<i64: 16, 8>}, {transform_indices = @transform_4, window_bounds = array<i64: 16, 8>}]} {
    %c0 = arith.constant 0 : index
    %c0_0 = arith.constant 0 : index
    %0 = vector.load %arg1[%c0, %c0_0] : memref<16x32xbf16, #tpu.memory_space<vmem>>, vector<16x32xbf16>
    %c0_1 = arith.constant 0 : index
    %c0_2 = arith.constant 0 : index
    %1 = vector.load %arg2[%c0_1, %c0_2] : memref<32x8xbf16, #tpu.memory_space<vmem>>, vector<32x8xbf16>
    %cst = arith.constant dense<0.000000e+00> : vector<16x8xf32>
    %2 = tpu.matmul %0, %1, %cst {dimension_numbers = #tpu.dot_dimension_numbers<[1], [0], [0], [1], [0, 0, 1, 1], [], []>} : vector<16x32xbf16>, vector<32x8xbf16>, vector<16x8xf32> -> vector<16x8xf32>
    %c0_3 = arith.constant 0 : index
    %c0_4 = arith.constant 0 : index
    %3 = vector.load %arg3[%c0_3, %c0_4] : memref<1x8xf32, #tpu.memory_space<vmem>>, vector<1x8xf32>
    %4 = vector.broadcast %3 : vector<1x8xf32> to vector<16x8xf32>
    %5 = arith.addf %2, %4 : vector<16x8xf32>
    %6 = arith.negf %5 : vector<16x8xf32>
    %7 = math.exp %6 : vector<16x8xf32>
    %cst_5 = arith.constant 1.000000e+00 : f32
    %8 = vector.broadcast %cst_5 : f32 to vector<16x8xf32>
    %9 = arith.addf %8, %7 : vector<16x8xf32>
    %10 = arith.divf %8, %9 : vector<16x8xf32>
    %11 = arith.mulf %5, %10 : vector<16x8xf32>
    %c0_6 = arith.constant 0 : index
    %c0_7 = arith.constant 0 : index
    %12 = vector.load %arg4[%c0_6, %c0_7] : memref<16x8xbf16, #tpu.memory_space<vmem>>, vector<16x8xbf16>
    %13 = arith.extf %12 : vector<16x8xbf16> to vector<16x8xf32>
    %14 = arith.addf %11, %13 : vector<16x8xf32>
    %15 = arith.truncf %14 : vector<16x8xf32> to vector<16x8xbf16>
    %c0_8 = arith.constant 0 : index
    %c0_9 = arith.constant 0 : index
    %16 = vector.load %arg5[%c0_8, %c0_9] : memref<16x8xbf16, #tpu.memory_space<vmem>>, vector<16x8xbf16>
    tpu.vector_store %arg5[%c0_8, %c0_9], %15 {strides = array<i32>} : memref<16x8xbf16, #tpu.memory_space<vmem>>, vector<16x8xbf16>,
    return
  }
  func.func @transform_0(%arg0: i32) -> (i32, i32) {
    %c0_i32 = arith.constant 0 : i32
    %c0_i32_0 = arith.constant 0 : i32
    return %arg0, %c0_i32 : i32, i32
  }
  func.func @transform_1(%arg0: i32) -> (i32, i32) {
    %c0_i32 = arith.constant 0 : i32
    %c0_i32_0 = arith.constant 0 : i32
    %c0_i32_1 = arith.constant 0 : i32
    return %c0_i32, %c0_i32_0 : i32, i32
  }
  func.func @transform_2(%arg0: i32) -> (i32, i32) {
    %c0_i32 = arith.constant 0 : i32
    %c0_i32_0 = arith.constant 0 : i32
    %c0_i32_1 = arith.constant 0 : i32
    return %c0_i32, %c0_i32_0 : i32, i32
  }
  func.func @transform_3(%arg0: i32) -> (i32, i32) {
    %c0_i32 = arith.constant 0 : i32
    %c0_i32_0 = arith.constant 0 : i32
    return %arg0, %c0_i32 : i32, i32
  }
  func.func @transform_4(%arg0: i32) -> (i32, i32) {
    %c0_i32 = arith.constant 0 : i32
    %c0_i32_0 = arith.constant 0 : i32
    return %arg0, %c0_i32 : i32, i32
  }
}

module attributes {stable_mosaic.version = 11 : i64} {
  func.func @kernel(%arg0: i32, %arg1: memref<24x16xbf16, #tpu.memory_space<vmem>>, %arg2: memref<16x8xbf16, #tpu.memory_space<vmem>>, %arg3: memref<1x8xf32, #tpu.memory_space<vmem>>, %arg4: memref<24x8xbf16, #tpu.memory_space<vmem>>, %arg5: memref<24x8xbf16, #tpu.memory_space<vmem>>) attributes {dimension_semantics = [#tpu.dimension_semantics<parallel>], iteration_bounds = array<i64: 1>, scalar_prefetch = 0 : i64, scratch_operands = 0 : i64, tpu.core_type = #tpu.core_type<tc>, window_params = [{transform_indices = @transform_0, window_bounds = array<i64: 24, 16>}, {pipeline_mode = #tpu.pipeline_mode<synchronous>, transform_indices = @transform_1, window_bounds = array<i64: 16, 8>}, {pipeline_mode = #tpu.pipeline_mode<synchronous>, transform_indices = @transform_2, window_bounds = array<i64: 1, 8>}, {transform_indices = @transform_3, window_bounds = array<i64: 24, 8>}, {transform_indices = @transform_4, window_bounds = array<i64: 24, 8>}]} {
    %c0 = arith.constant 0 : index
    %c0_0 = arith.constant 0 : index
    %0 = vector.load %arg1[%c0, %c0_0] : memref<24x16xbf16, #tpu.memory_space<vmem>>, vector<24x16xbf16>
    %c0_1 = arith.constant 0 : index
    %c0_2 = arith.constant 0 : index
    %1 = vector.load %arg2[%c0_1, %c0_2] : memref<16x8xbf16, #tpu.memory_space<vmem>>, vector<16x8xbf16>
    %cst = arith.constant dense<0.000000e+00> : vector<24x8xf32>
    %2 = tpu.matmul %0, %1, %cst {dimension_numbers = #tpu.dot_dimension_numbers<[1], [0], [0], [1], [0, 0, 1, 1], [], []>} : vector<24x16xbf16>, vector<16x8xbf16>, vector<24x8xf32> -> vector<24x8xf32>
    %c0_3 = arith.constant 0 : index
    %c0_4 = arith.constant 0 : index
    %3 = vector.load %arg3[%c0_3, %c0_4] : memref<1x8xf32, #tpu.memory_space<vmem>>, vector<1x8xf32>
    %4 = vector.broadcast %3 : vector<1x8xf32> to vector<24x8xf32>
    %5 = arith.addf %2, %4 : vector<24x8xf32>
    %6 = arith.negf %5 : vector<24x8xf32>
    %7 = math.exp %6 : vector<24x8xf32>
    %cst_5 = arith.constant 1.000000e+00 : f32
    %8 = vector.broadcast %cst_5 : f32 to vector<24x8xf32>
    %9 = arith.addf %8, %7 : vector<24x8xf32>
    %10 = arith.divf %8, %9 : vector<24x8xf32>
    %11 = arith.mulf %5, %10 : vector<24x8xf32>
    %c0_6 = arith.constant 0 : index
    %c0_7 = arith.constant 0 : index
    %12 = vector.load %arg4[%c0_6, %c0_7] : memref<24x8xbf16, #tpu.memory_space<vmem>>, vector<24x8xbf16>
    %13 = arith.extf %12 : vector<24x8xbf16> to vector<24x8xf32>
    %14 = arith.addf %11, %13 : vector<24x8xf32>
    %15 = arith.truncf %14 : vector<24x8xf32> to vector<24x8xbf16>
    %c0_8 = arith.constant 0 : index
    %c0_9 = arith.constant 0 : index
    %16 = vector.load %arg5[%c0_8, %c0_9] : memref<24x8xbf16, #tpu.memory_space<vmem>>, vector<24x8xbf16>
    tpu.vector_store %arg5[%c0_8, %c0_9], %15 {strides = array<i32>} : memref<24x8xbf16, #tpu.memory_space<vmem>>, vector<24x8xbf16>,
    return
  }
  func.func @transform_0(%arg0: i32) -> (i32, i32) {
    %c0_i32 = arith.constant 0 : i32
    %c0_i32_0 = arith.constant 0 : i32
    return %arg0, %c0_i32 : i32, i32
  }
  func.func @transform_1(%arg0: i32) -> (i32, i32) {
    %c0_i32 = arith.constant 0 : i32
    %c0_i32_0 = arith.constant 0 : i32
    %c0_i32_1 = arith.constant 0 : i32
    return %c0_i32, %c0_i32_0 : i32, i32
  }
  func.func @transform_2(%arg0: i32) -> (i32, i32) {
    %c0_i32 = arith.constant 0 : i32
    %c0_i32_0 = arith.constant 0 : i32
    %c0_i32_1 = arith.constant 0 : i32
    return %c0_i32, %c0_i32_0 : i32, i32
  }
  func.func @transform_3(%arg0: i32) -> (i32, i32) {
    %c0_i32 = arith.constant 0 : i32
    %c0_i32_0 = arith.constant 0 : i32
    return %arg0, %c0_i32 : i32, i32
  }
  func.func @transform_4(%arg0: i32) -> (i32, i32) {
    %c0_i32 = arith.constant 0 : i32
    %c0_i32_0 = arith.constant 0 : i32
    return %arg0, %c0_i32 : i32, i32
  }
}

module attributes {stable_mosaic.version = 11 : i64} {
  func.func @kernel(%arg0: i32, %arg1: memref<80x32xbf16, #tpu.memory_space<vmem>>, %arg2: memref<32x1xbf16, #tpu.memory_space<vmem>>, %arg3: memref<1x1xf32, #tpu.memory_space<vmem>>, %arg4: memref<80x1xf32, #tpu.memory_space<vmem>>) attributes {dimension_semantics = [#tpu.dimension_semantics<parallel>], iteration_bounds = array<i64: 1>, scalar_prefetch = 0 : i64, scratch_operands = 0 : i64, tpu.core_type = #tpu.core_type<tc>, window_params = [{transform_indices = @transform_0, window_bounds = array<i64: 80, 32>}, {pipeline_mode = #tpu.pipeline_mode<synchronous>, transform_indices = @transform_1, window_bounds = array<i64: 32, 1>}, {pipeline_mode = #tpu.pipeline_mode<synchronous>, transform_indices = @transform_2, window_bounds = array<i64: 1, 1>}, {transform_indices = @transform_3, window_bounds = array<i64: 80, 1>}]} {
    %c0 = arith.constant 0 : index
    %c0_0 = arith.constant 0 : index
    %0 = vector.load %arg1[%c0, %c0_0] : memref<80x32xbf16, #tpu.memory_space<vmem>>, vector<80x32xbf16>
    %c0_1 = arith.constant 0 : index
    %c0_2 = arith.constant 0 : index
    %1 = vector.load %arg2[%c0_1, %c0_2] : memref<32x1xbf16, #tpu.memory_space<vmem>>, vector<32x1xbf16>
    %cst = arith.constant dense<0.000000e+00> : vector<80x1xf32>
    %2 = tpu.matmul %0, %1, %cst {dimension_numbers = #tpu.dot_dimension_numbers<[1], [0], [0], [1], [0, 0, 1, 1], [], []>} : vector<80x32xbf16>, vector<32x1xbf16>, vector<80x1xf32> -> vector<80x1xf32>
    %c0_3 = arith.constant 0 : index
    %c0_4 = arith.constant 0 : index
    %3 = vector.load %arg3[%c0_3, %c0_4] : memref<1x1xf32, #tpu.memory_space<vmem>>, vector<1x1xf32>
    %4 = vector.broadcast %3 : vector<1x1xf32> to vector<80x1xf32>
    %5 = arith.addf %2, %4 : vector<80x1xf32>
    %6 = arith.negf %5 : vector<80x1xf32>
    %7 = math.exp %6 : vector<80x1xf32>
    %cst_5 = arith.constant 1.000000e+00 : f32
    %8 = vector.broadcast %cst_5 : f32 to vector<80x1xf32>
    %9 = arith.addf %8, %7 : vector<80x1xf32>
    %10 = arith.divf %8, %9 : vector<80x1xf32>
    %c0_6 = arith.constant 0 : index
    %c0_7 = arith.constant 0 : index
    %11 = vector.load %arg4[%c0_6, %c0_7] : memref<80x1xf32, #tpu.memory_space<vmem>>, vector<80x1xf32>
    tpu.vector_store %arg4[%c0_6, %c0_7], %10 {strides = array<i32>} : memref<80x1xf32, #tpu.memory_space<vmem>>, vector<80x1xf32>,
    return
  }
  func.func @transform_0(%arg0: i32) -> (i32, i32) {
    %c0_i32 = arith.constant 0 : i32
    %c0_i32_0 = arith.constant 0 : i32
    return %arg0, %c0_i32 : i32, i32
  }
  func.func @transform_1(%arg0: i32) -> (i32, i32) {
    %c0_i32 = arith.constant 0 : i32
    %c0_i32_0 = arith.constant 0 : i32
    %c0_i32_1 = arith.constant 0 : i32
    return %c0_i32, %c0_i32_0 : i32, i32
  }
  func.func @transform_2(%arg0: i32) -> (i32, i32) {
    %c0_i32 = arith.constant 0 : i32
    %c0_i32_0 = arith.constant 0 : i32
    %c0_i32_1 = arith.constant 0 : i32
    return %c0_i32, %c0_i32_0 : i32, i32
  }
  func.func @transform_3(%arg0: i32) -> (i32, i32) {
    %c0_i32 = arith.constant 0 : i32
    %c0_i32_0 = arith.constant 0 : i32
    return %arg0, %c0_i32 : i32, i32
  }
}

module attributes {stable_mosaic.version = 11 : i64} {
  func.func @kernel(%arg0: i32, %arg1: memref<80x16xbf16, #tpu.memory_space<vmem>>, %arg2: memref<16x1xbf16, #tpu.memory_space<vmem>>, %arg3: memref<1x1xf32, #tpu.memory_space<vmem>>, %arg4: memref<80x1xf32, #tpu.memory_space<vmem>>) attributes {dimension_semantics = [#tpu.dimension_semantics<parallel>], iteration_bounds = array<i64: 1>, scalar_prefetch = 0 : i64, scratch_operands = 0 : i64, tpu.core_type = #tpu.core_type<tc>, window_params = [{transform_indices = @transform_0, window_bounds = array<i64: 80, 16>}, {pipeline_mode = #tpu.pipeline_mode<synchronous>, transform_indices = @transform_1, window_bounds = array<i64: 16, 1>}, {pipeline_mode = #tpu.pipeline_mode<synchronous>, transform_indices = @transform_2, window_bounds = array<i64: 1, 1>}, {transform_indices = @transform_3, window_bounds = array<i64: 80, 1>}]} {
    %c0 = arith.constant 0 : index
    %c0_0 = arith.constant 0 : index
    %0 = vector.load %arg1[%c0, %c0_0] : memref<80x16xbf16, #tpu.memory_space<vmem>>, vector<80x16xbf16>
    %c0_1 = arith.constant 0 : index
    %c0_2 = arith.constant 0 : index
    %1 = vector.load %arg2[%c0_1, %c0_2] : memref<16x1xbf16, #tpu.memory_space<vmem>>, vector<16x1xbf16>
    %cst = arith.constant dense<0.000000e+00> : vector<80x1xf32>
    %2 = tpu.matmul %0, %1, %cst {dimension_numbers = #tpu.dot_dimension_numbers<[1], [0], [0], [1], [0, 0, 1, 1], [], []>} : vector<80x16xbf16>, vector<16x1xbf16>, vector<80x1xf32> -> vector<80x1xf32>
    %c0_3 = arith.constant 0 : index
    %c0_4 = arith.constant 0 : index
    %3 = vector.load %arg3[%c0_3, %c0_4] : memref<1x1xf32, #tpu.memory_space<vmem>>, vector<1x1xf32>
    %4 = vector.broadcast %3 : vector<1x1xf32> to vector<80x1xf32>
    %5 = arith.addf %2, %4 : vector<80x1xf32>
    %6 = arith.negf %5 : vector<80x1xf32>
    %7 = math.exp %6 : vector<80x1xf32>
    %cst_5 = arith.constant 1.000000e+00 : f32
    %8 = vector.broadcast %cst_5 : f32 to vector<80x1xf32>
    %9 = arith.addf %8, %7 : vector<80x1xf32>
    %10 = arith.divf %8, %9 : vector<80x1xf32>
    %c0_6 = arith.constant 0 : index
    %c0_7 = arith.constant 0 : index
    %11 = vector.load %arg4[%c0_6, %c0_7] : memref<80x1xf32, #tpu.memory_space<vmem>>, vector<80x1xf32>
    tpu.vector_store %arg4[%c0_6, %c0_7], %10 {strides = array<i32>} : memref<80x1xf32, #tpu.memory_space<vmem>>, vector<80x1xf32>,
    return
  }
  func.func @transform_0(%arg0: i32) -> (i32, i32) {
    %c0_i32 = arith.constant 0 : i32
    %c0_i32_0 = arith.constant 0 : i32
    return %arg0, %c0_i32 : i32, i32
  }
  func.func @transform_1(%arg0: i32) -> (i32, i32) {
    %c0_i32 = arith.constant 0 : i32
    %c0_i32_0 = arith.constant 0 : i32
    %c0_i32_1 = arith.constant 0 : i32
    return %c0_i32, %c0_i32_0 : i32, i32
  }
  func.func @transform_2(%arg0: i32) -> (i32, i32) {
    %c0_i32 = arith.constant 0 : i32
    %c0_i32_0 = arith.constant 0 : i32
    %c0_i32_1 = arith.constant 0 : i32
    return %c0_i32, %c0_i32_0 : i32, i32
  }
  func.func @transform_3(%arg0: i32) -> (i32, i32) {
    %c0_i32 = arith.constant 0 : i32
    %c0_i32_0 = arith.constant 0 : i32
    return %arg0, %c0_i32 : i32, i32
  }
}

module attributes {stable_mosaic.version = 11 : i64} {
  func.func @kernel(%arg0: i32, %arg1: memref<80x8xbf16, #tpu.memory_space<vmem>>, %arg2: memref<8x1xbf16, #tpu.memory_space<vmem>>, %arg3: memref<1x1xf32, #tpu.memory_space<vmem>>, %arg4: memref<80x1xf32, #tpu.memory_space<vmem>>) attributes {dimension_semantics = [#tpu.dimension_semantics<parallel>], iteration_bounds = array<i64: 1>, scalar_prefetch = 0 : i64, scratch_operands = 0 : i64, tpu.core_type = #tpu.core_type<tc>, window_params = [{transform_indices = @transform_0, window_bounds = array<i64: 80, 8>}, {pipeline_mode = #tpu.pipeline_mode<synchronous>, transform_indices = @transform_1, window_bounds = array<i64: 8, 1>}, {pipeline_mode = #tpu.pipeline_mode<synchronous>, transform_indices = @transform_2, window_bounds = array<i64: 1, 1>}, {transform_indices = @transform_3, window_bounds = array<i64: 80, 1>}]} {
    %c0 = arith.constant 0 : index
    %c0_0 = arith.constant 0 : index
    %0 = vector.load %arg1[%c0, %c0_0] : memref<80x8xbf16, #tpu.memory_space<vmem>>, vector<80x8xbf16>
    %c0_1 = arith.constant 0 : index
    %c0_2 = arith.constant 0 : index
    %1 = vector.load %arg2[%c0_1, %c0_2] : memref<8x1xbf16, #tpu.memory_space<vmem>>, vector<8x1xbf16>
    %cst = arith.constant dense<0.000000e+00> : vector<80x1xf32>
    %2 = tpu.matmul %0, %1, %cst {dimension_numbers = #tpu.dot_dimension_numbers<[1], [0], [0], [1], [0, 0, 1, 1], [], []>} : vector<80x8xbf16>, vector<8x1xbf16>, vector<80x1xf32> -> vector<80x1xf32>
    %c0_3 = arith.constant 0 : index
    %c0_4 = arith.constant 0 : index
    %3 = vector.load %arg3[%c0_3, %c0_4] : memref<1x1xf32, #tpu.memory_space<vmem>>, vector<1x1xf32>
    %4 = vector.broadcast %3 : vector<1x1xf32> to vector<80x1xf32>
    %5 = arith.addf %2, %4 : vector<80x1xf32>
    %6 = arith.negf %5 : vector<80x1xf32>
    %7 = math.exp %6 : vector<80x1xf32>
    %cst_5 = arith.constant 1.000000e+00 : f32
    %8 = vector.broadcast %cst_5 : f32 to vector<80x1xf32>
    %9 = arith.addf %8, %7 : vector<80x1xf32>
    %10 = arith.divf %8, %9 : vector<80x1xf32>
    %c0_6 = arith.constant 0 : index
    %c0_7 = arith.constant 0 : index
    %11 = vector.load %arg4[%c0_6, %c0_7] : memref<80x1xf32, #tpu.memory_space<vmem>>, vector<80x1xf32>
    tpu.vector_store %arg4[%c0_6, %c0_7], %10 {strides = array<i32>} : memref<80x1xf32, #tpu.memory_space<vmem>>, vector<80x1xf32>,
    return
  }
  func.func @transform_0(%arg0: i32) -> (i32, i32) {
    %c0_i32 = arith.constant 0 : i32
    %c0_i32_0 = arith.constant 0 : i32
    return %arg0, %c0_i32 : i32, i32
  }
  func.func @transform_1(%arg0: i32) -> (i32, i32) {
    %c0_i32 = arith.constant 0 : i32
    %c0_i32_0 = arith.constant 0 : i32
    %c0_i32_1 = arith.constant 0 : i32
    return %c0_i32, %c0_i32_0 : i32, i32
  }
  func.func @transform_2(%arg0: i32) -> (i32, i32) {
    %c0_i32 = arith.constant 0 : i32
    %c0_i32_0 = arith.constant 0 : i32
    %c0_i32_1 = arith.constant 0 : i32
    return %c0_i32, %c0_i32_0 : i32, i32
  }
  func.func @transform_3(%arg0: i32) -> (i32, i32) {
    %c0_i32 = arith.constant 0 : i32
    %c0_i32_0 = arith.constant 0 : i32
    return %arg0, %c0_i32 : i32, i32
  }
}

</mosaic_0001>

<llo_original>
// kernel: cvae_forward.16
$region0: #{cvae_forward.16}
  #allocation0 [shape = 'u32[]', space=smem, size = 0x4, offset = 0x4, fixed_abs, tag = 'smem constant byte address 0x4 - core index']
  #allocation1 [shape = 'u32[72,128]{1,0:T(1,128)}', space=vmem, size = 0x9000, scoped, tag = 'internal scratch']
  %s0 = inlined_call_operand.vmem [shape: bf16[80,36], index: 0, kind: input, shape index: {}]
  %s1 = inlined_call_operand.vmem [shape: bf16[36,8], index: 1, kind: input, shape index: {}]
  %s2 = inlined_call_operand.vmem [shape: f32[1,8], index: 2, kind: input, shape index: {}]
  %s3 = inlined_call_operand.vmem [shape: bf16[80,8], index: 3, kind: output, shape index: {}]
  %s4 = sld [smem:[#allocation0]]
  $region22: #{cvae_forward.16} parent=0
    _
  %s6 = ssub.s32 1, %s4
  %s7 = scalar_select 0, %s6, %s4
  // Predicated region
  $region2: #{cvae_forward.16} parent=0 // pred_check
    _
  $region3: #{cvae_forward.16} parent=0 // pred_check_branch
    %9 = sbr.rel (0) target = $region5
  $region4: #{cvae_forward.16} parent=0 // pred_region
    _
  $region5: #{cvae_forward.16} parent=0 // pred_fallthru
    _
  // Predicated region
  $region6: #{cvae_forward.16} parent=0 // pred_check
    _
  $region7: #{cvae_forward.16} parent=0 // pred_check_branch
    %11 = sbr.rel (0) target = $region9
  $region8: #{cvae_forward.16} parent=0 // pred_region
    _
  $region9: #{cvae_forward.16} parent=0 // pred_fallthru
    _
  // Predicated region
  $region10: #{cvae_forward.16} parent=0 // pred_check
    _
  $region11: #{cvae_forward.16} parent=0 // pred_check_branch
    %13 = sbr.rel (0) target = $region13
  $region12: #{cvae_forward.16} parent=0 // pred_region
    _
  $region13: #{cvae_forward.16} parent=0 // pred_fallthru
    _
  %v15 = vld [vmem:[%s0] sm:$0xf]
  %v16 = vld [vmem:[%s0 + $0x4] sm:$0xf]
  %v17 = vld [vmem:[%s0 + $0x8] sm:$0xf]
  %v18 = vld [vmem:[%s0 + $0xc] sm:$0xf]
  %v19 = vld [vmem:[%s0 + $0x10] sm:$0xf]
  %v20 = vld [vmem:[%s0 + $0x14] sm:$0xf]
  %v21 = vld [vmem:[%s0 + $0x18] sm:$0xf]
  %v22 = vld [vmem:[%s0 + $0x1c] sm:$0xf]
  %v23 = vld [vmem:[%s0 + $0x20] sm:$0xf]
  %v24 = vld [vmem:[%s0 + $0x24] sm:$0xf]
  %v25 = vld [vmem:[%s1] sm:$0xf]
  %v26 = vld [vmem:[%s1 + $0x4] sm:$0xf]
  %v27 = vld [vmem:[%s1 + $0x8] sm:$0xf]
  %v28 = vld [vmem:[%s1 + $0xc] sm:$0xf]
  %v29 = vld [vmem:[%s1 + $0x10] sm:$0x3]
  %v30 = vld [vmem:[%s2] sm:$0x1]
  %v32 = vperm.slane %v30, 0
  %v44 = vunpack.c.l.b16 %v15
  %v45 = vunpack.c.l.b16 %v16
  %v46 = vunpack.c.l.b16 %v17
  %v47 = vunpack.c.l.b16 %v18
  %v48 = vunpack.c.l.b16 %v19
  %v49 = vunpack.c.l.b16 %v20
  %v50 = vunpack.c.l.b16 %v21
  %v51 = vunpack.c.l.b16 %v22
  %v52 = vunpack.c.l.b16 %v23
  %v53 = vunpack.c.l.b16 %v24
  %v54 = vpack.c.b16 %v45, %v44
  %v55 = vpack.c.b16 %v47, %v46
  %v56 = vpack.c.b16 %v49, %v48
  %v57 = vpack.c.b16 %v51, %v50
  %v58 = vpack.c.b16 %v53, %v52
  %v64 = vunpack.c.l.b16 %v25
  %v65 = vunpack.c.l.b16 %v26
  %v66 = vunpack.c.l.b16 %v27
  %v67 = vunpack.c.l.b16 %v28
  %v68 = vunpack.c.l.b16 %v29
  %v69 = vpack.c.b16 %v65, %v64
  %v70 = vpack.c.b16 %v67, %v66
  %v71 = vpack.c.b16 %v68, %v68
  %vm74 = vcmask 293888
  %v76 = vsel %vm74, %v54, 0
  %v79 = vsel %vm74, %v55, 0
  %v82 = vsel %vm74, %v56, 0
  %v85 = vsel %vm74, %v57, 0
  %v88 = vsel %vm74, %v58, 0
  %vm90 = vcmask 1041408
  %v92 = vsel %vm90, %v71, 0
  %94 = vmatpush.bf16.msra.mxu0 0
  %95 = vmatpush.bf16.msra.mxu0 0
  %96 = vmatpush.bf16.msra.mxu0 0
  %97 = vmatpush.bf16.msra.mxu0 0
  %98 = vmatpush.bf16.msra.mxu0 0
  %99 = vmatpush.bf16.msra.mxu0 %v92
  %100 = vmatpush.bf16.msra.mxu0 %v70
  %101 = vmatpush.bf16.msra.mxu0 %v69
  %102 = vmatmul.bf16.gmra.mxu0 %v76
  %v103 = vpop.f32.mrf.mxu0
  %v104 = vadd.f32 %v32, %v103
  %v105 = vpop.f32.mrf.mxu0
  %v106 = vadd.f32 %v32, %v105
  %107 = vmatmul.bf16.gmra.mxu0 %v79
  %v108 = vpop.f32.mrf.mxu0
  %v109 = vadd.f32 %v32, %v108
  %v110 = vpop.f32.mrf.mxu0
  %v111 = vadd.f32 %v32, %v110
  %112 = vmatmul.bf16.gmra.mxu0 %v82
  %v113 = vpop.f32.mrf.mxu0
  %v114 = vadd.f32 %v32, %v113
  %v115 = vpop.f32.mrf.mxu0
  %v116 = vadd.f32 %v32, %v115
  %117 = vmatmul.bf16.gmra.mxu0 %v85
  %v118 = vpop.f32.mrf.mxu0
  %v119 = vadd.f32 %v32, %v118
  %v120 = vpop.f32.mrf.mxu0
  %v121 = vadd.f32 %v32, %v120
  %122 = vmatmul.bf16.gmra.mxu0 %v88
  %v123 = vpop.f32.mrf.mxu0
  %v124 = vadd.f32 %v32, %v123
  %v125 = vpop.f32.mrf.mxu0
  %v126 = vadd.f32 %v32, %v125
  %127 = vdwg.mxu0
  %v128 = vxor.u32 %v104, 2147483648
  %v129 = vxor.u32 %v106, 2147483648
  %v130 = vxor.u32 %v109, 2147483648
  %v131 = vxor.u32 %v111, 2147483648
  %v132 = vxor.u32 %v114, 2147483648
  %v133 = vxor.u32 %v116, 2147483648
  %v134 = vxor.u32 %v119, 2147483648
  %v135 = vxor.u32 %v121, 2147483648
  %v136 = vxor.u32 %v124, 2147483648
  %v137 = vxor.u32 %v126, 2147483648
  %v138 = vmul.f32 %v128, 1.442695
  %v139 = vpow.pop %v138
  %v140 = vmul.f32 %v129, 1.442695
  %v141 = vpow.pop %v140
  %v142 = vmul.f32 %v130, 1.442695
  %v143 = vpow.pop %v142
  %v144 = vmul.f32 %v131, 1.442695
  %v145 = vpow.pop %v144
  %v146 = vmul.f32 %v132, 1.442695
  %v147 = vpow.pop %v146
  %v148 = vmul.f32 %v133, 1.442695
  %v149 = vpow.pop %v148
  %v150 = vmul.f32 %v134, 1.442695
  %v151 = vpow.pop %v150
  %v152 = vmul.f32 %v135, 1.442695
  %v153 = vpow.pop %v152
  %v154 = vmul.f32 %v136, 1.442695
  %v155 = vpow.pop %v154
  %v156 = vmul.f32 %v137, 1.442695
  %v157 = vpow.pop %v156
  %v158 = vadd.f32 %v139, 1.0
  %v159 = vadd.f32 %v141, 1.0
  %v160 = vadd.f32 %v143, 1.0
  %v161 = vadd.f32 %v145, 1.0
  %v162 = vadd.f32 %v147, 1.0
  %v163 = vadd.f32 %v149, 1.0
  %v164 = vadd.f32 %v151, 1.0
  %v165 = vadd.f32 %v153, 1.0
  %v166 = vadd.f32 %v155, 1.0
  %v167 = vadd.f32 %v157, 1.0
  %v168 = vrcp.pop %v158
  %v169 = vmul.f32 %v158, %v168
  %v170 = vsub.f32 1.0, %v169
  %v171 = vmul.f32 %v168, %v170
  %v172 = vadd.f32 %v168, %v171
  %vm173 = vweird.f32 %v158
  %vm174 = vweird.f32 %v168
  %vm175 = vmor %vm173, %vm174
  %v176 = vsel %vm175, %v168, %v172
  %v177 = vand.u32 2147483647, %v158
  %vm178 = vcmp.eq.f32.partialorder %v177, 8.507059e+37
  %v179 = vand.u32 %v158, 2147483648
  %v180 = vor.u32 1.1754944e-38, %v179
  %v181 = vsel %vm178, %v180, %v176
  %v182 = vmul.f32 1.0, %v181
  %v183 = vrcp.pop %v159
  %v184 = vmul.f32 %v159, %v183
  %v185 = vsub.f32 1.0, %v184
  %v186 = vmul.f32 %v183, %v185
  %v187 = vadd.f32 %v183, %v186
  %vm188 = vweird.f32 %v159
  %vm189 = vweird.f32 %v183
  %vm190 = vmor %vm188, %vm189
  %v191 = vsel %vm190, %v183, %v187
  %v192 = vand.u32 2147483647, %v159
  %vm193 = vcmp.eq.f32.partialorder %v192, 8.507059e+37
  %v194 = vand.u32 %v159, 2147483648
  %v195 = vor.u32 1.1754944e-38, %v194
  %v196 = vsel %vm193, %v195, %v191
  %v197 = vmul.f32 1.0, %v196
  %v198 = vrcp.pop %v160
  %v199 = vmul.f32 %v160, %v198
  %v200 = vsub.f32 1.0, %v199
  %v201 = vmul.f32 %v198, %v200
  %v202 = vadd.f32 %v198, %v201
  %vm203 = vweird.f32 %v160
  %vm204 = vweird.f32 %v198
  %vm205 = vmor %vm203, %vm204
  %v206 = vsel %vm205, %v198, %v202
  %v207 = vand.u32 2147483647, %v160
  %vm208 = vcmp.eq.f32.partialorder %v207, 8.507059e+37
  %v209 = vand.u32 %v160, 2147483648
  %v210 = vor.u32 1.1754944e-38, %v209
  %v211 = vsel %vm208, %v210, %v206
  %v212 = vmul.f32 1.0, %v211
  %v213 = vrcp.pop %v161
  %v214 = vmul.f32 %v161, %v213
  %v215 = vsub.f32 1.0, %v214
  %v216 = vmul.f32 %v213, %v215
  %v217 = vadd.f32 %v213, %v216
  %vm218 = vweird.f32 %v161
  %vm219 = vweird.f32 %v213
  %vm220 = vmor %vm218, %vm219
  %v221 = vsel %vm220, %v213, %v217
  %v222 = vand.u32 2147483647, %v161
  %vm223 = vcmp.eq.f32.partialorder %v222, 8.507059e+37
  %v224 = vand.u32 %v161, 2147483648
  %v225 = vor.u32 1.1754944e-38, %v224
  %v226 = vsel %vm223, %v225, %v221
  %v227 = vmul.f32 1.0, %v226
  %v228 = vrcp.pop %v162
  %v229 = vmul.f32 %v162, %v228
  %v230 = vsub.f32 1.0, %v229
  %v231 = vmul.f32 %v228, %v230
  %v232 = vadd.f32 %v228, %v231
  %vm233 = vweird.f32 %v162
  %vm234 = vweird.f32 %v228
  %vm235 = vmor %vm233, %vm234
  %v236 = vsel %vm235, %v228, %v232
  %v237 = vand.u32 2147483647, %v162
  %vm238 = vcmp.eq.f32.partialorder %v237, 8.507059e+37
  %v239 = vand.u32 %v162, 2147483648
  %v240 = vor.u32 1.1754944e-38, %v239
  %v241 = vsel %vm238, %v240, %v236
  %v242 = vmul.f32 1.0, %v241
  %v243 = vrcp.pop %v163
  %v244 = vmul.f32 %v163, %v243
  %v245 = vsub.f32 1.0, %v244
  %v246 = vmul.f32 %v243, %v245
  %v247 = vadd.f32 %v243, %v246
  %vm248 = vweird.f32 %v163
  %vm249 = vweird.f32 %v243
  %vm250 = vmor %vm248, %vm249
  %v251 = vsel %vm250, %v243, %v247
  %v252 = vand.u32 2147483647, %v163
  %vm253 = vcmp.eq.f32.partialorder %v252, 8.507059e+37
  %v254 = vand.u32 %v163, 2147483648
  %v255 = vor.u32 1.1754944e-38, %v254
  %v256 = vsel %vm253, %v255, %v251
  %v257 = vmul.f32 1.0, %v256
  %v258 = vrcp.pop %v164
  %v259 = vmul.f32 %v164, %v258
  %v260 = vsub.f32 1.0, %v259
  %v261 = vmul.f32 %v258, %v260
  %v262 = vadd.f32 %v258, %v261
  %vm263 = vweird.f32 %v164
  %vm264 = vweird.f32 %v258
  %vm265 = vmor %vm263, %vm264
  %v266 = vsel %vm265, %v258, %v262
  %v267 = vand.u32 2147483647, %v164
  %vm268 = vcmp.eq.f32.partialorder %v267, 8.507059e+37
  %v269 = vand.u32 %v164, 2147483648
  %v270 = vor.u32 1.1754944e-38, %v269
  %v271 = vsel %vm268, %v270, %v266
  %v272 = vmul.f32 1.0, %v271
  %v273 = vrcp.pop %v165
  %v274 = vmul.f32 %v165, %v273
  %v275 = vsub.f32 1.0, %v274
  %v276 = vmul.f32 %v273, %v275
  %v277 = vadd.f32 %v273, %v276
  %vm278 = vweird.f32 %v165
  %vm279 = vweird.f32 %v273
  %vm280 = vmor %vm278, %vm279
  %v281 = vsel %vm280, %v273, %v277
  %v282 = vand.u32 2147483647, %v165
  %vm283 = vcmp.eq.f32.partialorder %v282, 8.507059e+37
  %v284 = vand.u32 %v165, 2147483648
  %v285 = vor.u32 1.1754944e-38, %v284
  %v286 = vsel %vm283, %v285, %v281
  %v287 = vmul.f32 1.0, %v286
  %v288 = vrcp.pop %v166
  %v289 = vmul.f32 %v166, %v288
  %v290 = vsub.f32 1.0, %v289
  %v291 = vmul.f32 %v288, %v290
  %v292 = vadd.f32 %v288, %v291
  %vm293 = vweird.f32 %v166
  %vm294 = vweird.f32 %v288
  %vm295 = vmor %vm293, %vm294
  %v296 = vsel %vm295, %v288, %v292
  %v297 = vand.u32 2147483647, %v166
  %vm298 = vcmp.eq.f32.partialorder %v297, 8.507059e+37
  %v299 = vand.u32 %v166, 2147483648
  %v300 = vor.u32 1.1754944e-38, %v299
  %v301 = vsel %vm298, %v300, %v296
  %v302 = vmul.f32 1.0, %v301
  %v303 = vrcp.pop %v167
  %v304 = vmul.f32 %v167, %v303
  %v305 = vsub.f32 1.0, %v304
  %v306 = vmul.f32 %v303, %v305
  %v307 = vadd.f32 %v303, %v306
  %vm308 = vweird.f32 %v167
  %vm309 = vweird.f32 %v303
  %vm310 = vmor %vm308, %vm309
  %v311 = vsel %vm310, %v303, %v307
  %v312 = vand.u32 2147483647, %v167
  %vm313 = vcmp.eq.f32.partialorder %v312, 8.507059e+37
  %v314 = vand.u32 %v167, 2147483648
  %v315 = vor.u32 1.1754944e-38, %v314
  %v316 = vsel %vm313, %v315, %v311
  %v317 = vmul.f32 1.0, %v316
  %v318 = vmul.f32 %v104, %v182
  %v319 = vmul.f32 %v106, %v197
  %v320 = vmul.f32 %v109, %v212
  %v321 = vmul.f32 %v111, %v227
  %v322 = vmul.f32 %v114, %v242
  %v323 = vmul.f32 %v116, %v257
  %v324 = vmul.f32 %v119, %v272
  %v325 = vmul.f32 %v121, %v287
  %v326 = vmul.f32 %v124, %v302
  %v327 = vmul.f32 %v126, %v317
  %v328 = vpack.c.bf16 %v318, %v318
  %v329 = vpack.c.bf16 %v319, %v319
  %v330 = vpack.c.bf16 %v320, %v320
  %v331 = vpack.c.bf16 %v321, %v321
  %v332 = vpack.c.bf16 %v322, %v322
  %v333 = vpack.c.bf16 %v323, %v323
  %v334 = vpack.c.bf16 %v324, %v324
  %v335 = vpack.c.bf16 %v325, %v325
  %v336 = vpack.c.bf16 %v326, %v326
  %v337 = vpack.c.bf16 %v327, %v327
  %vm338 = vcmask 60416
  %339 = vst.msk [vmem:[%s3] sm:$0xf] %vm338, %v328
  %340 = vst.msk [vmem:[%s3 + $0x4] sm:$0xf] %vm338, %v329
  %341 = vst.msk [vmem:[%s3 + $0x8] sm:$0xf] %vm338, %v330
  %342 = vst.msk [vmem:[%s3 + $0xc] sm:$0xf] %vm338, %v331
  %343 = vst.msk [vmem:[%s3 + $0x10] sm:$0xf] %vm338, %v332
  %344 = vst.msk [vmem:[%s3 + $0x14] sm:$0xf] %vm338, %v333
  %345 = vst.msk [vmem:[%s3 + $0x18] sm:$0xf] %vm338, %v334
  %346 = vst.msk [vmem:[%s3 + $0x1c] sm:$0xf] %vm338, %v335
  %347 = vst.msk [vmem:[%s3 + $0x20] sm:$0xf] %vm338, %v336
  %348 = vst.msk [vmem:[%s3 + $0x24] sm:$0xf] %vm338, %v337
  // Predicated region
  $region14: #{cvae_forward.16} parent=0 // pred_check
    _
  $region15: #{cvae_forward.16} parent=0 // pred_check_branch
    %350 = sbr.rel (0) target = $region17
  $region16: #{cvae_forward.16} parent=0 // pred_region
    _
  $region17: #{cvae_forward.16} parent=0 // pred_fallthru
    _
  // Predicated region
  $region18: #{cvae_forward.16} parent=0 // pred_check
    _
  $region19: #{cvae_forward.16} parent=0 // pred_check_branch
    %352 = sbr.rel (0) target = $region21
  $region20: #{cvae_forward.16} parent=0 // pred_region
    _
  $region21: #{cvae_forward.16} parent=0 // pred_fallthru
    _

// kernel: cvae_forward.17
$region0: #{cvae_forward.17}
  #allocation0 [shape = 'u32[]', space=smem, size = 0x4, offset = 0x4, fixed_abs, tag = 'smem constant byte address 0x4 - core index']
  #allocation1 [shape = 'u32[72,128]{1,0:T(1,128)}', space=vmem, size = 0x9000, scoped, tag = 'internal scratch']
  %s0 = inlined_call_operand.vmem [shape: bf16[24,72], index: 0, kind: input, shape index: {}]
  %s1 = inlined_call_operand.vmem [shape: bf16[72,16], index: 1, kind: input, shape index: {}]
  %s2 = inlined_call_operand.vmem [shape: f32[1,16], index: 2, kind: input, shape index: {}]
  %s3 = inlined_call_operand.vmem [shape: bf16[24,16], index: 3, kind: output, shape index: {}]
  %s4 = sld [smem:[#allocation0]]
  $region22: #{cvae_forward.17} parent=0
    _
  %s6 = ssub.s32 1, %s4
  %s7 = scalar_select 0, %s6, %s4
  // Predicated region
  $region2: #{cvae_forward.17} parent=0 // pred_check
    _
  $region3: #{cvae_forward.17} parent=0 // pred_check_branch
    %9 = sbr.rel (0) target = $region5
  $region4: #{cvae_forward.17} parent=0 // pred_region
    _
  $region5: #{cvae_forward.17} parent=0 // pred_fallthru
    _
  // Predicated region
  $region6: #{cvae_forward.17} parent=0 // pred_check
    _
  $region7: #{cvae_forward.17} parent=0 // pred_check_branch
    %11 = sbr.rel (0) target = $region9
  $region8: #{cvae_forward.17} parent=0 // pred_region
    _
  $region9: #{cvae_forward.17} parent=0 // pred_fallthru
    _
  // Predicated region
  $region10: #{cvae_forward.17} parent=0 // pred_check
    _
  $region11: #{cvae_forward.17} parent=0 // pred_check_branch
    %13 = sbr.rel (0) target = $region13
  $region12: #{cvae_forward.17} parent=0 // pred_region
    _
  $region13: #{cvae_forward.17} parent=0 // pred_fallthru
    _
  %v15 = vld [vmem:[%s0] sm:$0xf]
  %v16 = vld [vmem:[%s0 + $0x4] sm:$0xf]
  %v17 = vld [vmem:[%s0 + $0x8] sm:$0xf]
  %v18 = vld [vmem:[%s1] sm:$0xf]
  %v19 = vld [vmem:[%s1 + $0x4] sm:$0xf]
  %v20 = vld [vmem:[%s1 + $0x8] sm:$0xf]
  %v21 = vld [vmem:[%s1 + $0xc] sm:$0xf]
  %v22 = vld [vmem:[%s1 + $0x10] sm:$0xf]
  %v23 = vld [vmem:[%s1 + $0x14] sm:$0xf]
  %v24 = vld [vmem:[%s1 + $0x18] sm:$0xf]
  %v25 = vld [vmem:[%s1 + $0x1c] sm:$0xf]
  %v26 = vld [vmem:[%s1 + $0x20] sm:$0xf]
  %v27 = vld [vmem:[%s2] sm:$0x1]
  %v29 = vperm.slane %v27, 0
  %v34 = vunpack.c.l.b16 %v15
  %v35 = vunpack.c.l.b16 %v16
  %v36 = vunpack.c.l.b16 %v17
  %v37 = vpack.c.b16 %v35, %v34
  %v38 = vpack.c.b16 %v36, %v36
  %v48 = vunpack.c.l.b16 %v18
  %v49 = vunpack.c.l.b16 %v19
  %v50 = vunpack.c.l.b16 %v20
  %v51 = vunpack.c.l.b16 %v21
  %v52 = vunpack.c.l.b16 %v22
  %v53 = vunpack.c.l.b16 %v23
  %v54 = vunpack.c.l.b16 %v24
  %v55 = vunpack.c.l.b16 %v25
  %v56 = vunpack.c.l.b16 %v26
  %v57 = vpack.c.b16 %v49, %v48
  %v58 = vpack.c.b16 %v51, %v50
  %v59 = vpack.c.b16 %v53, %v52
  %v60 = vpack.c.b16 %v55, %v54
  %v61 = vpack.c.b16 %v56, %v56
  %vm66 = vcmask 588800
  %v68 = vsel %vm66, %v37, 0
  %v71 = vsel %vm66, %v38, 0
  %vm73 = vcmask 1043456
  %v75 = vsel %vm73, %v61, 0
  %77 = vmatpush.bf16.msra.mxu0 0
  %78 = vmatpush.bf16.msra.mxu0 0
  %79 = vmatpush.bf16.msra.mxu0 0
  %80 = vmatpush.bf16.msra.mxu0 %v75
  %81 = vmatpush.bf16.msra.mxu0 %v60
  %82 = vmatpush.bf16.msra.mxu0 %v59
  %83 = vmatpush.bf16.msra.mxu0 %v58
  %84 = vmatpush.bf16.msra.mxu0 %v57
  %85 = vmatmul.bf16.gmra.mxu0 %v68
  %v86 = vpop.f32.mrf.mxu0
  %v87 = vadd.f32 %v29, %v86
  %v88 = vpop.f32.mrf.mxu0
  %v89 = vadd.f32 %v29, %v88
  %90 = vmatmul.bf16.gmra.mxu0 %v71
  %v91 = vpop.f32.mrf.mxu0
  %v92 = vadd.f32 %v29, %v91
  %v93 = vpop.f32.mrf.mxu0
  %94 = vdwg.mxu0
  %v95 = vxor.u32 %v87, 2147483648
  %v96 = vxor.u32 %v89, 2147483648
  %v97 = vxor.u32 %v92, 2147483648
  %v98 = vmul.f32 %v95, 1.442695
  %v99 = vpow.pop %v98
  %v100 = vmul.f32 %v96, 1.442695
  %v101 = vpow.pop %v100
  %v102 = vmul.f32 %v97, 1.442695
  %v103 = vpow.pop %v102
  %v104 = vadd.f32 %v99, 1.0
  %v105 = vadd.f32 %v101, 1.0
  %v106 = vadd.f32 %v103, 1.0
  %v107 = vrcp.pop %v104
  %v108 = vmul.f32 %v104, %v107
  %v109 = vsub.f32 1.0, %v108
  %v110 = vmul.f32 %v107, %v109
  %v111 = vadd.f32 %v107, %v110
  %vm112 = vweird.f32 %v104
  %vm113 = vweird.f32 %v107
  %vm114 = vmor %vm112, %vm113
  %v115 = vsel %vm114, %v107, %v111
  %v116 = vand.u32 2147483647, %v104
  %vm117 = vcmp.eq.f32.partialorder %v116, 8.507059e+37
  %v118 = vand.u32 %v104, 2147483648
  %v119 = vor.u32 1.1754944e-38, %v118
  %v120 = vsel %vm117, %v119, %v115
  %v121 = vmul.f32 1.0, %v120
  %v122 = vrcp.pop %v105
  %v123 = vmul.f32 %v105, %v122
  %v124 = vsub.f32 1.0, %v123
  %v125 = vmul.f32 %v122, %v124
  %v126 = vadd.f32 %v122, %v125
  %vm127 = vweird.f32 %v105
  %vm128 = vweird.f32 %v122
  %vm129 = vmor %vm127, %vm128
  %v130 = vsel %vm129, %v122, %v126
  %v131 = vand.u32 2147483647, %v105
  %vm132 = vcmp.eq.f32.partialorder %v131, 8.507059e+37
  %v133 = vand.u32 %v105, 2147483648
  %v134 = vor.u32 1.1754944e-38, %v133
  %v135 = vsel %vm132, %v134, %v130
  %v136 = vmul.f32 1.0, %v135
  %v137 = vrcp.pop %v106
  %v138 = vmul.f32 %v106, %v137
  %v139 = vsub.f32 1.0, %v138
  %v140 = vmul.f32 %v137, %v139
  %v141 = vadd.f32 %v137, %v140
  %vm142 = vweird.f32 %v106
  %vm143 = vweird.f32 %v137
  %vm144 = vmor %vm142, %vm143
  %v145 = vsel %vm144, %v137, %v141
  %v146 = vand.u32 2147483647, %v106
  %vm147 = vcmp.eq.f32.partialorder %v146, 8.507059e+37
  %v148 = vand.u32 %v106, 2147483648
  %v149 = vor.u32 1.1754944e-38, %v148
  %v150 = vsel %vm147, %v149, %v145
  %v151 = vmul.f32 1.0, %v150
  %v152 = vmul.f32 %v87, %v121
  %v153 = vmul.f32 %v89, %v136
  %v154 = vmul.f32 %v92, %v151
  %v155 = vpack.c.bf16 %v152, %v152
  %v156 = vpack.c.bf16 %v153, %v153
  %v157 = vpack.c.bf16 %v154, %v154
  %vm158 = vcmask 125952
  %159 = vst.msk [vmem:[%s3] sm:$0xf] %vm158, %v155
  %160 = vst.msk [vmem:[%s3 + $0x4] sm:$0xf] %vm158, %v156
  %161 = vst.msk [vmem:[%s3 + $0x8] sm:$0xf] %vm158, %v157
  // Predicated region
  $region14: #{cvae_forward.17} parent=0 // pred_check
    _
  $region15: #{cvae_forward.17} parent=0 // pred_check_branch
    %163 = sbr.rel (0) target = $region17
  $region16: #{cvae_forward.17} parent=0 // pred_region
    _
  $region17: #{cvae_forward.17} parent=0 // pred_fallthru
    _
  // Predicated region
  $region18: #{cvae_forward.17} parent=0 // pred_check
    _
  $region19: #{cvae_forward.17} parent=0 // pred_check_branch
    %165 = sbr.rel (0) target = $region21
  $region20: #{cvae_forward.17} parent=0 // pred_region
    _
  $region21: #{cvae_forward.17} parent=0 // pred_fallthru
    _

// kernel: cvae_forward.18
$region0: #{cvae_forward.18}
  #allocation0 [shape = 'u32[]', space=smem, size = 0x4, offset = 0x4, fixed_abs, tag = 'smem constant byte address 0x4 - core index']
  #allocation1 [shape = 'u32[72,128]{1,0:T(1,128)}', space=vmem, size = 0x9000, scoped, tag = 'internal scratch']
  %s0 = inlined_call_operand.vmem [shape: bf16[8,144], index: 0, kind: input, shape index: {}]
  %s1 = inlined_call_operand.vmem [shape: bf16[144,32], index: 1, kind: input, shape index: {}]
  %s2 = inlined_call_operand.vmem [shape: f32[1,32], index: 2, kind: input, shape index: {}]
  %s3 = inlined_call_operand.vmem [shape: bf16[8,32], index: 3, kind: output, shape index: {}]
  %s4 = sld [smem:[#allocation0]]
  $region22: #{cvae_forward.18} parent=0
    _
  %s6 = ssub.s32 1, %s4
  %s7 = scalar_select 0, %s6, %s4
  // Predicated region
  $region2: #{cvae_forward.18} parent=0 // pred_check
    _
  $region3: #{cvae_forward.18} parent=0 // pred_check_branch
    %9 = sbr.rel (0) target = $region5
  $region4: #{cvae_forward.18} parent=0 // pred_region
    _
  $region5: #{cvae_forward.18} parent=0 // pred_fallthru
    _
  // Predicated region
  $region6: #{cvae_forward.18} parent=0 // pred_check
    _
  $region7: #{cvae_forward.18} parent=0 // pred_check_branch
    %11 = sbr.rel (0) target = $region9
  $region8: #{cvae_forward.18} parent=0 // pred_region
    _
  $region9: #{cvae_forward.18} parent=0 // pred_fallthru
    _
  // Predicated region
  $region10: #{cvae_forward.18} parent=0 // pred_check
    _
  $region11: #{cvae_forward.18} parent=0 // pred_check_branch
    %13 = sbr.rel (0) target = $region13
  $region12: #{cvae_forward.18} parent=0 // pred_region
    _
  $region13: #{cvae_forward.18} parent=0 // pred_fallthru
    _
  %v15 = vld [vmem:[%s0] sm:$0xff]
  %v16 = vld [vmem:[%s1] sm:$0xf]
  %v17 = vld [vmem:[%s1 + $0x4] sm:$0xf]
  %v18 = vld [vmem:[%s1 + $0x8] sm:$0xf]
  %v19 = vld [vmem:[%s1 + $0xc] sm:$0xf]
  %v20 = vld [vmem:[%s1 + $0x10] sm:$0xf]
  %v21 = vld [vmem:[%s1 + $0x14] sm:$0xf]
  %v22 = vld [vmem:[%s1 + $0x18] sm:$0xf]
  %v23 = vld [vmem:[%s1 + $0x1c] sm:$0xf]
  %v24 = vld [vmem:[%s1 + $0x20] sm:$0xf]
  %v25 = vld [vmem:[%s1 + $0x24] sm:$0xf]
  %v26 = vld [vmem:[%s1 + $0x28] sm:$0xf]
  %v27 = vld [vmem:[%s1 + $0x2c] sm:$0xf]
  %v28 = vld [vmem:[%s1 + $0x30] sm:$0xf]
  %v29 = vld [vmem:[%s1 + $0x34] sm:$0xf]
  %v30 = vld [vmem:[%s1 + $0x38] sm:$0xf]
  %v31 = vld [vmem:[%s1 + $0x3c] sm:$0xf]
  %v32 = vld [vmem:[%s1 + $0x40] sm:$0xf]
  %v33 = vld [vmem:[%s1 + $0x44] sm:$0xf]
  %v34 = vld [vmem:[%s2] sm:$0x1]
  %v36 = vperm.slane %v34, 0
  %v39 = vunpack.c.l.b16 %v15
  %v40 = vunpack.c.h.b16 %v15
  %v41 = vpack.c.b16 %v39, %v39
  %v42 = vpack.c.b16 %v40, %v40
  %v62 = vunpack.c.l.b16 %v16
  %v63 = vunpack.c.l.b16 %v17
  %v64 = vunpack.c.l.b16 %v18
  %v65 = vunpack.c.l.b16 %v19
  %v66 = vunpack.c.l.b16 %v20
  %v67 = vunpack.c.l.b16 %v21
  %v68 = vunpack.c.l.b16 %v22
  %v69 = vunpack.c.l.b16 %v23
  %v70 = vunpack.c.l.b16 %v24
  %v71 = vunpack.c.l.b16 %v25
  %v72 = vunpack.c.l.b16 %v26
  %v73 = vunpack.c.l.b16 %v27
  %v74 = vunpack.c.l.b16 %v28
  %v75 = vunpack.c.l.b16 %v29
  %v76 = vunpack.c.l.b16 %v30
  %v77 = vunpack.c.l.b16 %v31
  %v78 = vunpack.c.l.b16 %v32
  %v79 = vunpack.c.l.b16 %v33
  %v80 = vpack.c.b16 %v63, %v62
  %v81 = vpack.c.b16 %v65, %v64
  %v82 = vpack.c.b16 %v67, %v66
  %v83 = vpack.c.b16 %v69, %v68
  %v84 = vpack.c.b16 %v71, %v70
  %v85 = vpack.c.b16 %v73, %v72
  %v86 = vpack.c.b16 %v75, %v74
  %v87 = vpack.c.b16 %v77, %v76
  %v88 = vpack.c.b16 %v79, %v78
  %vm98 = vcmask 130048
  %v100 = vsel %vm98, %v42, 0
  %102 = vmatpush.bf16.msra.mxu0 %v87
  %103 = vmatpush.bf16.msra.mxu0 %v86
  %104 = vmatpush.bf16.msra.mxu0 %v85
  %105 = vmatpush.bf16.msra.mxu0 %v84
  %106 = vmatpush.bf16.msra.mxu0 %v83
  %107 = vmatpush.bf16.msra.mxu0 %v82
  %108 = vmatpush.bf16.msra.mxu0 %v81
  %109 = vmatpush.bf16.msra.mxu0 %v80
  %110 = vmatmul.bf16.gmra.mxu0 %v41
  %v111 = vpop.f32.mrf.mxu0
  %v112 = vadd.f32 %v36, %v111
  %v113 = vpop.f32.mrf.mxu0
  %114 = vdwg.mxu0
  %115 = vmatpush.bf16.msra.mxu0 0
  %116 = vmatpush.bf16.msra.mxu0 0
  %117 = vmatpush.bf16.msra.mxu0 0
  %118 = vmatpush.bf16.msra.mxu0 0
  %119 = vmatpush.bf16.msra.mxu0 0
  %120 = vmatpush.bf16.msra.mxu0 0
  %121 = vmatpush.bf16.msra.mxu0 0
  %122 = vmatpush.bf16.msra.mxu0 %v88
  %123 = vmatmul.bf16.gmra.mxu0 %v100
  %v124 = vpop.f32.mrf.mxu0
  %v125 = vadd.f32 %v112, %v124
  %v126 = vpop.f32.mrf.mxu0
  %127 = vdwg.mxu0
  %v128 = vxor.u32 %v125, 2147483648
  %v129 = vmul.f32 %v128, 1.442695
  %v130 = vpow.pop %v129
  %v131 = vadd.f32 %v130, 1.0
  %v132 = vrcp.pop %v131
  %v133 = vmul.f32 %v131, %v132
  %v134 = vsub.f32 1.0, %v133
  %v135 = vmul.f32 %v132, %v134
  %v136 = vadd.f32 %v132, %v135
  %vm137 = vweird.f32 %v131
  %vm138 = vweird.f32 %v132
  %vm139 = vmor %vm137, %vm138
  %v140 = vsel %vm139, %v132, %v136
  %v141 = vand.u32 2147483647, %v131
  %vm142 = vcmp.eq.f32.partialorder %v141, 8.507059e+37
  %v143 = vand.u32 %v131, 2147483648
  %v144 = vor.u32 1.1754944e-38, %v143
  %v145 = vsel %vm142, %v144, %v140
  %v146 = vmul.f32 1.0, %v145
  %v147 = vmul.f32 %v125, %v146
  %v148 = vpack.c.bf16 %v147, %v147
  %vm149 = vcmask 257024
  %150 = vst.msk [vmem:[%s3] sm:$0xf] %vm149, %v148
  // Predicated region
  $region14: #{cvae_forward.18} parent=0 // pred_check
    _
  $region15: #{cvae_forward.18} parent=0 // pred_check_branch
    %152 = sbr.rel (0) target = $region17
  $region16: #{cvae_forward.18} parent=0 // pred_region
    _
  $region17: #{cvae_forward.18} parent=0 // pred_fallthru
    _
  // Predicated region
  $region18: #{cvae_forward.18} parent=0 // pred_check
    _
  $region19: #{cvae_forward.18} parent=0 // pred_check_branch
    %154 = sbr.rel (0) target = $region21
  $region20: #{cvae_forward.18} parent=0 // pred_region
    _
  $region21: #{cvae_forward.18} parent=0 // pred_fallthru
    _

// kernel: cvae_forward.19
$region0: #{cvae_forward.19}
  #allocation0 [shape = 'u32[]', space=smem, size = 0x4, offset = 0x4, fixed_abs, tag = 'smem constant byte address 0x4 - core index']
  #allocation1 [shape = 'u32[72,128]{1,0:T(1,128)}', space=vmem, size = 0x9000, scoped, tag = 'internal scratch']
  %s0 = inlined_call_operand.vmem [shape: bf16[2,4,32], index: 0, kind: input, shape index: {}]
  %s1 = inlined_call_operand.vmem [shape: f32[32,4], index: 1, kind: input, shape index: {}]
  %s2 = inlined_call_operand.vmem [shape: f32[1,4], index: 2, kind: input, shape index: {}]
  %s3 = inlined_call_operand.vmem [shape: f32[32,4], index: 3, kind: input, shape index: {}]
  %s4 = inlined_call_operand.vmem [shape: f32[1,4], index: 4, kind: input, shape index: {}]
  %s5 = inlined_call_operand.vmem [shape: f32[2,4], index: 5, kind: input, shape index: {}]
  %s6 = inlined_call_operand.vmem [shape: f32[2,3], index: 6, kind: input, shape index: {}]
  %s7 = inlined_call_operand.vmem [shape: f32[4,128], index: 7, kind: input, shape index: {}]
  %s8 = inlined_call_operand.vmem [shape: f32[3,128], index: 8, kind: input, shape index: {}]
  %s9 = inlined_call_operand.vmem [shape: f32[1,128], index: 9, kind: input, shape index: {}]
  %s10 = inlined_call_operand.vmem [shape: bf16[2,128], index: 10, kind: input, shape index: {}]
  %s11 = inlined_call_operand.hbm [shape: f32[2,4], index: 11, kind: output, shape index: {0}]
  %s12 = inlined_call_operand.hbm [shape: f32[2,4], index: 12, kind: output, shape index: {1}]
  %s13 = inlined_call_operand.hbm [shape: f32[2,4], index: 13, kind: output, shape index: {2}]
  %s14 = inlined_call_operand.vmem [shape: bf16[2,128], index: 14, kind: output, shape index: {3}]
  %15 = xla_tuple %s11, %s12, %s13, %s14
  %s16 = sld [smem:[#allocation0]]
  $region78: #{cvae_forward.19} parent=0
    _
  %s18 = ssub.s32 1, %s16
  %s19 = scalar_select 0, %s18, %s16
  $region1: #{cvae_forward.19} parent=0
    #allocation2 [shape = 'u8[1024]{0}', space=vmem, size = 0x400, scoped, tag = 'output window, operand 0, single buffered']
    #allocation3 [shape = 's32[1]{0}', space=sflag, size = 0x4, scoped, tag = 'scoped memory for cvae_forward.19']
    #allocation4 [shape = 'u8[1024]{0}', space=vmem, size = 0x400, scoped, tag = 'output window, operand 1, single buffered']
    #allocation5 [shape = 's32[1]{0}', space=sflag, size = 0x4, scoped, tag = 'scoped memory for cvae_forward.19']
    #allocation6 [shape = 'u8[1024]{0}', space=vmem, size = 0x400, scoped, tag = 'output window, operand 2, single buffered']
    %20 = vsyncpa [#allocation3], 0
    %21 = vsyncpa [#allocation5], 0
    // Predicated region
    $region2: #{cvae_forward.19} parent=1 // pred_check
      _
    $region3: #{cvae_forward.19} parent=1 // pred_check_branch
      %23 = sbr.rel (0) target = $region5
    $region4: #{cvae_forward.19} parent=1 // pred_region
      _
    $region5: #{cvae_forward.19} parent=1 // pred_fallthru
      _
    // Predicated region
    $region6: #{cvae_forward.19} parent=1 // pred_check
      _
    $region7: #{cvae_forward.19} parent=1 // pred_check_branch
      %25 = sbr.rel (0) target = $region9
    $region8: #{cvae_forward.19} parent=1 // pred_region
      _
    $region9: #{cvae_forward.19} parent=1 // pred_fallthru
      _
    // Predicated region
    $region10: #{cvae_forward.19} parent=1 // pred_check
      _
    $region11: #{cvae_forward.19} parent=1 // pred_check_branch
      %27 = sbr.rel (0) target = $region13
    $region12: #{cvae_forward.19} parent=1 // pred_region
      _
    $region13: #{cvae_forward.19} parent=1 // pred_fallthru
      _
    // Predicated region
    $region14: #{cvae_forward.19} parent=1 // pred_check
      _
    $region15: #{cvae_forward.19} parent=1 // pred_check_branch
      %29 = sbr.rel (0) target = $region17
    $region16: #{cvae_forward.19} parent=1 // pred_region
      _
    $region17: #{cvae_forward.19} parent=1 // pred_fallthru
      _
    // Predicated region
    $region18: #{cvae_forward.19} parent=1 // pred_check
      _
    $region19: #{cvae_forward.19} parent=1 // pred_check_branch
      %31 = sbr.rel (0) target = $region21
    $region20: #{cvae_forward.19} parent=1 // pred_region
      _
    $region21: #{cvae_forward.19} parent=1 // pred_fallthru
      _
    // Predicated region
    $region22: #{cvae_forward.19} parent=1 // pred_check
      _
    $region23: #{cvae_forward.19} parent=1 // pred_check_branch
      %33 = sbr.rel (0) target = $region25
    $region24: #{cvae_forward.19} parent=1 // pred_region
      _
    $region25: #{cvae_forward.19} parent=1 // pred_fallthru
      _
    // Predicated region
    $region26: #{cvae_forward.19} parent=1 // pred_check
      _
    $region27: #{cvae_forward.19} parent=1 // pred_check_branch
      %35 = sbr.rel (0) target = $region29
    $region28: #{cvae_forward.19} parent=1 // pred_region
      _
    $region29: #{cvae_forward.19} parent=1 // pred_fallthru
      _
    // Predicated region
    $region30: #{cvae_forward.19} parent=1 // pred_check
      _
    $region31: #{cvae_forward.19} parent=1 // pred_check_branch
      %37 = sbr.rel (0) target = $region33
    $region32: #{cvae_forward.19} parent=1 // pred_region
      _
    $region33: #{cvae_forward.19} parent=1 // pred_fallthru
      _
    // Predicated region
    $region34: #{cvae_forward.19} parent=1 // pred_check
      _
    $region35: #{cvae_forward.19} parent=1 // pred_check_branch
      %39 = sbr.rel (0) target = $region37
    $region36: #{cvae_forward.19} parent=1 // pred_region
      _
    $region37: #{cvae_forward.19} parent=1 // pred_fallthru
      _
    // Predicated region
    $region38: #{cvae_forward.19} parent=1 // pred_check
      _
    $region39: #{cvae_forward.19} parent=1 // pred_check_branch
      %41 = sbr.rel (0) target = $region41
    $region40: #{cvae_forward.19} parent=1 // pred_region
      _
    $region41: #{cvae_forward.19} parent=1 // pred_fallthru
      _
    // Predicated region
    $region42: #{cvae_forward.19} parent=1 // pred_check
      _
    $region43: #{cvae_forward.19} parent=1 // pred_check_branch
      %43 = sbr.rel (0) target = $region45
    $region44: #{cvae_forward.19} parent=1 // pred_region
      _
    $region45: #{cvae_forward.19} parent=1 // pred_fallthru
      _
    %v44 = vld [vmem:[%s0] sm:$0x3]
    %v45 = vld [vmem:[%s0 + $0x2] sm:$0x3]
    %v46 = vunpack.c.l.bf16 %v44
    %v47 = vunpack.c.l.bf16 %v45
    %vm48 = vcmask 257024
    %v49 = vsel %vm48, %v46, 0.0
    %v50 = vrot.slane %v49, 4
    %v51 = vadd.f32 %v49, %v50
    %v52 = vrot.slane %v51, 2
    %v53 = vadd.f32 %v51, %v52
    %v54 = vrot.slane %v53, 1
    %v55 = vadd.f32 %v53, %v54
    %v56 = vsel %vm48, %v47, 0.0
    %v57 = vrot.slane %v56, 4
    %v58 = vadd.f32 %v56, %v57
    %v59 = vrot.slane %v58, 2
    %v60 = vadd.f32 %v58, %v59
    %v61 = vrot.slane %v60, 1
    %v62 = vadd.f32 %v60, %v61
    %v63 = vrcp.pop 4.0
    %v64 = vmul.f32 4.0, %v63
    %v65 = vsub.f32 1.0, %v64
    %v66 = vmul.f32 %v63, %v65
    %v67 = vadd.f32 %v63, %v66
    %vm68 = vweird.f32 %v63
    %v69 = vsel %vm68, %v63, %v67
    %v70 = vmul.f32 %v55, %v69
    %v71 = vmul.f32 %v62, %v69
    %v72 = vld [vmem:[%s1] sm:$0xff]
    %v73 = vld [vmem:[%s1 + $0x8] sm:$0xff]
    %v74 = vld [vmem:[%s1 + $0x10] sm:$0xff]
    %v75 = vld [vmem:[%s1 + $0x18] sm:$0xff]
    %v76 = vld [vmem:[%s2] sm:$0x1]
    %v78 = vperm.slane %v76, 0
    %vm82 = vcmask 1041409
    %v83 = vsel %vm82, %v71, %v70
    %vm84 = vcmask 261120
    %v85 = vsel %vm84, %v83, 0
    %87 = vmatpush.msra.mxu0 0.0
    %88 = vmatpush.msra.mxu0 0.0
    %89 = vmatpush.msra.mxu0 0.0
    %90 = vmatpush.msra.mxu0 0.0
    %91 = vmatpush.msra.mxu0 0.0
    %92 = vmatpush.msra.mxu0 0.0
    %93 = vmatpush.msra.mxu0 0.0
    %94 = vmatpush.msra.mxu0 0.0
    %95 = vmatpush.msra.mxu0 0.0
    %96 = vmatpush.msra.mxu0 0.0
    %97 = vmatpush.msra.mxu0 0.0
    %98 = vmatpush.msra.mxu0 0.0
    %99 = vmatpush.msra.mxu0 %v75
    %100 = vmatpush.msra.mxu0 %v74
    %101 = vmatpush.msra.mxu0 %v73
    %102 = vmatpush.msra.mxu0 %v72
    %103 = vmatmul.f32.gmra.mxu0 %v85
    %v104 = vpop.f32.mrf.mxu0
    %v105 = vadd.f32 %v78, %v104
    %106 = vdwg.mxu0
    %v107 = vld [vmem:[%s3] sm:$0xff]
    %v108 = vld [vmem:[%s3 + $0x8] sm:$0xff]
    %v109 = vld [vmem:[%s3 + $0x10] sm:$0xff]
    %v110 = vld [vmem:[%s3 + $0x18] sm:$0xff]
    %v111 = vld [vmem:[%s4] sm:$0x1]
    %v113 = vperm.slane %v111, 0
    %115 = vmatpush.msra.mxu0 0.0
    %116 = vmatpush.msra.mxu0 0.0
    %117 = vmatpush.msra.mxu0 0.0
    %118 = vmatpush.msra.mxu0 0.0
    %119 = vmatpush.msra.mxu0 0.0
    %120 = vmatpush.msra.mxu0 0.0
    %121 = vmatpush.msra.mxu0 0.0
    %122 = vmatpush.msra.mxu0 0.0
    %123 = vmatpush.msra.mxu0 0.0
    %124 = vmatpush.msra.mxu0 0.0
    %125 = vmatpush.msra.mxu0 0.0
    %126 = vmatpush.msra.mxu0 0.0
    %127 = vmatpush.msra.mxu0 %v110
    %128 = vmatpush.msra.mxu0 %v109
    %129 = vmatpush.msra.mxu0 %v108
    %130 = vmatpush.msra.mxu0 %v107
    %131 = vmatmul.f32.gmra.mxu0 %v85
    %v132 = vpop.f32.mrf.mxu0
    %v133 = vadd.f32 %v113, %v132
    %134 = vdwg.mxu0
    %v135 = vld [vmem:[%s5] sm:$0x3]
    %v136 = vmul.f32 %v133, 0.5
    %v137 = vmul.f32 %v136, 1.442695
    %v138 = vpow.pop %v137
    %v139 = vmul.f32 %v135, %v138
    %v140 = vadd.f32 %v105, %v139
    %v141 = vld [vmem:[%s7] sm:$0xf]
    %v142 = vld [vmem:[%s6] sm:$0x3]
    %v143 = vld [vmem:[%s8] sm:$0x7]
    %vm144 = vcmask 23552
    %v146 = vsel %vm144, %v142, 0
    %vm148 = vcmask 1042432
    %v150 = vsel %vm148, %v143, 0
    %152 = vmatpush.msra.mxu0 0.0
    %153 = vmatpush.msra.mxu0 0.0
    %154 = vmatpush.msra.mxu0 0.0
    %155 = vmatpush.msra.mxu0 0.0
    %156 = vmatpush.msra.mxu0 0.0
    %157 = vmatpush.msra.mxu0 0.0
    %158 = vmatpush.msra.mxu0 0.0
    %159 = vmatpush.msra.mxu0 0.0
    %160 = vmatpush.msra.mxu0 0.0
    %161 = vmatpush.msra.mxu0 0.0
    %162 = vmatpush.msra.mxu0 0.0
    %163 = vmatpush.msra.mxu0 0.0
    %164 = vmatpush.msra.mxu0 0.0
    %165 = vmatpush.msra.mxu0 0.0
    %166 = vmatpush.msra.mxu0 0.0
    %167 = vmatpush.msra.mxu0 %v150
    %168 = vmatmul.f32.gmra.mxu0 %v146
    %v169 = vpop.f32.mrf.mxu0
    %v170 = vadd.f32 0.0, %v169
    %171 = vdwg.mxu0
    %vm172 = vcmask 31744
    %v174 = vsel %vm172, %v140, 0
    %vm176 = vcmask 1043456
    %v178 = vsel %vm176, %v141, 0
    %180 = vmatpush.msra.mxu0 0.0
    %181 = vmatpush.msra.mxu0 0.0
    %182 = vmatpush.msra.mxu0 0.0
    %183 = vmatpush.msra.mxu0 0.0
    %184 = vmatpush.msra.mxu0 0.0
    %185 = vmatpush.msra.mxu0 0.0
    %186 = vmatpush.msra.mxu0 0.0
    %187 = vmatpush.msra.mxu0 0.0
    %188 = vmatpush.msra.mxu0 0.0
    %189 = vmatpush.msra.mxu0 0.0
    %190 = vmatpush.msra.mxu0 0.0
    %191 = vmatpush.msra.mxu0 0.0
    %192 = vmatpush.msra.mxu0 0.0
    %193 = vmatpush.msra.mxu0 0.0
    %194 = vmatpush.msra.mxu0 0.0
    %195 = vmatpush.msra.mxu0 %v178
    %196 = vmatmul.f32.gmra.mxu0 %v174
    %v197 = vpop.f32.mrf.mxu0
    %v198 = vadd.f32 %v170, %v197
    %199 = vdwg.mxu0
    %v200 = vld [vmem:[%s9] sm:$0x1]
    %v202 = vperm.slane %v200, 0
    %v204 = vadd.f32 %v198, %v202
    %v205 = vld [vmem:[%s10] sm:$0x1]
    %v206 = vunpack.c.l.bf16 %v205
    %v207 = vadd.f32 %v204, %v206
    %vm208 = vcmask 25600
    %209 = vst.msk [vmem:[#allocation2] sm:$0x3] %vm208, %v105
    %210 = vst.msk [vmem:[#allocation4] sm:$0x3] %vm208, %v133
    %211 = vst.msk [vmem:[#allocation6] sm:$0x3] %vm208, %v140
    %v212 = vpack.c.bf16 %v207, %v207
    %213 = vst [vmem:[%s14] sm:$0x1] %v212
    // Predicated region
    $region46: #{cvae_forward.19} parent=1 // pred_check
      _
    $region47: #{cvae_forward.19} parent=1 // pred_check_branch
      %215 = sbr.rel (0) target = $region49
    $region48: #{cvae_forward.19} parent=1 // pred_region
      %217 = vsyncadd [#allocation3], 0
      %s219 = sshll.u32 [#allocation2], 4
      %s220 = int_to_ptr.vmem [resolvable:$true] %s219
      %s221 = sshll.u32 %s11, 4
      %s222 = int_to_ptr.hbm [resolvable:$true] %s221
      %224 = dma.vmem_to_hbm [thread:$0]  %s220, 32, %s222, [#allocation3]
    $region49: #{cvae_forward.19} parent=1 // pred_fallthru
      _
    // Predicated region
    $region50: #{cvae_forward.19} parent=1 // pred_check
      _
    $region51: #{cvae_forward.19} parent=1 // pred_check_branch
      %226 = sbr.rel (0) target = $region53
    $region52: #{cvae_forward.19} parent=1 // pred_region
      %228 = vsyncadd [#allocation5], 0
      %s230 = sshll.u32 [#allocation4], 4
      %s231 = int_to_ptr.vmem [resolvable:$true] %s230
      %s232 = sshll.u32 %s12, 4
      %s233 = int_to_ptr.hbm [resolvable:$true] %s232
      %235 = dma.vmem_to_hbm [thread:$0]  %s231, 32, %s233, [#allocation5]
    $region53: #{cvae_forward.19} parent=1 // pred_fallthru
      _
    // Predicated region
    $region54: #{cvae_forward.19} parent=1 // pred_check
      _
    $region55: #{cvae_forward.19} parent=1 // pred_check_branch
      %237 = sbr.rel (0) target = $region57
    $region56: #{cvae_forward.19} parent=1 // pred_region
      %239 = vsyncadd [#allocation5], 0
      %s241 = sshll.u32 [#allocation6], 4
      %s242 = int_to_ptr.vmem [resolvable:$true] %s241
      %s243 = sshll.u32 %s13, 4
      %s244 = int_to_ptr.hbm [resolvable:$true] %s243
      %246 = dma.vmem_to_hbm [thread:$0]  %s242, 32, %s244, [#allocation5]
    $region57: #{cvae_forward.19} parent=1 // pred_fallthru
      _
    // Predicated region
    $region58: #{cvae_forward.19} parent=1 // pred_check
      _
    $region59: #{cvae_forward.19} parent=1 // pred_check_branch
      %248 = sbr.rel (0) target = $region61
    $region60: #{cvae_forward.19} parent=1 // pred_region
      _
    $region61: #{cvae_forward.19} parent=1 // pred_fallthru
      _
    // Predicated region
    $region62: #{cvae_forward.19} parent=1 // pred_check
      _
    $region63: #{cvae_forward.19} parent=1 // pred_check_branch
      %250 = sbr.rel (0) target = $region65
    $region64: #{cvae_forward.19} parent=1 // pred_region
      %252 = dma.done [#allocation3], 32
    $region65: #{cvae_forward.19} parent=1 // pred_fallthru
      _
    // Predicated region
    $region66: #{cvae_forward.19} parent=1 // pred_check
      _
    $region67: #{cvae_forward.19} parent=1 // pred_check_branch
      %254 = sbr.rel (0) target = $region69
    $region68: #{cvae_forward.19} parent=1 // pred_region
      %256 = dma.done [#allocation5], 32
    $region69: #{cvae_forward.19} parent=1 // pred_fallthru
      _
    // Predicated region
    $region70: #{cvae_forward.19} parent=1 // pred_check
      _
    $region71: #{cvae_forward.19} parent=1 // pred_check_branch
      %258 = sbr.rel (0) target = $region73
    $region72: #{cvae_forward.19} parent=1 // pred_region
      %260 = dma.done [#allocation5], 32
    $region73: #{cvae_forward.19} parent=1 // pred_fallthru
      _
    // Predicated region
    $region74: #{cvae_forward.19} parent=1 // pred_check
      _
    $region75: #{cvae_forward.19} parent=1 // pred_check_branch
      %262 = sbr.rel (0) target = $region77
    $region76: #{cvae_forward.19} parent=1 // pred_region
      _
    $region77: #{cvae_forward.19} parent=1 // pred_fallthru
      _
    %263 = vsyncpa [#allocation3], 1
    %264 = vsyncpa [#allocation5], 1

// kernel: cvae_forward.23
$region0: #{cvae_forward.23}
  #allocation0 [shape = 'u32[]', space=smem, size = 0x4, offset = 0x4, fixed_abs, tag = 'smem constant byte address 0x4 - core index']
  #allocation1 [shape = 'u32[72,128]{1,0:T(1,128)}', space=vmem, size = 0x9000, scoped, tag = 'internal scratch']
  %s0 = inlined_call_operand.vmem [shape: bf16[4,128], index: 0, kind: input, shape index: {}]
  %s1 = inlined_call_operand.vmem [shape: bf16[128,16], index: 1, kind: input, shape index: {}]
  %s2 = inlined_call_operand.vmem [shape: f32[1,16], index: 2, kind: input, shape index: {}]
  %s3 = inlined_call_operand.vmem [shape: bf16[4,16], index: 3, kind: input, shape index: {}]
  %s4 = inlined_call_operand.vmem [shape: bf16[4,16], index: 4, kind: output, shape index: {}]
  %s5 = sld [smem:[#allocation0]]
  $region26: #{cvae_forward.23} parent=0
    _
  %s7 = ssub.s32 1, %s5
  %s8 = scalar_select 0, %s7, %s5
  // Predicated region
  $region2: #{cvae_forward.23} parent=0 // pred_check
    _
  $region3: #{cvae_forward.23} parent=0 // pred_check_branch
    %10 = sbr.rel (0) target = $region5
  $region4: #{cvae_forward.23} parent=0 // pred_region
    _
  $region5: #{cvae_forward.23} parent=0 // pred_fallthru
    _
  // Predicated region
  $region6: #{cvae_forward.23} parent=0 // pred_check
    _
  $region7: #{cvae_forward.23} parent=0 // pred_check_branch
    %12 = sbr.rel (0) target = $region9
  $region8: #{cvae_forward.23} parent=0 // pred_region
    _
  $region9: #{cvae_forward.23} parent=0 // pred_fallthru
    _
  // Predicated region
  $region10: #{cvae_forward.23} parent=0 // pred_check
    _
  $region11: #{cvae_forward.23} parent=0 // pred_check_branch
    %14 = sbr.rel (0) target = $region13
  $region12: #{cvae_forward.23} parent=0 // pred_region
    _
  $region13: #{cvae_forward.23} parent=0 // pred_fallthru
    _
  // Predicated region
  $region14: #{cvae_forward.23} parent=0 // pred_check
    _
  $region15: #{cvae_forward.23} parent=0 // pred_check_branch
    %16 = sbr.rel (0) target = $region17
  $region16: #{cvae_forward.23} parent=0 // pred_region
    _
  $region17: #{cvae_forward.23} parent=0 // pred_fallthru
    _
  %v17 = vld [vmem:[%s0] sm:$0x3]
  %v18 = vld [vmem:[%s1] sm:$0xf]
  %v19 = vld [vmem:[%s1 + $0x4] sm:$0xf]
  %v20 = vld [vmem:[%s1 + $0x8] sm:$0xf]
  %v21 = vld [vmem:[%s1 + $0xc] sm:$0xf]
  %v22 = vld [vmem:[%s1 + $0x10] sm:$0xf]
  %v23 = vld [vmem:[%s1 + $0x14] sm:$0xf]
  %v24 = vld [vmem:[%s1 + $0x18] sm:$0xf]
  %v25 = vld [vmem:[%s1 + $0x1c] sm:$0xf]
  %v26 = vld [vmem:[%s1 + $0x20] sm:$0xf]
  %v27 = vld [vmem:[%s1 + $0x24] sm:$0xf]
  %v28 = vld [vmem:[%s1 + $0x28] sm:$0xf]
  %v29 = vld [vmem:[%s1 + $0x2c] sm:$0xf]
  %v30 = vld [vmem:[%s1 + $0x30] sm:$0xf]
  %v31 = vld [vmem:[%s1 + $0x34] sm:$0xf]
  %v32 = vld [vmem:[%s1 + $0x38] sm:$0xf]
  %v33 = vld [vmem:[%s1 + $0x3c] sm:$0xf]
  %v34 = vld [vmem:[%s2] sm:$0x1]
  %v36 = vperm.slane %v34, 0
  %v54 = vunpack.c.l.b16 %v18
  %v55 = vunpack.c.l.b16 %v19
  %v56 = vunpack.c.l.b16 %v20
  %v57 = vunpack.c.l.b16 %v21
  %v58 = vunpack.c.l.b16 %v22
  %v59 = vunpack.c.l.b16 %v23
  %v60 = vunpack.c.l.b16 %v24
  %v61 = vunpack.c.l.b16 %v25
  %v62 = vunpack.c.l.b16 %v26
  %v63 = vunpack.c.l.b16 %v27
  %v64 = vunpack.c.l.b16 %v28
  %v65 = vunpack.c.l.b16 %v29
  %v66 = vunpack.c.l.b16 %v30
  %v67 = vunpack.c.l.b16 %v31
  %v68 = vunpack.c.l.b16 %v32
  %v69 = vunpack.c.l.b16 %v33
  %v70 = vpack.c.b16 %v55, %v54
  %v71 = vpack.c.b16 %v57, %v56
  %v72 = vpack.c.b16 %v59, %v58
  %v73 = vpack.c.b16 %v61, %v60
  %v74 = vpack.c.b16 %v63, %v62
  %v75 = vpack.c.b16 %v65, %v64
  %v76 = vpack.c.b16 %v67, %v66
  %v77 = vpack.c.b16 %v69, %v68
  %86 = vmatpush.bf16.msra.mxu0 %v77
  %87 = vmatpush.bf16.msra.mxu0 %v76
  %88 = vmatpush.bf16.msra.mxu0 %v75
  %89 = vmatpush.bf16.msra.mxu0 %v74
  %90 = vmatpush.bf16.msra.mxu0 %v73
  %91 = vmatpush.bf16.msra.mxu0 %v72
  %92 = vmatpush.bf16.msra.mxu0 %v71
  %93 = vmatpush.bf16.msra.mxu0 %v70
  %94 = vmatmul.bf16.gmra.mxu0 %v17
  %v95 = vpop.f32.mrf.mxu0
  %v96 = vadd.f32 %v36, %v95
  %v97 = vpop.f32.mrf.mxu0
  %98 = vdwg.mxu0
  %v99 = vxor.u32 %v96, 2147483648
  %v100 = vmul.f32 %v99, 1.442695
  %v101 = vpow.pop %v100
  %v102 = vadd.f32 %v101, 1.0
  %v103 = vrcp.pop %v102
  %v104 = vmul.f32 %v102, %v103
  %v105 = vsub.f32 1.0, %v104
  %v106 = vmul.f32 %v103, %v105
  %v107 = vadd.f32 %v103, %v106
  %vm108 = vweird.f32 %v102
  %vm109 = vweird.f32 %v103
  %vm110 = vmor %vm108, %vm109
  %v111 = vsel %vm110, %v103, %v107
  %v112 = vand.u32 2147483647, %v102
  %vm113 = vcmp.eq.f32.partialorder %v112, 8.507059e+37
  %v114 = vand.u32 %v102, 2147483648
  %v115 = vor.u32 1.1754944e-38, %v114
  %v116 = vsel %vm113, %v115, %v111
  %v117 = vmul.f32 1.0, %v116
  %v118 = vmul.f32 %v96, %v117
  %v119 = vld [vmem:[%s3] sm:$0x3]
  %v120 = vunpack.c.l.bf16 %v119
  %v121 = vadd.f32 %v118, %v120
  %v122 = vpack.c.bf16 %v121, %v121
  %vm123 = vcmask 123904
  %124 = vst.msk [vmem:[%s4] sm:$0x3] %vm123, %v122
  // Predicated region
  $region18: #{cvae_forward.23} parent=0 // pred_check
    _
  $region19: #{cvae_forward.23} parent=0 // pred_check_branch
    %126 = sbr.rel (0) target = $region21
  $region20: #{cvae_forward.23} parent=0 // pred_region
    _
  $region21: #{cvae_forward.23} parent=0 // pred_fallthru
    _
  // Predicated region
  $region22: #{cvae_forward.23} parent=0 // pred_check
    _
  $region23: #{cvae_forward.23} parent=0 // pred_check_branch
    %128 = sbr.rel (0) target = $region25
  $region24: #{cvae_forward.23} parent=0 // pred_region
    _
  $region25: #{cvae_forward.23} parent=0 // pred_fallthru
    _

// kernel: cvae_forward.22
$region0: #{cvae_forward.22}
  #allocation0 [shape = 'u32[]', space=smem, size = 0x4, offset = 0x4, fixed_abs, tag = 'smem constant byte address 0x4 - core index']
  #allocation1 [shape = 'u32[72,128]{1,0:T(1,128)}', space=vmem, size = 0x9000, scoped, tag = 'internal scratch']
  %s0 = inlined_call_operand.vmem [shape: bf16[8,64], index: 0, kind: input, shape index: {}]
  %s1 = inlined_call_operand.vmem [shape: bf16[64,16], index: 1, kind: input, shape index: {}]
  %s2 = inlined_call_operand.vmem [shape: f32[1,16], index: 2, kind: input, shape index: {}]
  %s3 = inlined_call_operand.vmem [shape: bf16[8,16], index: 3, kind: input, shape index: {}]
  %s4 = inlined_call_operand.vmem [shape: bf16[8,16], index: 4, kind: output, shape index: {}]
  %s5 = sld [smem:[#allocation0]]
  $region26: #{cvae_forward.22} parent=0
    _
  %s7 = ssub.s32 1, %s5
  %s8 = scalar_select 0, %s7, %s5
  // Predicated region
  $region2: #{cvae_forward.22} parent=0 // pred_check
    _
  $region3: #{cvae_forward.22} parent=0 // pred_check_branch
    %10 = sbr.rel (0) target = $region5
  $region4: #{cvae_forward.22} parent=0 // pred_region
    _
  $region5: #{cvae_forward.22} parent=0 // pred_fallthru
    _
  // Predicated region
  $region6: #{cvae_forward.22} parent=0 // pred_check
    _
  $region7: #{cvae_forward.22} parent=0 // pred_check_branch
    %12 = sbr.rel (0) target = $region9
  $region8: #{cvae_forward.22} parent=0 // pred_region
    _
  $region9: #{cvae_forward.22} parent=0 // pred_fallthru
    _
  // Predicated region
  $region10: #{cvae_forward.22} parent=0 // pred_check
    _
  $region11: #{cvae_forward.22} parent=0 // pred_check_branch
    %14 = sbr.rel (0) target = $region13
  $region12: #{cvae_forward.22} parent=0 // pred_region
    _
  $region13: #{cvae_forward.22} parent=0 // pred_fallthru
    _
  // Predicated region
  $region14: #{cvae_forward.22} parent=0 // pred_check
    _
  $region15: #{cvae_forward.22} parent=0 // pred_check_branch
    %16 = sbr.rel (0) target = $region17
  $region16: #{cvae_forward.22} parent=0 // pred_region
    _
  $region17: #{cvae_forward.22} parent=0 // pred_fallthru
    _
  %v18 = vld [vmem:[%s0] sm:$0xf]
  %v19 = vld [vmem:[%s1] sm:$0xf]
  %v20 = vld [vmem:[%s1 + $0x4] sm:$0xf]
  %v21 = vld [vmem:[%s1 + $0x8] sm:$0xf]
  %v22 = vld [vmem:[%s1 + $0xc] sm:$0xf]
  %v23 = vld [vmem:[%s1 + $0x10] sm:$0xf]
  %v24 = vld [vmem:[%s1 + $0x14] sm:$0xf]
  %v25 = vld [vmem:[%s1 + $0x18] sm:$0xf]
  %v26 = vld [vmem:[%s1 + $0x1c] sm:$0xf]
  %v27 = vld [vmem:[%s2] sm:$0x1]
  %v29 = vperm.slane %v27, 0
  %v39 = vunpack.c.l.b16 %v19
  %v40 = vunpack.c.l.b16 %v20
  %v41 = vunpack.c.l.b16 %v21
  %v42 = vunpack.c.l.b16 %v22
  %v43 = vunpack.c.l.b16 %v23
  %v44 = vunpack.c.l.b16 %v24
  %v45 = vunpack.c.l.b16 %v25
  %v46 = vunpack.c.l.b16 %v26
  %v47 = vpack.c.b16 %v40, %v39
  %v48 = vpack.c.b16 %v42, %v41
  %v49 = vpack.c.b16 %v44, %v43
  %v50 = vpack.c.b16 %v46, %v45
  %vm55 = vcmask 523264
  %v57 = vsel %vm55, %v18, 0
  %59 = vmatpush.bf16.msra.mxu0 0
  %60 = vmatpush.bf16.msra.mxu0 0
  %61 = vmatpush.bf16.msra.mxu0 0
  %62 = vmatpush.bf16.msra.mxu0 0
  %63 = vmatpush.bf16.msra.mxu0 %v50
  %64 = vmatpush.bf16.msra.mxu0 %v49
  %65 = vmatpush.bf16.msra.mxu0 %v48
  %66 = vmatpush.bf16.msra.mxu0 %v47
  %67 = vmatmul.bf16.gmra.mxu0 %v57
  %v68 = vpop.f32.mrf.mxu0
  %v69 = vadd.f32 %v29, %v68
  %v70 = vpop.f32.mrf.mxu0
  %71 = vdwg.mxu0
  %v72 = vxor.u32 %v69, 2147483648
  %v73 = vmul.f32 %v72, 1.442695
  %v74 = vpow.pop %v73
  %v75 = vadd.f32 %v74, 1.0
  %v76 = vrcp.pop %v75
  %v77 = vmul.f32 %v75, %v76
  %v78 = vsub.f32 1.0, %v77
  %v79 = vmul.f32 %v76, %v78
  %v80 = vadd.f32 %v76, %v79
  %vm81 = vweird.f32 %v75
  %vm82 = vweird.f32 %v76
  %vm83 = vmor %vm81, %vm82
  %v84 = vsel %vm83, %v76, %v80
  %v85 = vand.u32 2147483647, %v75
  %vm86 = vcmp.eq.f32.partialorder %v85, 8.507059e+37
  %v87 = vand.u32 %v75, 2147483648
  %v88 = vor.u32 1.1754944e-38, %v87
  %v89 = vsel %vm86, %v88, %v84
  %v90 = vmul.f32 1.0, %v89
  %v91 = vmul.f32 %v69, %v90
  %v92 = vld [vmem:[%s3] sm:$0xf]
  %v93 = vunpack.c.l.bf16 %v92
  %v94 = vadd.f32 %v91, %v93
  %v95 = vpack.c.bf16 %v94, %v94
  %vm96 = vcmask 125952
  %97 = vst.msk [vmem:[%s4] sm:$0xf] %vm96, %v95
  // Predicated region
  $region18: #{cvae_forward.22} parent=0 // pred_check
    _
  $region19: #{cvae_forward.22} parent=0 // pred_check_branch
    %99 = sbr.rel (0) target = $region21
  $region20: #{cvae_forward.22} parent=0 // pred_region
    _
  $region21: #{cvae_forward.22} parent=0 // pred_fallthru
    _
  // Predicated region
  $region22: #{cvae_forward.22} parent=0 // pred_check
    _
  $region23: #{cvae_forward.22} parent=0 // pred_check_branch
    %101 = sbr.rel (0) target = $region25
  $region24: #{cvae_forward.22} parent=0 // pred_region
    _
  $region25: #{cvae_forward.22} parent=0 // pred_fallthru
    _

// kernel: cvae_forward.21
$region0: #{cvae_forward.21}
  #allocation0 [shape = 'u32[]', space=smem, size = 0x4, offset = 0x4, fixed_abs, tag = 'smem constant byte address 0x4 - core index']
  #allocation1 [shape = 'u32[72,128]{1,0:T(1,128)}', space=vmem, size = 0x9000, scoped, tag = 'internal scratch']
  %s0 = inlined_call_operand.vmem [shape: bf16[4,64], index: 0, kind: input, shape index: {}]
  %s1 = inlined_call_operand.vmem [shape: bf16[64,16], index: 1, kind: input, shape index: {}]
  %s2 = inlined_call_operand.vmem [shape: f32[1,16], index: 2, kind: input, shape index: {}]
  %s3 = inlined_call_operand.vmem [shape: bf16[4,16], index: 3, kind: input, shape index: {}]
  %s4 = inlined_call_operand.vmem [shape: bf16[4,16], index: 4, kind: output, shape index: {}]
  %s5 = sld [smem:[#allocation0]]
  $region26: #{cvae_forward.21} parent=0
    _
  %s7 = ssub.s32 1, %s5
  %s8 = scalar_select 0, %s7, %s5
  // Predicated region
  $region2: #{cvae_forward.21} parent=0 // pred_check
    _
  $region3: #{cvae_forward.21} parent=0 // pred_check_branch
    %10 = sbr.rel (0) target = $region5
  $region4: #{cvae_forward.21} parent=0 // pred_region
    _
  $region5: #{cvae_forward.21} parent=0 // pred_fallthru
    _
  // Predicated region
  $region6: #{cvae_forward.21} parent=0 // pred_check
    _
  $region7: #{cvae_forward.21} parent=0 // pred_check_branch
    %12 = sbr.rel (0) target = $region9
  $region8: #{cvae_forward.21} parent=0 // pred_region
    _
  $region9: #{cvae_forward.21} parent=0 // pred_fallthru
    _
  // Predicated region
  $region10: #{cvae_forward.21} parent=0 // pred_check
    _
  $region11: #{cvae_forward.21} parent=0 // pred_check_branch
    %14 = sbr.rel (0) target = $region13
  $region12: #{cvae_forward.21} parent=0 // pred_region
    _
  $region13: #{cvae_forward.21} parent=0 // pred_fallthru
    _
  // Predicated region
  $region14: #{cvae_forward.21} parent=0 // pred_check
    _
  $region15: #{cvae_forward.21} parent=0 // pred_check_branch
    %16 = sbr.rel (0) target = $region17
  $region16: #{cvae_forward.21} parent=0 // pred_region
    _
  $region17: #{cvae_forward.21} parent=0 // pred_fallthru
    _
  %v18 = vld [vmem:[%s0] sm:$0x3]
  %v19 = vld [vmem:[%s1] sm:$0xf]
  %v20 = vld [vmem:[%s1 + $0x4] sm:$0xf]
  %v21 = vld [vmem:[%s1 + $0x8] sm:$0xf]
  %v22 = vld [vmem:[%s1 + $0xc] sm:$0xf]
  %v23 = vld [vmem:[%s1 + $0x10] sm:$0xf]
  %v24 = vld [vmem:[%s1 + $0x14] sm:$0xf]
  %v25 = vld [vmem:[%s1 + $0x18] sm:$0xf]
  %v26 = vld [vmem:[%s1 + $0x1c] sm:$0xf]
  %v27 = vld [vmem:[%s2] sm:$0x1]
  %v29 = vperm.slane %v27, 0
  %v39 = vunpack.c.l.b16 %v19
  %v40 = vunpack.c.l.b16 %v20
  %v41 = vunpack.c.l.b16 %v21
  %v42 = vunpack.c.l.b16 %v22
  %v43 = vunpack.c.l.b16 %v23
  %v44 = vunpack.c.l.b16 %v24
  %v45 = vunpack.c.l.b16 %v25
  %v46 = vunpack.c.l.b16 %v26
  %v47 = vpack.c.b16 %v40, %v39
  %v48 = vpack.c.b16 %v42, %v41
  %v49 = vpack.c.b16 %v44, %v43
  %v50 = vpack.c.b16 %v46, %v45
  %vm55 = vcmask 523264
  %v57 = vsel %vm55, %v18, 0
  %59 = vmatpush.bf16.msra.mxu0 0
  %60 = vmatpush.bf16.msra.mxu0 0
  %61 = vmatpush.bf16.msra.mxu0 0
  %62 = vmatpush.bf16.msra.mxu0 0
  %63 = vmatpush.bf16.msra.mxu0 %v50
  %64 = vmatpush.bf16.msra.mxu0 %v49
  %65 = vmatpush.bf16.msra.mxu0 %v48
  %66 = vmatpush.bf16.msra.mxu0 %v47
  %67 = vmatmul.bf16.gmra.mxu0 %v57
  %v68 = vpop.f32.mrf.mxu0
  %v69 = vadd.f32 %v29, %v68
  %v70 = vpop.f32.mrf.mxu0
  %71 = vdwg.mxu0
  %v72 = vxor.u32 %v69, 2147483648
  %v73 = vmul.f32 %v72, 1.442695
  %v74 = vpow.pop %v73
  %v75 = vadd.f32 %v74, 1.0
  %v76 = vrcp.pop %v75
  %v77 = vmul.f32 %v75, %v76
  %v78 = vsub.f32 1.0, %v77
  %v79 = vmul.f32 %v76, %v78
  %v80 = vadd.f32 %v76, %v79
  %vm81 = vweird.f32 %v75
  %vm82 = vweird.f32 %v76
  %vm83 = vmor %vm81, %vm82
  %v84 = vsel %vm83, %v76, %v80
  %v85 = vand.u32 2147483647, %v75
  %vm86 = vcmp.eq.f32.partialorder %v85, 8.507059e+37
  %v87 = vand.u32 %v75, 2147483648
  %v88 = vor.u32 1.1754944e-38, %v87
  %v89 = vsel %vm86, %v88, %v84
  %v90 = vmul.f32 1.0, %v89
  %v91 = vmul.f32 %v69, %v90
  %v92 = vld [vmem:[%s3] sm:$0x3]
  %v93 = vunpack.c.l.bf16 %v92
  %v94 = vadd.f32 %v91, %v93
  %v95 = vpack.c.bf16 %v94, %v94
  %vm96 = vcmask 123904
  %97 = vst.msk [vmem:[%s4] sm:$0x3] %vm96, %v95
  // Predicated region
  $region18: #{cvae_forward.21} parent=0 // pred_check
    _
  $region19: #{cvae_forward.21} parent=0 // pred_check_branch
    %99 = sbr.rel (0) target = $region21
  $region20: #{cvae_forward.21} parent=0 // pred_region
    _
  $region21: #{cvae_forward.21} parent=0 // pred_fallthru
    _
  // Predicated region
  $region22: #{cvae_forward.21} parent=0 // pred_check
    _
  $region23: #{cvae_forward.21} parent=0 // pred_check_branch
    %101 = sbr.rel (0) target = $region25
  $region24: #{cvae_forward.21} parent=0 // pred_region
    _
  $region25: #{cvae_forward.21} parent=0 // pred_fallthru
    _

// kernel: cvae_forward.20
$region0: #{cvae_forward.20}
  #allocation0 [shape = 'u32[]', space=smem, size = 0x4, offset = 0x4, fixed_abs, tag = 'smem constant byte address 0x4 - core index']
  #allocation1 [shape = 'u32[72,128]{1,0:T(1,128)}', space=vmem, size = 0x9000, scoped, tag = 'internal scratch']
  %s0 = inlined_call_operand.vmem [shape: bf16[8,32], index: 0, kind: input, shape index: {}]
  %s1 = inlined_call_operand.vmem [shape: bf16[32,16], index: 1, kind: input, shape index: {}]
  %s2 = inlined_call_operand.vmem [shape: f32[1,16], index: 2, kind: input, shape index: {}]
  %s3 = inlined_call_operand.vmem [shape: bf16[8,16], index: 3, kind: input, shape index: {}]
  %s4 = inlined_call_operand.vmem [shape: bf16[8,16], index: 4, kind: output, shape index: {}]
  %s5 = sld [smem:[#allocation0]]
  $region26: #{cvae_forward.20} parent=0
    _
  %s7 = ssub.s32 1, %s5
  %s8 = scalar_select 0, %s7, %s5
  // Predicated region
  $region2: #{cvae_forward.20} parent=0 // pred_check
    _
  $region3: #{cvae_forward.20} parent=0 // pred_check_branch
    %10 = sbr.rel (0) target = $region5
  $region4: #{cvae_forward.20} parent=0 // pred_region
    _
  $region5: #{cvae_forward.20} parent=0 // pred_fallthru
    _
  // Predicated region
  $region6: #{cvae_forward.20} parent=0 // pred_check
    _
  $region7: #{cvae_forward.20} parent=0 // pred_check_branch
    %12 = sbr.rel (0) target = $region9
  $region8: #{cvae_forward.20} parent=0 // pred_region
    _
  $region9: #{cvae_forward.20} parent=0 // pred_fallthru
    _
  // Predicated region
  $region10: #{cvae_forward.20} parent=0 // pred_check
    _
  $region11: #{cvae_forward.20} parent=0 // pred_check_branch
    %14 = sbr.rel (0) target = $region13
  $region12: #{cvae_forward.20} parent=0 // pred_region
    _
  $region13: #{cvae_forward.20} parent=0 // pred_fallthru
    _
  // Predicated region
  $region14: #{cvae_forward.20} parent=0 // pred_check
    _
  $region15: #{cvae_forward.20} parent=0 // pred_check_branch
    %16 = sbr.rel (0) target = $region17
  $region16: #{cvae_forward.20} parent=0 // pred_region
    _
  $region17: #{cvae_forward.20} parent=0 // pred_fallthru
    _
  %v18 = vld [vmem:[%s0] sm:$0xf]
  %v19 = vld [vmem:[%s1] sm:$0xf]
  %v20 = vld [vmem:[%s1 + $0x4] sm:$0xf]
  %v21 = vld [vmem:[%s1 + $0x8] sm:$0xf]
  %v22 = vld [vmem:[%s1 + $0xc] sm:$0xf]
  %v23 = vld [vmem:[%s2] sm:$0x1]
  %v25 = vperm.slane %v23, 0
  %v31 = vunpack.c.l.b16 %v19
  %v32 = vunpack.c.l.b16 %v20
  %v33 = vunpack.c.l.b16 %v21
  %v34 = vunpack.c.l.b16 %v22
  %v35 = vpack.c.b16 %v32, %v31
  %v36 = vpack.c.b16 %v34, %v33
  %vm39 = vcmask 261120
  %v41 = vsel %vm39, %v18, 0
  %43 = vmatpush.bf16.msra.mxu0 0
  %44 = vmatpush.bf16.msra.mxu0 0
  %45 = vmatpush.bf16.msra.mxu0 0
  %46 = vmatpush.bf16.msra.mxu0 0
  %47 = vmatpush.bf16.msra.mxu0 0
  %48 = vmatpush.bf16.msra.mxu0 0
  %49 = vmatpush.bf16.msra.mxu0 %v36
  %50 = vmatpush.bf16.msra.mxu0 %v35
  %51 = vmatmul.bf16.gmra.mxu0 %v41
  %v52 = vpop.f32.mrf.mxu0
  %v53 = vadd.f32 %v25, %v52
  %v54 = vpop.f32.mrf.mxu0
  %55 = vdwg.mxu0
  %v56 = vxor.u32 %v53, 2147483648
  %v57 = vmul.f32 %v56, 1.442695
  %v58 = vpow.pop %v57
  %v59 = vadd.f32 %v58, 1.0
  %v60 = vrcp.pop %v59
  %v61 = vmul.f32 %v59, %v60
  %v62 = vsub.f32 1.0, %v61
  %v63 = vmul.f32 %v60, %v62
  %v64 = vadd.f32 %v60, %v63
  %vm65 = vweird.f32 %v59
  %vm66 = vweird.f32 %v60
  %vm67 = vmor %vm65, %vm66
  %v68 = vsel %vm67, %v60, %v64
  %v69 = vand.u32 2147483647, %v59
  %vm70 = vcmp.eq.f32.partialorder %v69, 8.507059e+37
  %v71 = vand.u32 %v59, 2147483648
  %v72 = vor.u32 1.1754944e-38, %v71
  %v73 = vsel %vm70, %v72, %v68
  %v74 = vmul.f32 1.0, %v73
  %v75 = vmul.f32 %v53, %v74
  %v76 = vld [vmem:[%s3] sm:$0xf]
  %v77 = vunpack.c.l.bf16 %v76
  %v78 = vadd.f32 %v75, %v77
  %v79 = vpack.c.bf16 %v78, %v78
  %vm80 = vcmask 125952
  %81 = vst.msk [vmem:[%s4] sm:$0xf] %vm80, %v79
  // Predicated region
  $region18: #{cvae_forward.20} parent=0 // pred_check
    _
  $region19: #{cvae_forward.20} parent=0 // pred_check_branch
    %83 = sbr.rel (0) target = $region21
  $region20: #{cvae_forward.20} parent=0 // pred_region
    _
  $region21: #{cvae_forward.20} parent=0 // pred_fallthru
    _
  // Predicated region
  $region22: #{cvae_forward.20} parent=0 // pred_check
    _
  $region23: #{cvae_forward.20} parent=0 // pred_check_branch
    %85 = sbr.rel (0) target = $region25
  $region24: #{cvae_forward.20} parent=0 // pred_region
    _
  $region25: #{cvae_forward.20} parent=0 // pred_fallthru
    _

// kernel: cvae_forward.27
$region0: #{cvae_forward.27}
  #allocation0 [shape = 'u32[]', space=smem, size = 0x4, offset = 0x4, fixed_abs, tag = 'smem constant byte address 0x4 - core index']
  #allocation1 [shape = 'u32[72,128]{1,0:T(1,128)}', space=vmem, size = 0x9000, scoped, tag = 'internal scratch']
  %s0 = inlined_call_operand.vmem [shape: bf16[16,64], index: 0, kind: input, shape index: {}]
  %s1 = inlined_call_operand.vmem [shape: bf16[64,8], index: 1, kind: input, shape index: {}]
  %s2 = inlined_call_operand.vmem [shape: f32[1,8], index: 2, kind: input, shape index: {}]
  %s3 = inlined_call_operand.vmem [shape: bf16[16,8], index: 3, kind: input, shape index: {}]
  %s4 = inlined_call_operand.vmem [shape: bf16[16,8], index: 4, kind: output, shape index: {}]
  %s5 = sld [smem:[#allocation0]]
  $region26: #{cvae_forward.27} parent=0
    _
  %s7 = ssub.s32 1, %s5
  %s8 = scalar_select 0, %s7, %s5
  // Predicated region
  $region2: #{cvae_forward.27} parent=0 // pred_check
    _
  $region3: #{cvae_forward.27} parent=0 // pred_check_branch
    %10 = sbr.rel (0) target = $region5
  $region4: #{cvae_forward.27} parent=0 // pred_region
    _
  $region5: #{cvae_forward.27} parent=0 // pred_fallthru
    _
  // Predicated region
  $region6: #{cvae_forward.27} parent=0 // pred_check
    _
  $region7: #{cvae_forward.27} parent=0 // pred_check_branch
    %12 = sbr.rel (0) target = $region9
  $region8: #{cvae_forward.27} parent=0 // pred_region
    _
  $region9: #{cvae_forward.27} parent=0 // pred_fallthru
    _
  // Predicated region
  $region10: #{cvae_forward.27} parent=0 // pred_check
    _
  $region11: #{cvae_forward.27} parent=0 // pred_check_branch
    %14 = sbr.rel (0) target = $region13
  $region12: #{cvae_forward.27} parent=0 // pred_region
    _
  $region13: #{cvae_forward.27} parent=0 // pred_fallthru
    _
  // Predicated region
  $region14: #{cvae_forward.27} parent=0 // pred_check
    _
  $region15: #{cvae_forward.27} parent=0 // pred_check_branch
    %16 = sbr.rel (0) target = $region17
  $region16: #{cvae_forward.27} parent=0 // pred_region
    _
  $region17: #{cvae_forward.27} parent=0 // pred_fallthru
    _
  %v18 = vld [vmem:[%s0] sm:$0xf]
  %v19 = vld [vmem:[%s0 + $0x4] sm:$0xf]
  %v20 = vld [vmem:[%s1] sm:$0xf]
  %v21 = vld [vmem:[%s1 + $0x4] sm:$0xf]
  %v22 = vld [vmem:[%s1 + $0x8] sm:$0xf]
  %v23 = vld [vmem:[%s1 + $0xc] sm:$0xf]
  %v24 = vld [vmem:[%s1 + $0x10] sm:$0xf]
  %v25 = vld [vmem:[%s1 + $0x14] sm:$0xf]
  %v26 = vld [vmem:[%s1 + $0x18] sm:$0xf]
  %v27 = vld [vmem:[%s1 + $0x1c] sm:$0xf]
  %v28 = vld [vmem:[%s2] sm:$0x1]
  %v30 = vperm.slane %v28, 0
  %v34 = vunpack.c.l.b16 %v18
  %v35 = vunpack.c.l.b16 %v19
  %v36 = vpack.c.b16 %v35, %v34
  %v45 = vunpack.c.l.b16 %v20
  %v46 = vunpack.c.l.b16 %v21
  %v47 = vunpack.c.l.b16 %v22
  %v48 = vunpack.c.l.b16 %v23
  %v49 = vunpack.c.l.b16 %v24
  %v50 = vunpack.c.l.b16 %v25
  %v51 = vunpack.c.l.b16 %v26
  %v52 = vunpack.c.l.b16 %v27
  %v53 = vpack.c.b16 %v46, %v45
  %v54 = vpack.c.b16 %v48, %v47
  %v55 = vpack.c.b16 %v50, %v49
  %v56 = vpack.c.b16 %v52, %v51
  %vm61 = vcmask 523264
  %v63 = vsel %vm61, %v36, 0
  %65 = vmatpush.bf16.msra.mxu0 0
  %66 = vmatpush.bf16.msra.mxu0 0
  %67 = vmatpush.bf16.msra.mxu0 0
  %68 = vmatpush.bf16.msra.mxu0 0
  %69 = vmatpush.bf16.msra.mxu0 %v56
  %70 = vmatpush.bf16.msra.mxu0 %v55
  %71 = vmatpush.bf16.msra.mxu0 %v54
  %72 = vmatpush.bf16.msra.mxu0 %v53
  %73 = vmatmul.bf16.gmra.mxu0 %v63
  %v74 = vpop.f32.mrf.mxu0
  %v75 = vadd.f32 %v30, %v74
  %v76 = vpop.f32.mrf.mxu0
  %v77 = vadd.f32 %v30, %v76
  %78 = vdwg.mxu0
  %v79 = vxor.u32 %v75, 2147483648
  %v80 = vxor.u32 %v77, 2147483648
  %v81 = vmul.f32 %v79, 1.442695
  %v82 = vpow.pop %v81
  %v83 = vmul.f32 %v80, 1.442695
  %v84 = vpow.pop %v83
  %v85 = vadd.f32 %v82, 1.0
  %v86 = vadd.f32 %v84, 1.0
  %v87 = vrcp.pop %v85
  %v88 = vmul.f32 %v85, %v87
  %v89 = vsub.f32 1.0, %v88
  %v90 = vmul.f32 %v87, %v89
  %v91 = vadd.f32 %v87, %v90
  %vm92 = vweird.f32 %v85
  %vm93 = vweird.f32 %v87
  %vm94 = vmor %vm92, %vm93
  %v95 = vsel %vm94, %v87, %v91
  %v96 = vand.u32 2147483647, %v85
  %vm97 = vcmp.eq.f32.partialorder %v96, 8.507059e+37
  %v98 = vand.u32 %v85, 2147483648
  %v99 = vor.u32 1.1754944e-38, %v98
  %v100 = vsel %vm97, %v99, %v95
  %v101 = vmul.f32 1.0, %v100
  %v102 = vrcp.pop %v86
  %v103 = vmul.f32 %v86, %v102
  %v104 = vsub.f32 1.0, %v103
  %v105 = vmul.f32 %v102, %v104
  %v106 = vadd.f32 %v102, %v105
  %vm107 = vweird.f32 %v86
  %vm108 = vweird.f32 %v102
  %vm109 = vmor %vm107, %vm108
  %v110 = vsel %vm109, %v102, %v106
  %v111 = vand.u32 2147483647, %v86
  %vm112 = vcmp.eq.f32.partialorder %v111, 8.507059e+37
  %v113 = vand.u32 %v86, 2147483648
  %v114 = vor.u32 1.1754944e-38, %v113
  %v115 = vsel %vm112, %v114, %v110
  %v116 = vmul.f32 1.0, %v115
  %v117 = vmul.f32 %v75, %v101
  %v118 = vmul.f32 %v77, %v116
  %v119 = vld [vmem:[%s3] sm:$0xf]
  %v120 = vld [vmem:[%s3 + $0x4] sm:$0xf]
  %v121 = vunpack.c.l.bf16 %v119
  %v122 = vunpack.c.l.bf16 %v120
  %v123 = vadd.f32 %v117, %v121
  %v124 = vadd.f32 %v118, %v122
  %v125 = vpack.c.bf16 %v123, %v123
  %v126 = vpack.c.bf16 %v124, %v124
  %vm127 = vcmask 60416
  %128 = vst.msk [vmem:[%s4] sm:$0xf] %vm127, %v125
  %129 = vst.msk [vmem:[%s4 + $0x4] sm:$0xf] %vm127, %v126
  // Predicated region
  $region18: #{cvae_forward.27} parent=0 // pred_check
    _
  $region19: #{cvae_forward.27} parent=0 // pred_check_branch
    %131 = sbr.rel (0) target = $region21
  $region20: #{cvae_forward.27} parent=0 // pred_region
    _
  $region21: #{cvae_forward.27} parent=0 // pred_fallthru
    _
  // Predicated region
  $region22: #{cvae_forward.27} parent=0 // pred_check
    _
  $region23: #{cvae_forward.27} parent=0 // pred_check_branch
    %133 = sbr.rel (0) target = $region25
  $region24: #{cvae_forward.27} parent=0 // pred_region
    _
  $region25: #{cvae_forward.27} parent=0 // pred_fallthru
    _

// kernel: cvae_forward.26
$region0: #{cvae_forward.26}
  #allocation0 [shape = 'u32[]', space=smem, size = 0x4, offset = 0x4, fixed_abs, tag = 'smem constant byte address 0x4 - core index']
  #allocation1 [shape = 'u32[72,128]{1,0:T(1,128)}', space=vmem, size = 0x9000, scoped, tag = 'internal scratch']
  %s0 = inlined_call_operand.vmem [shape: bf16[24,32], index: 0, kind: input, shape index: {}]
  %s1 = inlined_call_operand.vmem [shape: bf16[32,8], index: 1, kind: input, shape index: {}]
  %s2 = inlined_call_operand.vmem [shape: f32[1,8], index: 2, kind: input, shape index: {}]
  %s3 = inlined_call_operand.vmem [shape: bf16[24,8], index: 3, kind: input, shape index: {}]
  %s4 = inlined_call_operand.vmem [shape: bf16[24,8], index: 4, kind: output, shape index: {}]
  %s5 = sld [smem:[#allocation0]]
  $region26: #{cvae_forward.26} parent=0
    _
  %s7 = ssub.s32 1, %s5
  %s8 = scalar_select 0, %s7, %s5
  // Predicated region
  $region2: #{cvae_forward.26} parent=0 // pred_check
    _
  $region3: #{cvae_forward.26} parent=0 // pred_check_branch
    %10 = sbr.rel (0) target = $region5
  $region4: #{cvae_forward.26} parent=0 // pred_region
    _
  $region5: #{cvae_forward.26} parent=0 // pred_fallthru
    _
  // Predicated region
  $region6: #{cvae_forward.26} parent=0 // pred_check
    _
  $region7: #{cvae_forward.26} parent=0 // pred_check_branch
    %12 = sbr.rel (0) target = $region9
  $region8: #{cvae_forward.26} parent=0 // pred_region
    _
  $region9: #{cvae_forward.26} parent=0 // pred_fallthru
    _
  // Predicated region
  $region10: #{cvae_forward.26} parent=0 // pred_check
    _
  $region11: #{cvae_forward.26} parent=0 // pred_check_branch
    %14 = sbr.rel (0) target = $region13
  $region12: #{cvae_forward.26} parent=0 // pred_region
    _
  $region13: #{cvae_forward.26} parent=0 // pred_fallthru
    _
  // Predicated region
  $region14: #{cvae_forward.26} parent=0 // pred_check
    _
  $region15: #{cvae_forward.26} parent=0 // pred_check_branch
    %16 = sbr.rel (0) target = $region17
  $region16: #{cvae_forward.26} parent=0 // pred_region
    _
  $region17: #{cvae_forward.26} parent=0 // pred_fallthru
    _
  %v18 = vld [vmem:[%s0] sm:$0xf]
  %v19 = vld [vmem:[%s0 + $0x4] sm:$0xf]
  %v20 = vld [vmem:[%s0 + $0x8] sm:$0xf]
  %v21 = vld [vmem:[%s1] sm:$0xf]
  %v22 = vld [vmem:[%s1 + $0x4] sm:$0xf]
  %v23 = vld [vmem:[%s1 + $0x8] sm:$0xf]
  %v24 = vld [vmem:[%s1 + $0xc] sm:$0xf]
  %v25 = vld [vmem:[%s2] sm:$0x1]
  %v27 = vperm.slane %v25, 0
  %v32 = vunpack.c.l.b16 %v18
  %v33 = vunpack.c.l.b16 %v19
  %v34 = vunpack.c.l.b16 %v20
  %v35 = vpack.c.b16 %v33, %v32
  %v36 = vpack.c.b16 %v34, %v34
  %v41 = vunpack.c.l.b16 %v21
  %v42 = vunpack.c.l.b16 %v22
  %v43 = vunpack.c.l.b16 %v23
  %v44 = vunpack.c.l.b16 %v24
  %v45 = vpack.c.b16 %v42, %v41
  %v46 = vpack.c.b16 %v44, %v43
  %vm49 = vcmask 261120
  %v51 = vsel %vm49, %v35, 0
  %v54 = vsel %vm49, %v36, 0
  %56 = vmatpush.bf16.msra.mxu0 0
  %57 = vmatpush.bf16.msra.mxu0 0
  %58 = vmatpush.bf16.msra.mxu0 0
  %59 = vmatpush.bf16.msra.mxu0 0
  %60 = vmatpush.bf16.msra.mxu0 0
  %61 = vmatpush.bf16.msra.mxu0 0
  %62 = vmatpush.bf16.msra.mxu0 %v46
  %63 = vmatpush.bf16.msra.mxu0 %v45
  %64 = vmatmul.bf16.gmra.mxu0 %v51
  %v65 = vpop.f32.mrf.mxu0
  %v66 = vadd.f32 %v27, %v65
  %v67 = vpop.f32.mrf.mxu0
  %v68 = vadd.f32 %v27, %v67
  %69 = vmatmul.bf16.gmra.mxu0 %v54
  %v70 = vpop.f32.mrf.mxu0
  %v71 = vadd.f32 %v27, %v70
  %v72 = vpop.f32.mrf.mxu0
  %73 = vdwg.mxu0
  %v74 = vxor.u32 %v66, 2147483648
  %v75 = vxor.u32 %v68, 2147483648
  %v76 = vxor.u32 %v71, 2147483648
  %v77 = vmul.f32 %v74, 1.442695
  %v78 = vpow.pop %v77
  %v79 = vmul.f32 %v75, 1.442695
  %v80 = vpow.pop %v79
  %v81 = vmul.f32 %v76, 1.442695
  %v82 = vpow.pop %v81
  %v83 = vadd.f32 %v78, 1.0
  %v84 = vadd.f32 %v80, 1.0
  %v85 = vadd.f32 %v82, 1.0
  %v86 = vrcp.pop %v83
  %v87 = vmul.f32 %v83, %v86
  %v88 = vsub.f32 1.0, %v87
  %v89 = vmul.f32 %v86, %v88
  %v90 = vadd.f32 %v86, %v89
  %vm91 = vweird.f32 %v83
  %vm92 = vweird.f32 %v86
  %vm93 = vmor %vm91, %vm92
  %v94 = vsel %vm93, %v86, %v90
  %v95 = vand.u32 2147483647, %v83
  %vm96 = vcmp.eq.f32.partialorder %v95, 8.507059e+37
  %v97 = vand.u32 %v83, 2147483648
  %v98 = vor.u32 1.1754944e-38, %v97
  %v99 = vsel %vm96, %v98, %v94
  %v100 = vmul.f32 1.0, %v99
  %v101 = vrcp.pop %v84
  %v102 = vmul.f32 %v84, %v101
  %v103 = vsub.f32 1.0, %v102
  %v104 = vmul.f32 %v101, %v103
  %v105 = vadd.f32 %v101, %v104
  %vm106 = vweird.f32 %v84
  %vm107 = vweird.f32 %v101
  %vm108 = vmor %vm106, %vm107
  %v109 = vsel %vm108, %v101, %v105
  %v110 = vand.u32 2147483647, %v84
  %vm111 = vcmp.eq.f32.partialorder %v110, 8.507059e+37
  %v112 = vand.u32 %v84, 2147483648
  %v113 = vor.u32 1.1754944e-38, %v112
  %v114 = vsel %vm111, %v113, %v109
  %v115 = vmul.f32 1.0, %v114
  %v116 = vrcp.pop %v85
  %v117 = vmul.f32 %v85, %v116
  %v118 = vsub.f32 1.0, %v117
  %v119 = vmul.f32 %v116, %v118
  %v120 = vadd.f32 %v116, %v119
  %vm121 = vweird.f32 %v85
  %vm122 = vweird.f32 %v116
  %vm123 = vmor %vm121, %vm122
  %v124 = vsel %vm123, %v116, %v120
  %v125 = vand.u32 2147483647, %v85
  %vm126 = vcmp.eq.f32.partialorder %v125, 8.507059e+37
  %v127 = vand.u32 %v85, 2147483648
  %v128 = vor.u32 1.1754944e-38, %v127
  %v129 = vsel %vm126, %v128, %v124
  %v130 = vmul.f32 1.0, %v129
  %v131 = vmul.f32 %v66, %v100
  %v132 = vmul.f32 %v68, %v115
  %v133 = vmul.f32 %v71, %v130
  %v134 = vld [vmem:[%s3] sm:$0xf]
  %v135 = vld [vmem:[%s3 + $0x4] sm:$0xf]
  %v136 = vld [vmem:[%s3 + $0x8] sm:$0xf]
  %v137 = vunpack.c.l.bf16 %v134
  %v138 = vunpack.c.l.bf16 %v135
  %v139 = vunpack.c.l.bf16 %v136
  %v140 = vadd.f32 %v131, %v137
  %v141 = vadd.f32 %v132, %v138
  %v142 = vadd.f32 %v133, %v139
  %v143 = vpack.c.bf16 %v140, %v140
  %v144 = vpack.c.bf16 %v141, %v141
  %v145 = vpack.c.bf16 %v142, %v142
  %vm146 = vcmask 60416
  %147 = vst.msk [vmem:[%s4] sm:$0xf] %vm146, %v143
  %148 = vst.msk [vmem:[%s4 + $0x4] sm:$0xf] %vm146, %v144
  %149 = vst.msk [vmem:[%s4 + $0x8] sm:$0xf] %vm146, %v145
  // Predicated region
  $region18: #{cvae_forward.26} parent=0 // pred_check
    _
  $region19: #{cvae_forward.26} parent=0 // pred_check_branch
    %151 = sbr.rel (0) target = $region21
  $region20: #{cvae_forward.26} parent=0 // pred_region
    _
  $region21: #{cvae_forward.26} parent=0 // pred_fallthru
    _
  // Predicated region
  $region22: #{cvae_forward.26} parent=0 // pred_check
    _
  $region23: #{cvae_forward.26} parent=0 // pred_check_branch
    %153 = sbr.rel (0) target = $region25
  $region24: #{cvae_forward.26} parent=0 // pred_region
    _
  $region25: #{cvae_forward.26} parent=0 // pred_fallthru
    _

// kernel: cvae_forward.25
$region0: #{cvae_forward.25}
  #allocation0 [shape = 'u32[]', space=smem, size = 0x4, offset = 0x4, fixed_abs, tag = 'smem constant byte address 0x4 - core index']
  #allocation1 [shape = 'u32[72,128]{1,0:T(1,128)}', space=vmem, size = 0x9000, scoped, tag = 'internal scratch']
  %s0 = inlined_call_operand.vmem [shape: bf16[16,32], index: 0, kind: input, shape index: {}]
  %s1 = inlined_call_operand.vmem [shape: bf16[32,8], index: 1, kind: input, shape index: {}]
  %s2 = inlined_call_operand.vmem [shape: f32[1,8], index: 2, kind: input, shape index: {}]
  %s3 = inlined_call_operand.vmem [shape: bf16[16,8], index: 3, kind: input, shape index: {}]
  %s4 = inlined_call_operand.vmem [shape: bf16[16,8], index: 4, kind: output, shape index: {}]
  %s5 = sld [smem:[#allocation0]]
  $region26: #{cvae_forward.25} parent=0
    _
  %s7 = ssub.s32 1, %s5
  %s8 = scalar_select 0, %s7, %s5
  // Predicated region
  $region2: #{cvae_forward.25} parent=0 // pred_check
    _
  $region3: #{cvae_forward.25} parent=0 // pred_check_branch
    %10 = sbr.rel (0) target = $region5
  $region4: #{cvae_forward.25} parent=0 // pred_region
    _
  $region5: #{cvae_forward.25} parent=0 // pred_fallthru
    _
  // Predicated region
  $region6: #{cvae_forward.25} parent=0 // pred_check
    _
  $region7: #{cvae_forward.25} parent=0 // pred_check_branch
    %12 = sbr.rel (0) target = $region9
  $region8: #{cvae_forward.25} parent=0 // pred_region
    _
  $region9: #{cvae_forward.25} parent=0 // pred_fallthru
    _
  // Predicated region
  $region10: #{cvae_forward.25} parent=0 // pred_check
    _
  $region11: #{cvae_forward.25} parent=0 // pred_check_branch
    %14 = sbr.rel (0) target = $region13
  $region12: #{cvae_forward.25} parent=0 // pred_region
    _
  $region13: #{cvae_forward.25} parent=0 // pred_fallthru
    _
  // Predicated region
  $region14: #{cvae_forward.25} parent=0 // pred_check
    _
  $region15: #{cvae_forward.25} parent=0 // pred_check_branch
    %16 = sbr.rel (0) target = $region17
  $region16: #{cvae_forward.25} parent=0 // pred_region
    _
  $region17: #{cvae_forward.25} parent=0 // pred_fallthru
    _
  %v18 = vld [vmem:[%s0] sm:$0xf]
  %v19 = vld [vmem:[%s0 + $0x4] sm:$0xf]
  %v20 = vld [vmem:[%s1] sm:$0xf]
  %v21 = vld [vmem:[%s1 + $0x4] sm:$0xf]
  %v22 = vld [vmem:[%s1 + $0x8] sm:$0xf]
  %v23 = vld [vmem:[%s1 + $0xc] sm:$0xf]
  %v24 = vld [vmem:[%s2] sm:$0x1]
  %v26 = vperm.slane %v24, 0
  %v30 = vunpack.c.l.b16 %v18
  %v31 = vunpack.c.l.b16 %v19
  %v32 = vpack.c.b16 %v31, %v30
  %v37 = vunpack.c.l.b16 %v20
  %v38 = vunpack.c.l.b16 %v21
  %v39 = vunpack.c.l.b16 %v22
  %v40 = vunpack.c.l.b16 %v23
  %v41 = vpack.c.b16 %v38, %v37
  %v42 = vpack.c.b16 %v40, %v39
  %vm45 = vcmask 261120
  %v47 = vsel %vm45, %v32, 0
  %49 = vmatpush.bf16.msra.mxu0 0
  %50 = vmatpush.bf16.msra.mxu0 0
  %51 = vmatpush.bf16.msra.mxu0 0
  %52 = vmatpush.bf16.msra.mxu0 0
  %53 = vmatpush.bf16.msra.mxu0 0
  %54 = vmatpush.bf16.msra.mxu0 0
  %55 = vmatpush.bf16.msra.mxu0 %v42
  %56 = vmatpush.bf16.msra.mxu0 %v41
  %57 = vmatmul.bf16.gmra.mxu0 %v47
  %v58 = vpop.f32.mrf.mxu0
  %v59 = vadd.f32 %v26, %v58
  %v60 = vpop.f32.mrf.mxu0
  %v61 = vadd.f32 %v26, %v60
  %62 = vdwg.mxu0
  %v63 = vxor.u32 %v59, 2147483648
  %v64 = vxor.u32 %v61, 2147483648
  %v65 = vmul.f32 %v63, 1.442695
  %v66 = vpow.pop %v65
  %v67 = vmul.f32 %v64, 1.442695
  %v68 = vpow.pop %v67
  %v69 = vadd.f32 %v66, 1.0
  %v70 = vadd.f32 %v68, 1.0
  %v71 = vrcp.pop %v69
  %v72 = vmul.f32 %v69, %v71
  %v73 = vsub.f32 1.0, %v72
  %v74 = vmul.f32 %v71, %v73
  %v75 = vadd.f32 %v71, %v74
  %vm76 = vweird.f32 %v69
  %vm77 = vweird.f32 %v71
  %vm78 = vmor %vm76, %vm77
  %v79 = vsel %vm78, %v71, %v75
  %v80 = vand.u32 2147483647, %v69
  %vm81 = vcmp.eq.f32.partialorder %v80, 8.507059e+37
  %v82 = vand.u32 %v69, 2147483648
  %v83 = vor.u32 1.1754944e-38, %v82
  %v84 = vsel %vm81, %v83, %v79
  %v85 = vmul.f32 1.0, %v84
  %v86 = vrcp.pop %v70
  %v87 = vmul.f32 %v70, %v86
  %v88 = vsub.f32 1.0, %v87
  %v89 = vmul.f32 %v86, %v88
  %v90 = vadd.f32 %v86, %v89
  %vm91 = vweird.f32 %v70
  %vm92 = vweird.f32 %v86
  %vm93 = vmor %vm91, %vm92
  %v94 = vsel %vm93, %v86, %v90
  %v95 = vand.u32 2147483647, %v70
  %vm96 = vcmp.eq.f32.partialorder %v95, 8.507059e+37
  %v97 = vand.u32 %v70, 2147483648
  %v98 = vor.u32 1.1754944e-38, %v97
  %v99 = vsel %vm96, %v98, %v94
  %v100 = vmul.f32 1.0, %v99
  %v101 = vmul.f32 %v59, %v85
  %v102 = vmul.f32 %v61, %v100
  %v103 = vld [vmem:[%s3] sm:$0xf]
  %v104 = vld [vmem:[%s3 + $0x4] sm:$0xf]
  %v105 = vunpack.c.l.bf16 %v103
  %v106 = vunpack.c.l.bf16 %v104
  %v107 = vadd.f32 %v101, %v105
  %v108 = vadd.f32 %v102, %v106
  %v109 = vpack.c.bf16 %v107, %v107
  %v110 = vpack.c.bf16 %v108, %v108
  %vm111 = vcmask 60416
  %112 = vst.msk [vmem:[%s4] sm:$0xf] %vm111, %v109
  %113 = vst.msk [vmem:[%s4 + $0x4] sm:$0xf] %vm111, %v110
  // Predicated region
  $region18: #{cvae_forward.25} parent=0 // pred_check
    _
  $region19: #{cvae_forward.25} parent=0 // pred_check_branch
    %115 = sbr.rel (0) target = $region21
  $region20: #{cvae_forward.25} parent=0 // pred_region
    _
  $region21: #{cvae_forward.25} parent=0 // pred_fallthru
    _
  // Predicated region
  $region22: #{cvae_forward.25} parent=0 // pred_check
    _
  $region23: #{cvae_forward.25} parent=0 // pred_check_branch
    %117 = sbr.rel (0) target = $region25
  $region24: #{cvae_forward.25} parent=0 // pred_region
    _
  $region25: #{cvae_forward.25} parent=0 // pred_fallthru
    _

// kernel: cvae_forward.24
$region0: #{cvae_forward.24}
  #allocation0 [shape = 'u32[]', space=smem, size = 0x4, offset = 0x4, fixed_abs, tag = 'smem constant byte address 0x4 - core index']
  #allocation1 [shape = 'u32[72,128]{1,0:T(1,128)}', space=vmem, size = 0x9000, scoped, tag = 'internal scratch']
  %s0 = inlined_call_operand.vmem [shape: bf16[24,16], index: 0, kind: input, shape index: {}]
  %s1 = inlined_call_operand.vmem [shape: bf16[16,8], index: 1, kind: input, shape index: {}]
  %s2 = inlined_call_operand.vmem [shape: f32[1,8], index: 2, kind: input, shape index: {}]
  %s3 = inlined_call_operand.vmem [shape: bf16[24,8], index: 3, kind: input, shape index: {}]
  %s4 = inlined_call_operand.vmem [shape: bf16[24,8], index: 4, kind: output, shape index: {}]
  %s5 = sld [smem:[#allocation0]]
  $region26: #{cvae_forward.24} parent=0
    _
  %s7 = ssub.s32 1, %s5
  %s8 = scalar_select 0, %s7, %s5
  // Predicated region
  $region2: #{cvae_forward.24} parent=0 // pred_check
    _
  $region3: #{cvae_forward.24} parent=0 // pred_check_branch
    %10 = sbr.rel (0) target = $region5
  $region4: #{cvae_forward.24} parent=0 // pred_region
    _
  $region5: #{cvae_forward.24} parent=0 // pred_fallthru
    _
  // Predicated region
  $region6: #{cvae_forward.24} parent=0 // pred_check
    _
  $region7: #{cvae_forward.24} parent=0 // pred_check_branch
    %12 = sbr.rel (0) target = $region9
  $region8: #{cvae_forward.24} parent=0 // pred_region
    _
  $region9: #{cvae_forward.24} parent=0 // pred_fallthru
    _
  // Predicated region
  $region10: #{cvae_forward.24} parent=0 // pred_check
    _
  $region11: #{cvae_forward.24} parent=0 // pred_check_branch
    %14 = sbr.rel (0) target = $region13
  $region12: #{cvae_forward.24} parent=0 // pred_region
    _
  $region13: #{cvae_forward.24} parent=0 // pred_fallthru
    _
  // Predicated region
  $region14: #{cvae_forward.24} parent=0 // pred_check
    _
  $region15: #{cvae_forward.24} parent=0 // pred_check_branch
    %16 = sbr.rel (0) target = $region17
  $region16: #{cvae_forward.24} parent=0 // pred_region
    _
  $region17: #{cvae_forward.24} parent=0 // pred_fallthru
    _
  %v18 = vld [vmem:[%s0] sm:$0xf]
  %v19 = vld [vmem:[%s0 + $0x4] sm:$0xf]
  %v20 = vld [vmem:[%s0 + $0x8] sm:$0xf]
  %v21 = vld [vmem:[%s1] sm:$0xf]
  %v22 = vld [vmem:[%s1 + $0x4] sm:$0xf]
  %v23 = vld [vmem:[%s2] sm:$0x1]
  %v25 = vperm.slane %v23, 0
  %v30 = vunpack.c.l.b16 %v18
  %v31 = vunpack.c.l.b16 %v19
  %v32 = vunpack.c.l.b16 %v20
  %v33 = vpack.c.b16 %v31, %v30
  %v34 = vpack.c.b16 %v32, %v32
  %v37 = vunpack.c.l.b16 %v21
  %v38 = vunpack.c.l.b16 %v22
  %v39 = vpack.c.b16 %v38, %v37
  %vm41 = vcmask 130048
  %v43 = vsel %vm41, %v33, 0
  %v46 = vsel %vm41, %v34, 0
  %48 = vmatpush.bf16.msra.mxu0 0
  %49 = vmatpush.bf16.msra.mxu0 0
  %50 = vmatpush.bf16.msra.mxu0 0
  %51 = vmatpush.bf16.msra.mxu0 0
  %52 = vmatpush.bf16.msra.mxu0 0
  %53 = vmatpush.bf16.msra.mxu0 0
  %54 = vmatpush.bf16.msra.mxu0 0
  %55 = vmatpush.bf16.msra.mxu0 %v39
  %56 = vmatmul.bf16.gmra.mxu0 %v43
  %v57 = vpop.f32.mrf.mxu0
  %v58 = vadd.f32 %v25, %v57
  %v59 = vpop.f32.mrf.mxu0
  %v60 = vadd.f32 %v25, %v59
  %61 = vmatmul.bf16.gmra.mxu0 %v46
  %v62 = vpop.f32.mrf.mxu0
  %v63 = vadd.f32 %v25, %v62
  %v64 = vpop.f32.mrf.mxu0
  %65 = vdwg.mxu0
  %v66 = vxor.u32 %v58, 2147483648
  %v67 = vxor.u32 %v60, 2147483648
  %v68 = vxor.u32 %v63, 2147483648
  %v69 = vmul.f32 %v66, 1.442695
  %v70 = vpow.pop %v69
  %v71 = vmul.f32 %v67, 1.442695
  %v72 = vpow.pop %v71
  %v73 = vmul.f32 %v68, 1.442695
  %v74 = vpow.pop %v73
  %v75 = vadd.f32 %v70, 1.0
  %v76 = vadd.f32 %v72, 1.0
  %v77 = vadd.f32 %v74, 1.0
  %v78 = vrcp.pop %v75
  %v79 = vmul.f32 %v75, %v78
  %v80 = vsub.f32 1.0, %v79
  %v81 = vmul.f32 %v78, %v80
  %v82 = vadd.f32 %v78, %v81
  %vm83 = vweird.f32 %v75
  %vm84 = vweird.f32 %v78
  %vm85 = vmor %vm83, %vm84
  %v86 = vsel %vm85, %v78, %v82
  %v87 = vand.u32 2147483647, %v75
  %vm88 = vcmp.eq.f32.partialorder %v87, 8.507059e+37
  %v89 = vand.u32 %v75, 2147483648
  %v90 = vor.u32 1.1754944e-38, %v89
  %v91 = vsel %vm88, %v90, %v86
  %v92 = vmul.f32 1.0, %v91
  %v93 = vrcp.pop %v76
  %v94 = vmul.f32 %v76, %v93
  %v95 = vsub.f32 1.0, %v94
  %v96 = vmul.f32 %v93, %v95
  %v97 = vadd.f32 %v93, %v96
  %vm98 = vweird.f32 %v76
  %vm99 = vweird.f32 %v93
  %vm100 = vmor %vm98, %vm99
  %v101 = vsel %vm100, %v93, %v97
  %v102 = vand.u32 2147483647, %v76
  %vm103 = vcmp.eq.f32.partialorder %v102, 8.507059e+37
  %v104 = vand.u32 %v76, 2147483648
  %v105 = vor.u32 1.1754944e-38, %v104
  %v106 = vsel %vm103, %v105, %v101
  %v107 = vmul.f32 1.0, %v106
  %v108 = vrcp.pop %v77
  %v109 = vmul.f32 %v77, %v108
  %v110 = vsub.f32 1.0, %v109
  %v111 = vmul.f32 %v108, %v110
  %v112 = vadd.f32 %v108, %v111
  %vm113 = vweird.f32 %v77
  %vm114 = vweird.f32 %v108
  %vm115 = vmor %vm113, %vm114
  %v116 = vsel %vm115, %v108, %v112
  %v117 = vand.u32 2147483647, %v77
  %vm118 = vcmp.eq.f32.partialorder %v117, 8.507059e+37
  %v119 = vand.u32 %v77, 2147483648
  %v120 = vor.u32 1.1754944e-38, %v119
  %v121 = vsel %vm118, %v120, %v116
  %v122 = vmul.f32 1.0, %v121
  %v123 = vmul.f32 %v58, %v92
  %v124 = vmul.f32 %v60, %v107
  %v125 = vmul.f32 %v63, %v122
  %v126 = vld [vmem:[%s3] sm:$0xf]
  %v127 = vld [vmem:[%s3 + $0x4] sm:$0xf]
  %v128 = vld [vmem:[%s3 + $0x8] sm:$0xf]
  %v129 = vunpack.c.l.bf16 %v126
  %v130 = vunpack.c.l.bf16 %v127
  %v131 = vunpack.c.l.bf16 %v128
  %v132 = vadd.f32 %v123, %v129
  %v133 = vadd.f32 %v124, %v130
  %v134 = vadd.f32 %v125, %v131
  %v135 = vpack.c.bf16 %v132, %v132
  %v136 = vpack.c.bf16 %v133, %v133
  %v137 = vpack.c.bf16 %v134, %v134
  %vm138 = vcmask 60416
  %139 = vst.msk [vmem:[%s4] sm:$0xf] %vm138, %v135
  %140 = vst.msk [vmem:[%s4 + $0x4] sm:$0xf] %vm138, %v136
  %141 = vst.msk [vmem:[%s4 + $0x8] sm:$0xf] %vm138, %v137
  // Predicated region
  $region18: #{cvae_forward.24} parent=0 // pred_check
    _
  $region19: #{cvae_forward.24} parent=0 // pred_check_branch
    %143 = sbr.rel (0) target = $region21
  $region20: #{cvae_forward.24} parent=0 // pred_region
    _
  $region21: #{cvae_forward.24} parent=0 // pred_fallthru
    _
  // Predicated region
  $region22: #{cvae_forward.24} parent=0 // pred_check
    _
  $region23: #{cvae_forward.24} parent=0 // pred_check_branch
    %145 = sbr.rel (0) target = $region25
  $region24: #{cvae_forward.24} parent=0 // pred_region
    _
  $region25: #{cvae_forward.24} parent=0 // pred_fallthru
    _

// kernel: cvae_forward.31
$region0: #{cvae_forward.31}
  #allocation0 [shape = 'u32[]', space=smem, size = 0x4, offset = 0x4, fixed_abs, tag = 'smem constant byte address 0x4 - core index']
  #allocation1 [shape = 'u32[72,128]{1,0:T(1,128)}', space=vmem, size = 0x9000, scoped, tag = 'internal scratch']
  #allocation2 [shape = 'f32[1,1]{1,0:T(1,128)S(1)}', space=vmem, size = 0x200, scoped, tag = 'scoped memory for cvae_forward.31']
  %s0 = inlined_call_operand.vmem [shape: bf16[80,32], index: 0, kind: input, shape index: {}]
  %s1 = inlined_call_operand.vmem [shape: bf16[32,1], index: 1, kind: input, shape index: {}]
  %s2 = inlined_call_operand.<no memory space> [shape: f32[1,1], index: 2, kind: input, shape index: {}]
  %s3 = inlined_call_operand.vmem [shape: f32[80,1], index: 3, kind: output, shape index: {}]
  %s4 = sld [smem:[#allocation0]]
  $region22: #{cvae_forward.31} parent=0
    _
  %s6 = ssub.s32 1, %s4
  %s7 = scalar_select 0, %s6, %s4
  %v8 = vstv %s2
  %9 = vst [vmem:[#allocation2] sm:$0x1] %v8
  // Predicated region
  $region2: #{cvae_forward.31} parent=0 // pred_check
    _
  $region3: #{cvae_forward.31} parent=0 // pred_check_branch
    %11 = sbr.rel (0) target = $region5
  $region4: #{cvae_forward.31} parent=0 // pred_region
    _
  $region5: #{cvae_forward.31} parent=0 // pred_fallthru
    _
  // Predicated region
  $region6: #{cvae_forward.31} parent=0 // pred_check
    _
  $region7: #{cvae_forward.31} parent=0 // pred_check_branch
    %13 = sbr.rel (0) target = $region9
  $region8: #{cvae_forward.31} parent=0 // pred_region
    _
  $region9: #{cvae_forward.31} parent=0 // pred_fallthru
    _
  // Predicated region
  $region10: #{cvae_forward.31} parent=0 // pred_check
    _
  $region11: #{cvae_forward.31} parent=0 // pred_check_branch
    %15 = sbr.rel (0) target = $region13
  $region12: #{cvae_forward.31} parent=0 // pred_region
    _
  $region13: #{cvae_forward.31} parent=0 // pred_fallthru
    _
  %v17 = vld [vmem:[%s0] sm:$0xf]
  %v18 = vld [vmem:[%s0 + $0x4] sm:$0xf]
  %v19 = vld [vmem:[%s0 + $0x8] sm:$0xf]
  %v20 = vld [vmem:[%s0 + $0xc] sm:$0xf]
  %v21 = vld [vmem:[%s0 + $0x10] sm:$0xf]
  %v22 = vld [vmem:[%s0 + $0x14] sm:$0xf]
  %v23 = vld [vmem:[%s0 + $0x18] sm:$0xf]
  %v24 = vld [vmem:[%s0 + $0x1c] sm:$0xf]
  %v25 = vld [vmem:[%s0 + $0x20] sm:$0xf]
  %v26 = vld [vmem:[%s0 + $0x24] sm:$0xf]
  %v27 = vld [vmem:[%s1] sm:$0xf]
  %v28 = vld [vmem:[%s1 + $0x4] sm:$0xf]
  %v29 = vld [vmem:[%s1 + $0x8] sm:$0xf]
  %v30 = vld [vmem:[%s1 + $0xc] sm:$0xf]
  %v31 = vld [vmem:[#allocation2] sm:$0x1]
  %v33 = vperm.slane %v31, 0
  %v45 = vunpack.c.l.b16 %v17
  %v46 = vunpack.c.l.b16 %v18
  %v47 = vunpack.c.l.b16 %v19
  %v48 = vunpack.c.l.b16 %v20
  %v49 = vunpack.c.l.b16 %v21
  %v50 = vunpack.c.l.b16 %v22
  %v51 = vunpack.c.l.b16 %v23
  %v52 = vunpack.c.l.b16 %v24
  %v53 = vunpack.c.l.b16 %v25
  %v54 = vunpack.c.l.b16 %v26
  %v55 = vpack.c.b16 %v46, %v45
  %v56 = vpack.c.b16 %v48, %v47
  %v57 = vpack.c.b16 %v50, %v49
  %v58 = vpack.c.b16 %v52, %v51
  %v59 = vpack.c.b16 %v54, %v53
  %v64 = vunpack.c.l.b16 %v27
  %v65 = vunpack.c.l.b16 %v28
  %v66 = vunpack.c.l.b16 %v29
  %v67 = vunpack.c.l.b16 %v30
  %v68 = vpack.c.b16 %v65, %v64
  %v69 = vpack.c.b16 %v67, %v66
  %vm72 = vcmask 261120
  %v74 = vsel %vm72, %v55, 0
  %v77 = vsel %vm72, %v56, 0
  %v80 = vsel %vm72, %v57, 0
  %v83 = vsel %vm72, %v58, 0
  %v86 = vsel %vm72, %v59, 0
  %88 = vmatpush.bf16.msra.mxu0 0
  %89 = vmatpush.bf16.msra.mxu0 0
  %90 = vmatpush.bf16.msra.mxu0 0
  %91 = vmatpush.bf16.msra.mxu0 0
  %92 = vmatpush.bf16.msra.mxu0 0
  %93 = vmatpush.bf16.msra.mxu0 0
  %94 = vmatpush.bf16.msra.mxu0 %v69
  %95 = vmatpush.bf16.msra.mxu0 %v68
  %96 = vmatmul.bf16.gmra.mxu0 %v74
  %v97 = vpop.f32.mrf.mxu0
  %v98 = vadd.f32 %v33, %v97
  %v99 = vpop.f32.mrf.mxu0
  %v100 = vadd.f32 %v33, %v99
  %101 = vmatmul.bf16.gmra.mxu0 %v77
  %v102 = vpop.f32.mrf.mxu0
  %v103 = vadd.f32 %v33, %v102
  %v104 = vpop.f32.mrf.mxu0
  %v105 = vadd.f32 %v33, %v104
  %106 = vmatmul.bf16.gmra.mxu0 %v80
  %v107 = vpop.f32.mrf.mxu0
  %v108 = vadd.f32 %v33, %v107
  %v109 = vpop.f32.mrf.mxu0
  %v110 = vadd.f32 %v33, %v109
  %111 = vmatmul.bf16.gmra.mxu0 %v83
  %v112 = vpop.f32.mrf.mxu0
  %v113 = vadd.f32 %v33, %v112
  %v114 = vpop.f32.mrf.mxu0
  %v115 = vadd.f32 %v33, %v114
  %116 = vmatmul.bf16.gmra.mxu0 %v86
  %v117 = vpop.f32.mrf.mxu0
  %v118 = vadd.f32 %v33, %v117
  %v119 = vpop.f32.mrf.mxu0
  %v120 = vadd.f32 %v33, %v119
  %121 = vdwg.mxu0
  %v122 = vxor.u32 %v98, 2147483648
  %v123 = vxor.u32 %v100, 2147483648
  %v124 = vxor.u32 %v103, 2147483648
  %v125 = vxor.u32 %v105, 2147483648
  %v126 = vxor.u32 %v108, 2147483648
  %v127 = vxor.u32 %v110, 2147483648
  %v128 = vxor.u32 %v113, 2147483648
  %v129 = vxor.u32 %v115, 2147483648
  %v130 = vxor.u32 %v118, 2147483648
  %v131 = vxor.u32 %v120, 2147483648
  %v132 = vmul.f32 %v122, 1.442695
  %v133 = vpow.pop %v132
  %v134 = vmul.f32 %v123, 1.442695
  %v135 = vpow.pop %v134
  %v136 = vmul.f32 %v124, 1.442695
  %v137 = vpow.pop %v136
  %v138 = vmul.f32 %v125, 1.442695
  %v139 = vpow.pop %v138
  %v140 = vmul.f32 %v126, 1.442695
  %v141 = vpow.pop %v140
  %v142 = vmul.f32 %v127, 1.442695
  %v143 = vpow.pop %v142
  %v144 = vmul.f32 %v128, 1.442695
  %v145 = vpow.pop %v144
  %v146 = vmul.f32 %v129, 1.442695
  %v147 = vpow.pop %v146
  %v148 = vmul.f32 %v130, 1.442695
  %v149 = vpow.pop %v148
  %v150 = vmul.f32 %v131, 1.442695
  %v151 = vpow.pop %v150
  %v152 = vadd.f32 %v133, 1.0
  %v153 = vadd.f32 %v135, 1.0
  %v154 = vadd.f32 %v137, 1.0
  %v155 = vadd.f32 %v139, 1.0
  %v156 = vadd.f32 %v141, 1.0
  %v157 = vadd.f32 %v143, 1.0
  %v158 = vadd.f32 %v145, 1.0
  %v159 = vadd.f32 %v147, 1.0
  %v160 = vadd.f32 %v149, 1.0
  %v161 = vadd.f32 %v151, 1.0
  %v162 = vrcp.pop %v152
  %v163 = vmul.f32 %v152, %v162
  %v164 = vsub.f32 1.0, %v163
  %v165 = vmul.f32 %v162, %v164
  %v166 = vadd.f32 %v162, %v165
  %vm167 = vweird.f32 %v152
  %vm168 = vweird.f32 %v162
  %vm169 = vmor %vm167, %vm168
  %v170 = vsel %vm169, %v162, %v166
  %v171 = vand.u32 2147483647, %v152
  %vm172 = vcmp.eq.f32.partialorder %v171, 8.507059e+37
  %v173 = vand.u32 %v152, 2147483648
  %v174 = vor.u32 1.1754944e-38, %v173
  %v175 = vsel %vm172, %v174, %v170
  %v176 = vmul.f32 1.0, %v175
  %v177 = vrcp.pop %v153
  %v178 = vmul.f32 %v153, %v177
  %v179 = vsub.f32 1.0, %v178
  %v180 = vmul.f32 %v177, %v179
  %v181 = vadd.f32 %v177, %v180
  %vm182 = vweird.f32 %v153
  %vm183 = vweird.f32 %v177
  %vm184 = vmor %vm182, %vm183
  %v185 = vsel %vm184, %v177, %v181
  %v186 = vand.u32 2147483647, %v153
  %vm187 = vcmp.eq.f32.partialorder %v186, 8.507059e+37
  %v188 = vand.u32 %v153, 2147483648
  %v189 = vor.u32 1.1754944e-38, %v188
  %v190 = vsel %vm187, %v189, %v185
  %v191 = vmul.f32 1.0, %v190
  %v192 = vrcp.pop %v154
  %v193 = vmul.f32 %v154, %v192
  %v194 = vsub.f32 1.0, %v193
  %v195 = vmul.f32 %v192, %v194
  %v196 = vadd.f32 %v192, %v195
  %vm197 = vweird.f32 %v154
  %vm198 = vweird.f32 %v192
  %vm199 = vmor %vm197, %vm198
  %v200 = vsel %vm199, %v192, %v196
  %v201 = vand.u32 2147483647, %v154
  %vm202 = vcmp.eq.f32.partialorder %v201, 8.507059e+37
  %v203 = vand.u32 %v154, 2147483648
  %v204 = vor.u32 1.1754944e-38, %v203
  %v205 = vsel %vm202, %v204, %v200
  %v206 = vmul.f32 1.0, %v205
  %v207 = vrcp.pop %v155
  %v208 = vmul.f32 %v155, %v207
  %v209 = vsub.f32 1.0, %v208
  %v210 = vmul.f32 %v207, %v209
  %v211 = vadd.f32 %v207, %v210
  %vm212 = vweird.f32 %v155
  %vm213 = vweird.f32 %v207
  %vm214 = vmor %vm212, %vm213
  %v215 = vsel %vm214, %v207, %v211
  %v216 = vand.u32 2147483647, %v155
  %vm217 = vcmp.eq.f32.partialorder %v216, 8.507059e+37
  %v218 = vand.u32 %v155, 2147483648
  %v219 = vor.u32 1.1754944e-38, %v218
  %v220 = vsel %vm217, %v219, %v215
  %v221 = vmul.f32 1.0, %v220
  %v222 = vrcp.pop %v156
  %v223 = vmul.f32 %v156, %v222
  %v224 = vsub.f32 1.0, %v223
  %v225 = vmul.f32 %v222, %v224
  %v226 = vadd.f32 %v222, %v225
  %vm227 = vweird.f32 %v156
  %vm228 = vweird.f32 %v222
  %vm229 = vmor %vm227, %vm228
  %v230 = vsel %vm229, %v222, %v226
  %v231 = vand.u32 2147483647, %v156
  %vm232 = vcmp.eq.f32.partialorder %v231, 8.507059e+37
  %v233 = vand.u32 %v156, 2147483648
  %v234 = vor.u32 1.1754944e-38, %v233
  %v235 = vsel %vm232, %v234, %v230
  %v236 = vmul.f32 1.0, %v235
  %v237 = vrcp.pop %v157
  %v238 = vmul.f32 %v157, %v237
  %v239 = vsub.f32 1.0, %v238
  %v240 = vmul.f32 %v237, %v239
  %v241 = vadd.f32 %v237, %v240
  %vm242 = vweird.f32 %v157
  %vm243 = vweird.f32 %v237
  %vm244 = vmor %vm242, %vm243
  %v245 = vsel %vm244, %v237, %v241
  %v246 = vand.u32 2147483647, %v157
  %vm247 = vcmp.eq.f32.partialorder %v246, 8.507059e+37
  %v248 = vand.u32 %v157, 2147483648
  %v249 = vor.u32 1.1754944e-38, %v248
  %v250 = vsel %vm247, %v249, %v245
  %v251 = vmul.f32 1.0, %v250
  %v252 = vrcp.pop %v158
  %v253 = vmul.f32 %v158, %v252
  %v254 = vsub.f32 1.0, %v253
  %v255 = vmul.f32 %v252, %v254
  %v256 = vadd.f32 %v252, %v255
  %vm257 = vweird.f32 %v158
  %vm258 = vweird.f32 %v252
  %vm259 = vmor %vm257, %vm258
  %v260 = vsel %vm259, %v252, %v256
  %v261 = vand.u32 2147483647, %v158
  %vm262 = vcmp.eq.f32.partialorder %v261, 8.507059e+37
  %v263 = vand.u32 %v158, 2147483648
  %v264 = vor.u32 1.1754944e-38, %v263
  %v265 = vsel %vm262, %v264, %v260
  %v266 = vmul.f32 1.0, %v265
  %v267 = vrcp.pop %v159
  %v268 = vmul.f32 %v159, %v267
  %v269 = vsub.f32 1.0, %v268
  %v270 = vmul.f32 %v267, %v269
  %v271 = vadd.f32 %v267, %v270
  %vm272 = vweird.f32 %v159
  %vm273 = vweird.f32 %v267
  %vm274 = vmor %vm272, %vm273
  %v275 = vsel %vm274, %v267, %v271
  %v276 = vand.u32 2147483647, %v159
  %vm277 = vcmp.eq.f32.partialorder %v276, 8.507059e+37
  %v278 = vand.u32 %v159, 2147483648
  %v279 = vor.u32 1.1754944e-38, %v278
  %v280 = vsel %vm277, %v279, %v275
  %v281 = vmul.f32 1.0, %v280
  %v282 = vrcp.pop %v160
  %v283 = vmul.f32 %v160, %v282
  %v284 = vsub.f32 1.0, %v283
  %v285 = vmul.f32 %v282, %v284
  %v286 = vadd.f32 %v282, %v285
  %vm287 = vweird.f32 %v160
  %vm288 = vweird.f32 %v282
  %vm289 = vmor %vm287, %vm288
  %v290 = vsel %vm289, %v282, %v286
  %v291 = vand.u32 2147483647, %v160
  %vm292 = vcmp.eq.f32.partialorder %v291, 8.507059e+37
  %v293 = vand.u32 %v160, 2147483648
  %v294 = vor.u32 1.1754944e-38, %v293
  %v295 = vsel %vm292, %v294, %v290
  %v296 = vmul.f32 1.0, %v295
  %v297 = vrcp.pop %v161
  %v298 = vmul.f32 %v161, %v297
  %v299 = vsub.f32 1.0, %v298
  %v300 = vmul.f32 %v297, %v299
  %v301 = vadd.f32 %v297, %v300
  %vm302 = vweird.f32 %v161
  %vm303 = vweird.f32 %v297
  %vm304 = vmor %vm302, %vm303
  %v305 = vsel %vm304, %v297, %v301
  %v306 = vand.u32 2147483647, %v161
  %vm307 = vcmp.eq.f32.partialorder %v306, 8.507059e+37
  %v308 = vand.u32 %v161, 2147483648
  %v309 = vor.u32 1.1754944e-38, %v308
  %v310 = vsel %vm307, %v309, %v305
  %v311 = vmul.f32 1.0, %v310
  %vm312 = vcmask 7168
  %313 = vst.msk [vmem:[%s3] sm:$0xff] %vm312, %v176
  %314 = vst.msk [vmem:[%s3 + $0x8] sm:$0xff] %vm312, %v191
  %315 = vst.msk [vmem:[%s3 + $0x10] sm:$0xff] %vm312, %v206
  %316 = vst.msk [vmem:[%s3 + $0x18] sm:$0xff] %vm312, %v221
  %317 = vst.msk [vmem:[%s3 + $0x20] sm:$0xff] %vm312, %v236
  %318 = vst.msk [vmem:[%s3 + $0x28] sm:$0xff] %vm312, %v251
  %319 = vst.msk [vmem:[%s3 + $0x30] sm:$0xff] %vm312, %v266
  %320 = vst.msk [vmem:[%s3 + $0x38] sm:$0xff] %vm312, %v281
  %321 = vst.msk [vmem:[%s3 + $0x40] sm:$0xff] %vm312, %v296
  %322 = vst.msk [vmem:[%s3 + $0x48] sm:$0xff] %vm312, %v311
  // Predicated region
  $region14: #{cvae_forward.31} parent=0 // pred_check
    _
  $region15: #{cvae_forward.31} parent=0 // pred_check_branch
    %324 = sbr.rel (0) target = $region17
  $region16: #{cvae_forward.31} parent=0 // pred_region
    _
  $region17: #{cvae_forward.31} parent=0 // pred_fallthru
    _
  // Predicated region
  $region18: #{cvae_forward.31} parent=0 // pred_check
    _
  $region19: #{cvae_forward.31} parent=0 // pred_check_branch
    %326 = sbr.rel (0) target = $region21
  $region20: #{cvae_forward.31} parent=0 // pred_region
    _
  $region21: #{cvae_forward.31} parent=0 // pred_fallthru
    _

// kernel: cvae_forward.29
$region0: #{cvae_forward.29}
  #allocation0 [shape = 'u32[]', space=smem, size = 0x4, offset = 0x4, fixed_abs, tag = 'smem constant byte address 0x4 - core index']
  #allocation1 [shape = 'u32[72,128]{1,0:T(1,128)}', space=vmem, size = 0x9000, scoped, tag = 'internal scratch']
  #allocation2 [shape = 'f32[1,1]{1,0:T(1,128)S(1)}', space=vmem, size = 0x200, scoped, tag = 'scoped memory for cvae_forward.29']
  %s0 = inlined_call_operand.vmem [shape: bf16[80,16], index: 0, kind: input, shape index: {}]
  %s1 = inlined_call_operand.vmem [shape: bf16[16,1], index: 1, kind: input, shape index: {}]
  %s2 = inlined_call_operand.<no memory space> [shape: f32[1,1], index: 2, kind: input, shape index: {}]
  %s3 = inlined_call_operand.vmem [shape: f32[80,1], index: 3, kind: output, shape index: {}]
  %s4 = sld [smem:[#allocation0]]
  $region22: #{cvae_forward.29} parent=0
    _
  %s6 = ssub.s32 1, %s4
  %s7 = scalar_select 0, %s6, %s4
  %v8 = vstv %s2
  %9 = vst [vmem:[#allocation2] sm:$0x1] %v8
  // Predicated region
  $region2: #{cvae_forward.29} parent=0 // pred_check
    _
  $region3: #{cvae_forward.29} parent=0 // pred_check_branch
    %11 = sbr.rel (0) target = $region5
  $region4: #{cvae_forward.29} parent=0 // pred_region
    _
  $region5: #{cvae_forward.29} parent=0 // pred_fallthru
    _
  // Predicated region
  $region6: #{cvae_forward.29} parent=0 // pred_check
    _
  $region7: #{cvae_forward.29} parent=0 // pred_check_branch
    %13 = sbr.rel (0) target = $region9
  $region8: #{cvae_forward.29} parent=0 // pred_region
    _
  $region9: #{cvae_forward.29} parent=0 // pred_fallthru
    _
  // Predicated region
  $region10: #{cvae_forward.29} parent=0 // pred_check
    _
  $region11: #{cvae_forward.29} parent=0 // pred_check_branch
    %15 = sbr.rel (0) target = $region13
  $region12: #{cvae_forward.29} parent=0 // pred_region
    _
  $region13: #{cvae_forward.29} parent=0 // pred_fallthru
    _
  %v17 = vld [vmem:[%s0] sm:$0xf]
  %v18 = vld [vmem:[%s0 + $0x4] sm:$0xf]
  %v19 = vld [vmem:[%s0 + $0x8] sm:$0xf]
  %v20 = vld [vmem:[%s0 + $0xc] sm:$0xf]
  %v21 = vld [vmem:[%s0 + $0x10] sm:$0xf]
  %v22 = vld [vmem:[%s0 + $0x14] sm:$0xf]
  %v23 = vld [vmem:[%s0 + $0x18] sm:$0xf]
  %v24 = vld [vmem:[%s0 + $0x1c] sm:$0xf]
  %v25 = vld [vmem:[%s0 + $0x20] sm:$0xf]
  %v26 = vld [vmem:[%s0 + $0x24] sm:$0xf]
  %v27 = vld [vmem:[%s1] sm:$0xf]
  %v28 = vld [vmem:[%s1 + $0x4] sm:$0xf]
  %v29 = vld [vmem:[#allocation2] sm:$0x1]
  %v31 = vperm.slane %v29, 0
  %v43 = vunpack.c.l.b16 %v17
  %v44 = vunpack.c.l.b16 %v18
  %v45 = vunpack.c.l.b16 %v19
  %v46 = vunpack.c.l.b16 %v20
  %v47 = vunpack.c.l.b16 %v21
  %v48 = vunpack.c.l.b16 %v22
  %v49 = vunpack.c.l.b16 %v23
  %v50 = vunpack.c.l.b16 %v24
  %v51 = vunpack.c.l.b16 %v25
  %v52 = vunpack.c.l.b16 %v26
  %v53 = vpack.c.b16 %v44, %v43
  %v54 = vpack.c.b16 %v46, %v45
  %v55 = vpack.c.b16 %v48, %v47
  %v56 = vpack.c.b16 %v50, %v49
  %v57 = vpack.c.b16 %v52, %v51
  %v60 = vunpack.c.l.b16 %v27
  %v61 = vunpack.c.l.b16 %v28
  %v62 = vpack.c.b16 %v61, %v60
  %vm64 = vcmask 130048
  %v66 = vsel %vm64, %v53, 0
  %v69 = vsel %vm64, %v54, 0
  %v72 = vsel %vm64, %v55, 0
  %v75 = vsel %vm64, %v56, 0
  %v78 = vsel %vm64, %v57, 0
  %80 = vmatpush.bf16.msra.mxu0 0
  %81 = vmatpush.bf16.msra.mxu0 0
  %82 = vmatpush.bf16.msra.mxu0 0
  %83 = vmatpush.bf16.msra.mxu0 0
  %84 = vmatpush.bf16.msra.mxu0 0
  %85 = vmatpush.bf16.msra.mxu0 0
  %86 = vmatpush.bf16.msra.mxu0 0
  %87 = vmatpush.bf16.msra.mxu0 %v62
  %88 = vmatmul.bf16.gmra.mxu0 %v66
  %v89 = vpop.f32.mrf.mxu0
  %v90 = vadd.f32 %v31, %v89
  %v91 = vpop.f32.mrf.mxu0
  %v92 = vadd.f32 %v31, %v91
  %93 = vmatmul.bf16.gmra.mxu0 %v69
  %v94 = vpop.f32.mrf.mxu0
  %v95 = vadd.f32 %v31, %v94
  %v96 = vpop.f32.mrf.mxu0
  %v97 = vadd.f32 %v31, %v96
  %98 = vmatmul.bf16.gmra.mxu0 %v72
  %v99 = vpop.f32.mrf.mxu0
  %v100 = vadd.f32 %v31, %v99
  %v101 = vpop.f32.mrf.mxu0
  %v102 = vadd.f32 %v31, %v101
  %103 = vmatmul.bf16.gmra.mxu0 %v75
  %v104 = vpop.f32.mrf.mxu0
  %v105 = vadd.f32 %v31, %v104
  %v106 = vpop.f32.mrf.mxu0
  %v107 = vadd.f32 %v31, %v106
  %108 = vmatmul.bf16.gmra.mxu0 %v78
  %v109 = vpop.f32.mrf.mxu0
  %v110 = vadd.f32 %v31, %v109
  %v111 = vpop.f32.mrf.mxu0
  %v112 = vadd.f32 %v31, %v111
  %113 = vdwg.mxu0
  %v114 = vxor.u32 %v90, 2147483648
  %v115 = vxor.u32 %v92, 2147483648
  %v116 = vxor.u32 %v95, 2147483648
  %v117 = vxor.u32 %v97, 2147483648
  %v118 = vxor.u32 %v100, 2147483648
  %v119 = vxor.u32 %v102, 2147483648
  %v120 = vxor.u32 %v105, 2147483648
  %v121 = vxor.u32 %v107, 2147483648
  %v122 = vxor.u32 %v110, 2147483648
  %v123 = vxor.u32 %v112, 2147483648
  %v124 = vmul.f32 %v114, 1.442695
  %v125 = vpow.pop %v124
  %v126 = vmul.f32 %v115, 1.442695
  %v127 = vpow.pop %v126
  %v128 = vmul.f32 %v116, 1.442695
  %v129 = vpow.pop %v128
  %v130 = vmul.f32 %v117, 1.442695
  %v131 = vpow.pop %v130
  %v132 = vmul.f32 %v118, 1.442695
  %v133 = vpow.pop %v132
  %v134 = vmul.f32 %v119, 1.442695
  %v135 = vpow.pop %v134
  %v136 = vmul.f32 %v120, 1.442695
  %v137 = vpow.pop %v136
  %v138 = vmul.f32 %v121, 1.442695
  %v139 = vpow.pop %v138
  %v140 = vmul.f32 %v122, 1.442695
  %v141 = vpow.pop %v140
  %v142 = vmul.f32 %v123, 1.442695
  %v143 = vpow.pop %v142
  %v144 = vadd.f32 %v125, 1.0
  %v145 = vadd.f32 %v127, 1.0
  %v146 = vadd.f32 %v129, 1.0
  %v147 = vadd.f32 %v131, 1.0
  %v148 = vadd.f32 %v133, 1.0
  %v149 = vadd.f32 %v135, 1.0
  %v150 = vadd.f32 %v137, 1.0
  %v151 = vadd.f32 %v139, 1.0
  %v152 = vadd.f32 %v141, 1.0
  %v153 = vadd.f32 %v143, 1.0
  %v154 = vrcp.pop %v144
  %v155 = vmul.f32 %v144, %v154
  %v156 = vsub.f32 1.0, %v155
  %v157 = vmul.f32 %v154, %v156
  %v158 = vadd.f32 %v154, %v157
  %vm159 = vweird.f32 %v144
  %vm160 = vweird.f32 %v154
  %vm161 = vmor %vm159, %vm160
  %v162 = vsel %vm161, %v154, %v158
  %v163 = vand.u32 2147483647, %v144
  %vm164 = vcmp.eq.f32.partialorder %v163, 8.507059e+37
  %v165 = vand.u32 %v144, 2147483648
  %v166 = vor.u32 1.1754944e-38, %v165
  %v167 = vsel %vm164, %v166, %v162
  %v168 = vmul.f32 1.0, %v167
  %v169 = vrcp.pop %v145
  %v170 = vmul.f32 %v145, %v169
  %v171 = vsub.f32 1.0, %v170
  %v172 = vmul.f32 %v169, %v171
  %v173 = vadd.f32 %v169, %v172
  %vm174 = vweird.f32 %v145
  %vm175 = vweird.f32 %v169
  %vm176 = vmor %vm174, %vm175
  %v177 = vsel %vm176, %v169, %v173
  %v178 = vand.u32 2147483647, %v145
  %vm179 = vcmp.eq.f32.partialorder %v178, 8.507059e+37
  %v180 = vand.u32 %v145, 2147483648
  %v181 = vor.u32 1.1754944e-38, %v180
  %v182 = vsel %vm179, %v181, %v177
  %v183 = vmul.f32 1.0, %v182
  %v184 = vrcp.pop %v146
  %v185 = vmul.f32 %v146, %v184
  %v186 = vsub.f32 1.0, %v185
  %v187 = vmul.f32 %v184, %v186
  %v188 = vadd.f32 %v184, %v187
  %vm189 = vweird.f32 %v146
  %vm190 = vweird.f32 %v184
  %vm191 = vmor %vm189, %vm190
  %v192 = vsel %vm191, %v184, %v188
  %v193 = vand.u32 2147483647, %v146
  %vm194 = vcmp.eq.f32.partialorder %v193, 8.507059e+37
  %v195 = vand.u32 %v146, 2147483648
  %v196 = vor.u32 1.1754944e-38, %v195
  %v197 = vsel %vm194, %v196, %v192
  %v198 = vmul.f32 1.0, %v197
  %v199 = vrcp.pop %v147
  %v200 = vmul.f32 %v147, %v199
  %v201 = vsub.f32 1.0, %v200
  %v202 = vmul.f32 %v199, %v201
  %v203 = vadd.f32 %v199, %v202
  %vm204 = vweird.f32 %v147
  %vm205 = vweird.f32 %v199
  %vm206 = vmor %vm204, %vm205
  %v207 = vsel %vm206, %v199, %v203
  %v208 = vand.u32 2147483647, %v147
  %vm209 = vcmp.eq.f32.partialorder %v208, 8.507059e+37
  %v210 = vand.u32 %v147, 2147483648
  %v211 = vor.u32 1.1754944e-38, %v210
  %v212 = vsel %vm209, %v211, %v207
  %v213 = vmul.f32 1.0, %v212
  %v214 = vrcp.pop %v148
  %v215 = vmul.f32 %v148, %v214
  %v216 = vsub.f32 1.0, %v215
  %v217 = vmul.f32 %v214, %v216
  %v218 = vadd.f32 %v214, %v217
  %vm219 = vweird.f32 %v148
  %vm220 = vweird.f32 %v214
  %vm221 = vmor %vm219, %vm220
  %v222 = vsel %vm221, %v214, %v218
  %v223 = vand.u32 2147483647, %v148
  %vm224 = vcmp.eq.f32.partialorder %v223, 8.507059e+37
  %v225 = vand.u32 %v148, 2147483648
  %v226 = vor.u32 1.1754944e-38, %v225
  %v227 = vsel %vm224, %v226, %v222
  %v228 = vmul.f32 1.0, %v227
  %v229 = vrcp.pop %v149
  %v230 = vmul.f32 %v149, %v229
  %v231 = vsub.f32 1.0, %v230
  %v232 = vmul.f32 %v229, %v231
  %v233 = vadd.f32 %v229, %v232
  %vm234 = vweird.f32 %v149
  %vm235 = vweird.f32 %v229
  %vm236 = vmor %vm234, %vm235
  %v237 = vsel %vm236, %v229, %v233
  %v238 = vand.u32 2147483647, %v149
  %vm239 = vcmp.eq.f32.partialorder %v238, 8.507059e+37
  %v240 = vand.u32 %v149, 2147483648
  %v241 = vor.u32 1.1754944e-38, %v240
  %v242 = vsel %vm239, %v241, %v237
  %v243 = vmul.f32 1.0, %v242
  %v244 = vrcp.pop %v150
  %v245 = vmul.f32 %v150, %v244
  %v246 = vsub.f32 1.0, %v245
  %v247 = vmul.f32 %v244, %v246
  %v248 = vadd.f32 %v244, %v247
  %vm249 = vweird.f32 %v150
  %vm250 = vweird.f32 %v244
  %vm251 = vmor %vm249, %vm250
  %v252 = vsel %vm251, %v244, %v248
  %v253 = vand.u32 2147483647, %v150
  %vm254 = vcmp.eq.f32.partialorder %v253, 8.507059e+37
  %v255 = vand.u32 %v150, 2147483648
  %v256 = vor.u32 1.1754944e-38, %v255
  %v257 = vsel %vm254, %v256, %v252
  %v258 = vmul.f32 1.0, %v257
  %v259 = vrcp.pop %v151
  %v260 = vmul.f32 %v151, %v259
  %v261 = vsub.f32 1.0, %v260
  %v262 = vmul.f32 %v259, %v261
  %v263 = vadd.f32 %v259, %v262
  %vm264 = vweird.f32 %v151
  %vm265 = vweird.f32 %v259
  %vm266 = vmor %vm264, %vm265
  %v267 = vsel %vm266, %v259, %v263
  %v268 = vand.u32 2147483647, %v151
  %vm269 = vcmp.eq.f32.partialorder %v268, 8.507059e+37
  %v270 = vand.u32 %v151, 2147483648
  %v271 = vor.u32 1.1754944e-38, %v270
  %v272 = vsel %vm269, %v271, %v267
  %v273 = vmul.f32 1.0, %v272
  %v274 = vrcp.pop %v152
  %v275 = vmul.f32 %v152, %v274
  %v276 = vsub.f32 1.0, %v275
  %v277 = vmul.f32 %v274, %v276
  %v278 = vadd.f32 %v274, %v277
  %vm279 = vweird.f32 %v152
  %vm280 = vweird.f32 %v274
  %vm281 = vmor %vm279, %vm280
  %v282 = vsel %vm281, %v274, %v278
  %v283 = vand.u32 2147483647, %v152
  %vm284 = vcmp.eq.f32.partialorder %v283, 8.507059e+37
  %v285 = vand.u32 %v152, 2147483648
  %v286 = vor.u32 1.1754944e-38, %v285
  %v287 = vsel %vm284, %v286, %v282
  %v288 = vmul.f32 1.0, %v287
  %v289 = vrcp.pop %v153
  %v290 = vmul.f32 %v153, %v289
  %v291 = vsub.f32 1.0, %v290
  %v292 = vmul.f32 %v289, %v291
  %v293 = vadd.f32 %v289, %v292
  %vm294 = vweird.f32 %v153
  %vm295 = vweird.f32 %v289
  %vm296 = vmor %vm294, %vm295
  %v297 = vsel %vm296, %v289, %v293
  %v298 = vand.u32 2147483647, %v153
  %vm299 = vcmp.eq.f32.partialorder %v298, 8.507059e+37
  %v300 = vand.u32 %v153, 2147483648
  %v301 = vor.u32 1.1754944e-38, %v300
  %v302 = vsel %vm299, %v301, %v297
  %v303 = vmul.f32 1.0, %v302
  %vm304 = vcmask 7168
  %305 = vst.msk [vmem:[%s3] sm:$0xff] %vm304, %v168
  %306 = vst.msk [vmem:[%s3 + $0x8] sm:$0xff] %vm304, %v183
  %307 = vst.msk [vmem:[%s3 + $0x10] sm:$0xff] %vm304, %v198
  %308 = vst.msk [vmem:[%s3 + $0x18] sm:$0xff] %vm304, %v213
  %309 = vst.msk [vmem:[%s3 + $0x20] sm:$0xff] %vm304, %v228
  %310 = vst.msk [vmem:[%s3 + $0x28] sm:$0xff] %vm304, %v243
  %311 = vst.msk [vmem:[%s3 + $0x30] sm:$0xff] %vm304, %v258
  %312 = vst.msk [vmem:[%s3 + $0x38] sm:$0xff] %vm304, %v273
  %313 = vst.msk [vmem:[%s3 + $0x40] sm:$0xff] %vm304, %v288
  %314 = vst.msk [vmem:[%s3 + $0x48] sm:$0xff] %vm304, %v303
  // Predicated region
  $region14: #{cvae_forward.29} parent=0 // pred_check
    _
  $region15: #{cvae_forward.29} parent=0 // pred_check_branch
    %316 = sbr.rel (0) target = $region17
  $region16: #{cvae_forward.29} parent=0 // pred_region
    _
  $region17: #{cvae_forward.29} parent=0 // pred_fallthru
    _
  // Predicated region
  $region18: #{cvae_forward.29} parent=0 // pred_check
    _
  $region19: #{cvae_forward.29} parent=0 // pred_check_branch
    %318 = sbr.rel (0) target = $region21
  $region20: #{cvae_forward.29} parent=0 // pred_region
    _
  $region21: #{cvae_forward.29} parent=0 // pred_fallthru
    _

// kernel: cvae_forward.28
$region0: #{cvae_forward.28}
  #allocation0 [shape = 'u32[]', space=smem, size = 0x4, offset = 0x4, fixed_abs, tag = 'smem constant byte address 0x4 - core index']
  #allocation1 [shape = 'u32[72,128]{1,0:T(1,128)}', space=vmem, size = 0x9000, scoped, tag = 'internal scratch']
  #allocation2 [shape = 'f32[1,1]{1,0:T(1,128)S(1)}', space=vmem, size = 0x200, scoped, tag = 'scoped memory for cvae_forward.28']
  %s0 = inlined_call_operand.vmem [shape: bf16[80,8], index: 0, kind: input, shape index: {}]
  %s1 = inlined_call_operand.vmem [shape: bf16[8,1], index: 1, kind: input, shape index: {}]
  %s2 = inlined_call_operand.<no memory space> [shape: f32[1,1], index: 2, kind: input, shape index: {}]
  %s3 = inlined_call_operand.vmem [shape: f32[80,1], index: 3, kind: output, shape index: {}]
  %s4 = sld [smem:[#allocation0]]
  $region22: #{cvae_forward.28} parent=0
    _
  %s6 = ssub.s32 1, %s4
  %s7 = scalar_select 0, %s6, %s4
  %v8 = vstv %s2
  %9 = vst [vmem:[#allocation2] sm:$0x1] %v8
  // Predicated region
  $region2: #{cvae_forward.28} parent=0 // pred_check
    _
  $region3: #{cvae_forward.28} parent=0 // pred_check_branch
    %11 = sbr.rel (0) target = $region5
  $region4: #{cvae_forward.28} parent=0 // pred_region
    _
  $region5: #{cvae_forward.28} parent=0 // pred_fallthru
    _
  // Predicated region
  $region6: #{cvae_forward.28} parent=0 // pred_check
    _
  $region7: #{cvae_forward.28} parent=0 // pred_check_branch
    %13 = sbr.rel (0) target = $region9
  $region8: #{cvae_forward.28} parent=0 // pred_region
    _
  $region9: #{cvae_forward.28} parent=0 // pred_fallthru
    _
  // Predicated region
  $region10: #{cvae_forward.28} parent=0 // pred_check
    _
  $region11: #{cvae_forward.28} parent=0 // pred_check_branch
    %15 = sbr.rel (0) target = $region13
  $region12: #{cvae_forward.28} parent=0 // pred_region
    _
  $region13: #{cvae_forward.28} parent=0 // pred_fallthru
    _
  %v17 = vld [vmem:[%s0] sm:$0xf]
  %v18 = vld [vmem:[%s0 + $0x4] sm:$0xf]
  %v19 = vld [vmem:[%s0 + $0x8] sm:$0xf]
  %v20 = vld [vmem:[%s0 + $0xc] sm:$0xf]
  %v21 = vld [vmem:[%s0 + $0x10] sm:$0xf]
  %v22 = vld [vmem:[%s0 + $0x14] sm:$0xf]
  %v23 = vld [vmem:[%s0 + $0x18] sm:$0xf]
  %v24 = vld [vmem:[%s0 + $0x1c] sm:$0xf]
  %v25 = vld [vmem:[%s0 + $0x20] sm:$0xf]
  %v26 = vld [vmem:[%s0 + $0x24] sm:$0xf]
  %v27 = vld [vmem:[%s1] sm:$0xf]
  %v28 = vld [vmem:[#allocation2] sm:$0x1]
  %v30 = vperm.slane %v28, 0
  %v42 = vunpack.c.l.b16 %v17
  %v43 = vunpack.c.l.b16 %v18
  %v44 = vunpack.c.l.b16 %v19
  %v45 = vunpack.c.l.b16 %v20
  %v46 = vunpack.c.l.b16 %v21
  %v47 = vunpack.c.l.b16 %v22
  %v48 = vunpack.c.l.b16 %v23
  %v49 = vunpack.c.l.b16 %v24
  %v50 = vunpack.c.l.b16 %v25
  %v51 = vunpack.c.l.b16 %v26
  %v52 = vpack.c.b16 %v43, %v42
  %v53 = vpack.c.b16 %v45, %v44
  %v54 = vpack.c.b16 %v47, %v46
  %v55 = vpack.c.b16 %v49, %v48
  %v56 = vpack.c.b16 %v51, %v50
  %vm57 = vcmask 64512
  %v59 = vsel %vm57, %v52, 0
  %v62 = vsel %vm57, %v53, 0
  %v65 = vsel %vm57, %v54, 0
  %v68 = vsel %vm57, %v55, 0
  %v71 = vsel %vm57, %v56, 0
  %vm73 = vcmask 1043456
  %v75 = vsel %vm73, %v27, 0
  %77 = vmatpush.bf16.msra.mxu0 0
  %78 = vmatpush.bf16.msra.mxu0 0
  %79 = vmatpush.bf16.msra.mxu0 0
  %80 = vmatpush.bf16.msra.mxu0 0
  %81 = vmatpush.bf16.msra.mxu0 0
  %82 = vmatpush.bf16.msra.mxu0 0
  %83 = vmatpush.bf16.msra.mxu0 0
  %84 = vmatpush.bf16.msra.mxu0 %v75
  %85 = vmatmul.bf16.gmra.mxu0 %v59
  %v86 = vpop.f32.mrf.mxu0
  %v87 = vadd.f32 %v30, %v86
  %v88 = vpop.f32.mrf.mxu0
  %v89 = vadd.f32 %v30, %v88
  %90 = vmatmul.bf16.gmra.mxu0 %v62
  %v91 = vpop.f32.mrf.mxu0
  %v92 = vadd.f32 %v30, %v91
  %v93 = vpop.f32.mrf.mxu0
  %v94 = vadd.f32 %v30, %v93
  %95 = vmatmul.bf16.gmra.mxu0 %v65
  %v96 = vpop.f32.mrf.mxu0
  %v97 = vadd.f32 %v30, %v96
  %v98 = vpop.f32.mrf.mxu0
  %v99 = vadd.f32 %v30, %v98
  %100 = vmatmul.bf16.gmra.mxu0 %v68
  %v101 = vpop.f32.mrf.mxu0
  %v102 = vadd.f32 %v30, %v101
  %v103 = vpop.f32.mrf.mxu0
  %v104 = vadd.f32 %v30, %v103
  %105 = vmatmul.bf16.gmra.mxu0 %v71
  %v106 = vpop.f32.mrf.mxu0
  %v107 = vadd.f32 %v30, %v106
  %v108 = vpop.f32.mrf.mxu0
  %v109 = vadd.f32 %v30, %v108
  %110 = vdwg.mxu0
  %v111 = vxor.u32 %v87, 2147483648
  %v112 = vxor.u32 %v89, 2147483648
  %v113 = vxor.u32 %v92, 2147483648
  %v114 = vxor.u32 %v94, 2147483648
  %v115 = vxor.u32 %v97, 2147483648
  %v116 = vxor.u32 %v99, 2147483648
  %v117 = vxor.u32 %v102, 2147483648
  %v118 = vxor.u32 %v104, 2147483648
  %v119 = vxor.u32 %v107, 2147483648
  %v120 = vxor.u32 %v109, 2147483648
  %v121 = vmul.f32 %v111, 1.442695
  %v122 = vpow.pop %v121
  %v123 = vmul.f32 %v112, 1.442695
  %v124 = vpow.pop %v123
  %v125 = vmul.f32 %v113, 1.442695
  %v126 = vpow.pop %v125
  %v127 = vmul.f32 %v114, 1.442695
  %v128 = vpow.pop %v127
  %v129 = vmul.f32 %v115, 1.442695
  %v130 = vpow.pop %v129
  %v131 = vmul.f32 %v116, 1.442695
  %v132 = vpow.pop %v131
  %v133 = vmul.f32 %v117, 1.442695
  %v134 = vpow.pop %v133
  %v135 = vmul.f32 %v118, 1.442695
  %v136 = vpow.pop %v135
  %v137 = vmul.f32 %v119, 1.442695
  %v138 = vpow.pop %v137
  %v139 = vmul.f32 %v120, 1.442695
  %v140 = vpow.pop %v139
  %v141 = vadd.f32 %v122, 1.0
  %v142 = vadd.f32 %v124, 1.0
  %v143 = vadd.f32 %v126, 1.0
  %v144 = vadd.f32 %v128, 1.0
  %v145 = vadd.f32 %v130, 1.0
  %v146 = vadd.f32 %v132, 1.0
  %v147 = vadd.f32 %v134, 1.0
  %v148 = vadd.f32 %v136, 1.0
  %v149 = vadd.f32 %v138, 1.0
  %v150 = vadd.f32 %v140, 1.0
  %v151 = vrcp.pop %v141
  %v152 = vmul.f32 %v141, %v151
  %v153 = vsub.f32 1.0, %v152
  %v154 = vmul.f32 %v151, %v153
  %v155 = vadd.f32 %v151, %v154
  %vm156 = vweird.f32 %v141
  %vm157 = vweird.f32 %v151
  %vm158 = vmor %vm156, %vm157
  %v159 = vsel %vm158, %v151, %v155
  %v160 = vand.u32 2147483647, %v141
  %vm161 = vcmp.eq.f32.partialorder %v160, 8.507059e+37
  %v162 = vand.u32 %v141, 2147483648
  %v163 = vor.u32 1.1754944e-38, %v162
  %v164 = vsel %vm161, %v163, %v159
  %v165 = vmul.f32 1.0, %v164
  %v166 = vrcp.pop %v142
  %v167 = vmul.f32 %v142, %v166
  %v168 = vsub.f32 1.0, %v167
  %v169 = vmul.f32 %v166, %v168
  %v170 = vadd.f32 %v166, %v169
  %vm171 = vweird.f32 %v142
  %vm172 = vweird.f32 %v166
  %vm173 = vmor %vm171, %vm172
  %v174 = vsel %vm173, %v166, %v170
  %v175 = vand.u32 2147483647, %v142
  %vm176 = vcmp.eq.f32.partialorder %v175, 8.507059e+37
  %v177 = vand.u32 %v142, 2147483648
  %v178 = vor.u32 1.1754944e-38, %v177
  %v179 = vsel %vm176, %v178, %v174
  %v180 = vmul.f32 1.0, %v179
  %v181 = vrcp.pop %v143
  %v182 = vmul.f32 %v143, %v181
  %v183 = vsub.f32 1.0, %v182
  %v184 = vmul.f32 %v181, %v183
  %v185 = vadd.f32 %v181, %v184
  %vm186 = vweird.f32 %v143
  %vm187 = vweird.f32 %v181
  %vm188 = vmor %vm186, %vm187
  %v189 = vsel %vm188, %v181, %v185
  %v190 = vand.u32 2147483647, %v143
  %vm191 = vcmp.eq.f32.partialorder %v190, 8.507059e+37
  %v192 = vand.u32 %v143, 2147483648
  %v193 = vor.u32 1.1754944e-38, %v192
  %v194 = vsel %vm191, %v193, %v189
  %v195 = vmul.f32 1.0, %v194
  %v196 = vrcp.pop %v144
  %v197 = vmul.f32 %v144, %v196
  %v198 = vsub.f32 1.0, %v197
  %v199 = vmul.f32 %v196, %v198
  %v200 = vadd.f32 %v196, %v199
  %vm201 = vweird.f32 %v144
  %vm202 = vweird.f32 %v196
  %vm203 = vmor %vm201, %vm202
  %v204 = vsel %vm203, %v196, %v200
  %v205 = vand.u32 2147483647, %v144
  %vm206 = vcmp.eq.f32.partialorder %v205, 8.507059e+37
  %v207 = vand.u32 %v144, 2147483648
  %v208 = vor.u32 1.1754944e-38, %v207
  %v209 = vsel %vm206, %v208, %v204
  %v210 = vmul.f32 1.0, %v209
  %v211 = vrcp.pop %v145
  %v212 = vmul.f32 %v145, %v211
  %v213 = vsub.f32 1.0, %v212
  %v214 = vmul.f32 %v211, %v213
  %v215 = vadd.f32 %v211, %v214
  %vm216 = vweird.f32 %v145
  %vm217 = vweird.f32 %v211
  %vm218 = vmor %vm216, %vm217
  %v219 = vsel %vm218, %v211, %v215
  %v220 = vand.u32 2147483647, %v145
  %vm221 = vcmp.eq.f32.partialorder %v220, 8.507059e+37
  %v222 = vand.u32 %v145, 2147483648
  %v223 = vor.u32 1.1754944e-38, %v222
  %v224 = vsel %vm221, %v223, %v219
  %v225 = vmul.f32 1.0, %v224
  %v226 = vrcp.pop %v146
  %v227 = vmul.f32 %v146, %v226
  %v228 = vsub.f32 1.0, %v227
  %v229 = vmul.f32 %v226, %v228
  %v230 = vadd.f32 %v226, %v229
  %vm231 = vweird.f32 %v146
  %vm232 = vweird.f32 %v226
  %vm233 = vmor %vm231, %vm232
  %v234 = vsel %vm233, %v226, %v230
  %v235 = vand.u32 2147483647, %v146
  %vm236 = vcmp.eq.f32.partialorder %v235, 8.507059e+37
  %v237 = vand.u32 %v146, 2147483648
  %v238 = vor.u32 1.1754944e-38, %v237
  %v239 = vsel %vm236, %v238, %v234
  %v240 = vmul.f32 1.0, %v239
  %v241 = vrcp.pop %v147
  %v242 = vmul.f32 %v147, %v241
  %v243 = vsub.f32 1.0, %v242
  %v244 = vmul.f32 %v241, %v243
  %v245 = vadd.f32 %v241, %v244
  %vm246 = vweird.f32 %v147
  %vm247 = vweird.f32 %v241
  %vm248 = vmor %vm246, %vm247
  %v249 = vsel %vm248, %v241, %v245
  %v250 = vand.u32 2147483647, %v147
  %vm251 = vcmp.eq.f32.partialorder %v250, 8.507059e+37
  %v252 = vand.u32 %v147, 2147483648
  %v253 = vor.u32 1.1754944e-38, %v252
  %v254 = vsel %vm251, %v253, %v249
  %v255 = vmul.f32 1.0, %v254
  %v256 = vrcp.pop %v148
  %v257 = vmul.f32 %v148, %v256
  %v258 = vsub.f32 1.0, %v257
  %v259 = vmul.f32 %v256, %v258
  %v260 = vadd.f32 %v256, %v259
  %vm261 = vweird.f32 %v148
  %vm262 = vweird.f32 %v256
  %vm263 = vmor %vm261, %vm262
  %v264 = vsel %vm263, %v256, %v260
  %v265 = vand.u32 2147483647, %v148
  %vm266 = vcmp.eq.f32.partialorder %v265, 8.507059e+37
  %v267 = vand.u32 %v148, 2147483648
  %v268 = vor.u32 1.1754944e-38, %v267
  %v269 = vsel %vm266, %v268, %v264
  %v270 = vmul.f32 1.0, %v269
  %v271 = vrcp.pop %v149
  %v272 = vmul.f32 %v149, %v271
  %v273 = vsub.f32 1.0, %v272
  %v274 = vmul.f32 %v271, %v273
  %v275 = vadd.f32 %v271, %v274
  %vm276 = vweird.f32 %v149
  %vm277 = vweird.f32 %v271
  %vm278 = vmor %vm276, %vm277
  %v279 = vsel %vm278, %v271, %v275
  %v280 = vand.u32 2147483647, %v149
  %vm281 = vcmp.eq.f32.partialorder %v280, 8.507059e+37
  %v282 = vand.u32 %v149, 2147483648
  %v283 = vor.u32 1.1754944e-38, %v282
  %v284 = vsel %vm281, %v283, %v279
  %v285 = vmul.f32 1.0, %v284
  %v286 = vrcp.pop %v150
  %v287 = vmul.f32 %v150, %v286
  %v288 = vsub.f32 1.0, %v287
  %v289 = vmul.f32 %v286, %v288
  %v290 = vadd.f32 %v286, %v289
  %vm291 = vweird.f32 %v150
  %vm292 = vweird.f32 %v286
  %vm293 = vmor %vm291, %vm292
  %v294 = vsel %vm293, %v286, %v290
  %v295 = vand.u32 2147483647, %v150
  %vm296 = vcmp.eq.f32.partialorder %v295, 8.507059e+37
  %v297 = vand.u32 %v150, 2147483648
  %v298 = vor.u32 1.1754944e-38, %v297
  %v299 = vsel %vm296, %v298, %v294
  %v300 = vmul.f32 1.0, %v299
  %vm301 = vcmask 7168
  %302 = vst.msk [vmem:[%s3] sm:$0xff] %vm301, %v165
  %303 = vst.msk [vmem:[%s3 + $0x8] sm:$0xff] %vm301, %v180
  %304 = vst.msk [vmem:[%s3 + $0x10] sm:$0xff] %vm301, %v195
  %305 = vst.msk [vmem:[%s3 + $0x18] sm:$0xff] %vm301, %v210
  %306 = vst.msk [vmem:[%s3 + $0x20] sm:$0xff] %vm301, %v225
  %307 = vst.msk [vmem:[%s3 + $0x28] sm:$0xff] %vm301, %v240
  %308 = vst.msk [vmem:[%s3 + $0x30] sm:$0xff] %vm301, %v255
  %309 = vst.msk [vmem:[%s3 + $0x38] sm:$0xff] %vm301, %v270
  %310 = vst.msk [vmem:[%s3 + $0x40] sm:$0xff] %vm301, %v285
  %311 = vst.msk [vmem:[%s3 + $0x48] sm:$0xff] %vm301, %v300
  // Predicated region
  $region14: #{cvae_forward.28} parent=0 // pred_check
    _
  $region15: #{cvae_forward.28} parent=0 // pred_check_branch
    %313 = sbr.rel (0) target = $region17
  $region16: #{cvae_forward.28} parent=0 // pred_region
    _
  $region17: #{cvae_forward.28} parent=0 // pred_fallthru
    _
  // Predicated region
  $region18: #{cvae_forward.28} parent=0 // pred_check
    _
  $region19: #{cvae_forward.28} parent=0 // pred_check_branch
    %315 = sbr.rel (0) target = $region21
  $region20: #{cvae_forward.28} parent=0 // pred_region
    _
  $region21: #{cvae_forward.28} parent=0 // pred_fallthru
    _

</llo_original>
